<compile_context>
chip_gen: v6e
topology: v6e:2x2x1
jax: 0.10.0
libtpu: 0.0.40
codegen_flags: <defaults>
</compile_context>

<pallas_src>
import jax
import jax.numpy as jnp
from jax import lax
from jax.experimental import pallas as pl
from jax.experimental.pallas import tpu as pltpu


# ----------------------------------------------------------------------------
# Fused whole-network kernel (one grid step == one batch element)
# ----------------------------------------------------------------------------
def _net_kernel(x_ref,
                w1_ref, b1_ref, w2_ref, b2_ref, w3_ref, b3_ref,
                w4_ref, b4_ref, w5_ref, b5_ref,
                fw1_ref, fb1_ref, fw2_ref, fb2_ref,
                o_ref,
                a1_ref, a2_ref, a2p_ref, a3_ref, a4_ref, a4p_ref):
    f32, bf16 = jnp.float32, jnp.bfloat16

    # ---- conv1: 1 -> 32 ch, 28x28 -> 26x26, ReLU (Cin=1 -> VPU outer products) ----
    def conv1_row(h, carry):
        acc = jnp.zeros((26, 32), f32)
        for kh in range(3):
            row = x_ref[0, h + kh]                       # (28, 1) f32
            for kw in range(3):
                acc = acc + row[kw:kw + 26, :] * w1_ref[kh * 3 + kw]  # (26,1)*(1,32)
        a1_ref[h] = jnp.maximum(acc + b1_ref[...], 0.0)
        return carry

    lax.fori_loop(0, 26, conv1_row, 0)

    # ---- generic 3x3 valid conv: per-output-row, 9 accumulated MXU matmuls ----
    def conv3x3(in_ref, out_ref, w_ref, b_ref, ho, wo, relu):
        cout = w_ref.shape[-1]

        def body(h, carry):
            acc = jnp.zeros((wo, cout), f32)
            for kh in range(3):
                row = in_ref[h + kh]                     # (wo + 2, cin) f32
                for kw in range(3):
                    lhs = row[kw:kw + wo, :].astype(bf16)
                    acc = acc + jnp.dot(lhs, w_ref[kh * 3 + kw],
                                        preferred_element_type=f32)
            acc = acc + b_ref[...]
            if relu:
                acc = jnp.maximum(acc, 0.0)
            out_ref[h] = acc
            return carry

        lax.fori_loop(0, ho, body, 0)

    # ---- fused 2x2 max-pool (stride 2) + ReLU via strided sublane reads ----
    def pool2x2_relu(in_ref, out_ref, hp, wp):
        def body(i, carry):
            r = 2 * i
            p00 = in_ref[r,     pl.ds(0, wp, stride=2), :]
            p01 = in_ref[r,     pl.ds(1, wp, stride=2), :]
            p10 = in_ref[r + 1, pl.ds(0, wp, stride=2), :]
            p11 = in_ref[r + 1, pl.ds(1, wp, stride=2), :]
            m = jnp.maximum(jnp.maximum(p00, p01), jnp.maximum(p10, p11))
            out_ref[i] = jnp.maximum(m, 0.0)
            return carry

        lax.fori_loop(0, hp, body, 0)

    conv3x3(a1_ref, a2_ref, w2_ref, b2_ref, ho=24, wo=24, relu=False)
    pool2x2_relu(a2_ref, a2p_ref, hp=12, wp=12)           # relu(maxpool(conv2))
    # conv_drop1 (Dropout2d p=0.2): identity in eval mode.
    conv3x3(a2p_ref, a3_ref, w3_ref, b3_ref, ho=10, wo=10, relu=True)
    conv3x3(a3_ref, a4_ref, w4_ref, b4_ref, ho=8, wo=8, relu=False)
    pool2x2_relu(a4_ref, a4p_ref, hp=4, wp=4)             # relu(maxpool(conv4))
    # conv_drop2 (Dropout2d p=0.3): identity in eval mode.

    # ---- conv5 (64 -> 128, 4x4 -> 2x2, ReLU) fused with the fc1 accumulation ----
    fc1_acc = fb1_ref[...]                                # (1, 64) f32, start at bias
    for h in range(2):
        acc = jnp.zeros((2, 128), f32)
        for kh in range(3):
            row = a4p_ref[h + kh]                         # (4, 64) f32
            for kw in range(3):
                lhs = row[kw:kw + 2, :].astype(bf16)
                acc = acc + jnp.dot(lhs, w5_ref[kh * 3 + kw],
                                    preferred_element_type=f32)
        acc = jnp.maximum(acc + b5_ref[...], 0.0)         # relu(conv5) row h, (2, 128)
        # conv_drop2 again: identity.  C,H,W flatten order is folded into fw1.
        for w in range(2):
            lhs = acc[w:w + 1, :].astype(bf16)            # (1, 128)
            fc1_acc = fc1_acc + jnp.dot(lhs, fw1_ref[h * 2 + w],
                                        preferred_element_type=f32)

    hidden = jnp.maximum(fc1_acc, 0.0)                    # relu(fc1), (1, 64)
    # TODO(synk): F.dropout(training=True) is stochastic; implemented as identity (eval).
    logits = jnp.dot(hidden.astype(bf16), fw2_ref[...],
                     preferred_element_type=f32) + fb2_ref[...]   # (1, 10)
    m = jnp.max(logits, axis=-1, keepdims=True)
    lse = m + jnp.log(jnp.sum(jnp.exp(logits - m), axis=-1, keepdims=True))
    o_ref[0] = (logits - lse).astype(o_ref.dtype)


# ----------------------------------------------------------------------------
# One-time parameter layout conversion (PyTorch layouts -> kernel layouts)
# ----------------------------------------------------------------------------
def prepare_params(p):
    f32, bf16 = jnp.float32, jnp.bfloat16

    def conv_w(w, dtype):
        # (Cout, Cin, 3, 3) -> (9, Cin, Cout), row k = kh*3 + kw
        cout, cin = w.shape[0], w.shape[1]
        return jnp.transpose(w, (2, 3, 1, 0)).reshape(9, cin, cout).astype(dtype)

    kp = {
        "w1": conv_w(p["cw1"], f32),                  # conv1 runs on the VPU (Cin=1)
        "b1": p["cb1"].reshape(1, -1).astype(f32),
        "w2": conv_w(p["cw2"], bf16), "b2": p["cb2"].reshape(1, -1).astype(f32),
        "w3": conv_w(p["cw3"], bf16), "b3": p["cb3"].reshape(1, -1).astype(f32),
        "w4": conv_w(p["cw4"], bf16), "b4": p["cb4"].reshape(1, -1).astype(f32),
        "w5": conv_w(p["cw5"], bf16), "b5": p["cb5"].reshape(1, -1).astype(f32),
        # fc1 rows are in PyTorch's (C, H, W) flatten order; regroup once into
        # NHWC (h, w) blocks of 128 channels so the kernel never has to flatten.
        "fw1": jnp.transpose(p["fw1"].reshape(128, 2, 2, 64),
                             (1, 2, 0, 3)).reshape(4, 128, 64).astype(bf16),
        "fb1": p["fb1"].reshape(1, -1).astype(f32),
        "fw2": p["fw2"].astype(bf16),
        "fb2": p["fb2"].reshape(1, -1).astype(f32),
    }
    return kp


# ----------------------------------------------------------------------------
# Forward pass wrapper (single fused pallas_call)
# ----------------------------------------------------------------------------
def net_forward(x_nchw, kp):
    """x: (B, 1, 28, 28) NCHW float32 -> (B, 10) log-probabilities."""
    B = x_nchw.shape[0]
    x_nhwc = jnp.transpose(x_nchw, (0, 2, 3, 1)).astype(jnp.float32)  # (B,28,28,1)

    operands = (x_nhwc,
                kp["w1"], kp["b1"], kp["w2"], kp["b2"], kp["w3"], kp["b3"],
                kp["w4"], kp["b4"], kp["w5"], kp["b5"],
                kp["fw1"], kp["fb1"], kp["fw2"], kp["fb2"])

    def full_spec(a):
        return pl.BlockSpec(a.shape, lambda b: (0,) * a.ndim)

    in_specs = [pl.BlockSpec((1, 28, 28, 1), lambda b: (b, 0, 0, 0))]
    in_specs += [full_spec(a) for a in operands[1:]]

    flops = 2 * B * (26 * 26 * 9 * 1 * 32 + 24 * 24 * 9 * 32 * 32
                     + 10 * 10 * 9 * 32 * 64 + 8 * 8 * 9 * 64 * 64
                     + 2 * 2 * 9 * 64 * 128 + 512 * 64 + 64 * 10)
    bytes_accessed = sum(int(a.size) * a.dtype.itemsize for a in operands) + B * 10 * 4

    out = pl.pallas_call(
        _net_kernel,
        out_shape=jax.ShapeDtypeStruct((B, 1, 10), jnp.float32),
        grid_spec=pltpu.PrefetchScalarGridSpec(
            num_scalar_prefetch=0,
            grid=(B,),
            in_specs=in_specs,
            out_specs=pl.BlockSpec((1, 1, 10), lambda b: (b, 0, 0)),
            scratch_shapes=[
                pltpu.VMEM((26, 26, 32), jnp.float32),   # conv1 output
                pltpu.VMEM((24, 24, 32), jnp.float32),   # conv2 output
                pltpu.VMEM((12, 12, 32), jnp.float32),   # pool1 output
                pltpu.VMEM((10, 10, 64), jnp.float32),   # conv3 output
                pltpu.VMEM((8, 8, 64), jnp.float32),     # conv4 output
                pltpu.VMEM((4, 4, 64), jnp.float32),     # pool2 output
            ],
        ),
        compiler_params=pltpu.CompilerParams(
            dimension_semantics=("parallel",)),
        cost_estimate=pl.CostEstimate(
            flops=int(flops),
            transcendentals=11 * B,
            bytes_accessed=int(bytes_accessed)),
    )(*operands)
    return out.reshape(B, 10)


# ----------------------------------------------------------------------------
# Deterministic parameter construction (shapes from Net.__init__, torch layouts)
# ----------------------------------------------------------------------------
def init_params(key):
    def conv_p(key, cout, cin, k=3):
        kw, kb = jax.random.split(key)
        fan_in = cin * k * k
        bound = 1.0 / jnp.sqrt(fan_in)
        w = jax.random.uniform(kw, (cout, cin, k, k), jnp.float32, -bound, bound)
        b = jax.random.uniform(kb, (cout,), jnp.float32, -bound, bound)
        return w, b

    def lin_p(key, cin, cout):
        kw, kb = jax.random.split(key)
        bound = 1.0 / jnp.sqrt(cin)
        w = jax.random.uniform(kw, (cin, cout), jnp.float32, -bound, bound)
        b = jax.random.uniform(kb, (cout,), jnp.float32, -bound, bound)
        return w, b

    ks = jax.random.split(key, 7)
    p = {}
    p["cw1"], p["cb1"] = conv_p(ks[0], 32, 1)
    p["cw2"], p["cb2"] = conv_p(ks[1], 32, 32)
    p["cw3"], p["cb3"] = conv_p(ks[2], 64, 32)
    p["cw4"], p["cb4"] = conv_p(ks[3], 64, 64)
    p["cw5"], p["cb5"] = conv_p(ks[4], 128, 64)
    p["fw1"], p["fb1"] = lin_p(ks[5], 512, 64)
    p["fw2"], p["fb2"] = lin_p(ks[6], 64, 10)
    return p


if __name__ == "__main__":
    key = jax.random.PRNGKey(0)
    kx, kparams = jax.random.split(key)
    # Input: NCHW, 1 channel, 28x28 (required so the flatten yields 512 features).
    x = jax.random.normal(kx, (2, 1, 28, 28), jnp.float32)
    params = init_params(kparams)
    kp = prepare_params(params)          # one-time layout / bf16 conversion

    fwd = jax.jit(net_forward)
    out = jax.block_until_ready(fwd(x, kp))

    assert out.shape == (2, 10), out.shape
    assert bool(jnp.all(jnp.isfinite(out)))
    # log_softmax rows must exp-sum to 1
    assert bool(jnp.allclose(jnp.sum(jnp.exp(out), axis=1), 1.0, atol=1e-3))
    print("KERNEL_OK")
</pallas_src>

<mosaic_0001>
module attributes {stable_mosaic.version = 11 : i64} {
  func.func @_net_kernel(%arg0: i32, %arg1: memref<1x28x28x1xf32, #tpu.memory_space<vmem>>, %arg2: memref<9x1x32xf32, #tpu.memory_space<vmem>>, %arg3: memref<1x32xf32, #tpu.memory_space<vmem>>, %arg4: memref<9x32x32xbf16, #tpu.memory_space<vmem>>, %arg5: memref<1x32xf32, #tpu.memory_space<vmem>>, %arg6: memref<9x32x64xbf16, #tpu.memory_space<vmem>>, %arg7: memref<1x64xf32, #tpu.memory_space<vmem>>, %arg8: memref<9x64x64xbf16, #tpu.memory_space<vmem>>, %arg9: memref<1x64xf32, #tpu.memory_space<vmem>>, %arg10: memref<9x64x128xbf16, #tpu.memory_space<vmem>>, %arg11: memref<1x128xf32, #tpu.memory_space<vmem>>, %arg12: memref<4x128x64xbf16, #tpu.memory_space<vmem>>, %arg13: memref<1x64xf32, #tpu.memory_space<vmem>>, %arg14: memref<64x10xbf16, #tpu.memory_space<vmem>>, %arg15: memref<1x10xf32, #tpu.memory_space<vmem>>, %arg16: memref<1x1x10xf32, #tpu.memory_space<vmem>>, %arg17: memref<26x26x32xf32, #tpu.memory_space<vmem>>, %arg18: memref<24x24x32xf32, #tpu.memory_space<vmem>>, %arg19: memref<12x12x32xf32, #tpu.memory_space<vmem>>, %arg20: memref<10x10x64xf32, #tpu.memory_space<vmem>>, %arg21: memref<8x8x64xf32, #tpu.memory_space<vmem>>, %arg22: memref<4x4x64xf32, #tpu.memory_space<vmem>>) attributes {dimension_semantics = [#tpu.dimension_semantics<parallel>], iteration_bounds = array<i64: 2>, scalar_prefetch = 0 : i64, scratch_operands = 6 : i64, tpu.core_type = #tpu.core_type<tc>, window_params = [{transform_indices = @transform_0, window_bounds = array<i64: 1, 28, 28, 1>}, {pipeline_mode = #tpu.pipeline_mode<synchronous>, transform_indices = @transform_1, window_bounds = array<i64: 9, 1, 32>}, {pipeline_mode = #tpu.pipeline_mode<synchronous>, transform_indices = @transform_2, window_bounds = array<i64: 1, 32>}, {pipeline_mode = #tpu.pipeline_mode<synchronous>, transform_indices = @transform_3, window_bounds = array<i64: 9, 32, 32>}, {pipeline_mode = #tpu.pipeline_mode<synchronous>, transform_indices = @transform_4, window_bounds = array<i64: 1, 32>}, {pipeline_mode = #tpu.pipeline_mode<synchronous>, transform_indices = @transform_5, window_bounds = array<i64: 9, 32, 64>}, {pipeline_mode = #tpu.pipeline_mode<synchronous>, transform_indices = @transform_6, window_bounds = array<i64: 1, 64>}, {pipeline_mode = #tpu.pipeline_mode<synchronous>, transform_indices = @transform_7, window_bounds = array<i64: 9, 64, 64>}, {pipeline_mode = #tpu.pipeline_mode<synchronous>, transform_indices = @transform_8, window_bounds = array<i64: 1, 64>}, {pipeline_mode = #tpu.pipeline_mode<synchronous>, transform_indices = @transform_9, window_bounds = array<i64: 9, 64, 128>}, {pipeline_mode = #tpu.pipeline_mode<synchronous>, transform_indices = @transform_10, window_bounds = array<i64: 1, 128>}, {pipeline_mode = #tpu.pipeline_mode<synchronous>, transform_indices = @transform_11, window_bounds = array<i64: 4, 128, 64>}, {pipeline_mode = #tpu.pipeline_mode<synchronous>, transform_indices = @transform_12, window_bounds = array<i64: 1, 64>}, {pipeline_mode = #tpu.pipeline_mode<synchronous>, transform_indices = @transform_13, window_bounds = array<i64: 64, 10>}, {pipeline_mode = #tpu.pipeline_mode<synchronous>, transform_indices = @transform_14, window_bounds = array<i64: 1, 10>}, {transform_indices = @transform_15, window_bounds = array<i64: 1, 1, 10>}]} {
    %c0_i32 = arith.constant 0 : i32
    %c26_i32 = arith.constant 26 : i32
    %0 = arith.addi %c0_i32, %c26_i32 : i32
    %c1_i32 = arith.constant 1 : i32
    scf.for %arg23 = %c0_i32 to %0 step %c1_i32  : i32 {
      %cst_133 = arith.constant 0.000000e+00 : f32
      %184 = vector.broadcast %cst_133 : f32 to vector<26x32xf32>
      %c0_i32_134 = arith.constant 0 : i32
      %185 = arith.addi %arg23, %c0_i32_134 : i32
      %c0_135 = arith.constant 0 : index
      %186 = arith.index_cast %185 : i32 to index
      %c0_136 = arith.constant 0 : index
      %c0_137 = arith.constant 0 : index
      %187 = vector.load %arg1[%c0_135, %186, %c0_136, %c0_137] : memref<1x28x28x1xf32, #tpu.memory_space<vmem>>, vector<1x1x28x1xf32>
      %188 = vector.shape_cast %187 : vector<1x1x28x1xf32> to vector<28x1xf32>
      %189 = vector.extract_strided_slice %188 {offsets = [0, 0], sizes = [26, 1], strides = [1, 1]} : vector<28x1xf32> to vector<26x1xf32>
      %c0_138 = arith.constant 0 : index
      %c0_139 = arith.constant 0 : index
      %c0_140 = arith.constant 0 : index
      %190 = vector.load %arg2[%c0_138, %c0_139, %c0_140] : memref<9x1x32xf32, #tpu.memory_space<vmem>>, vector<1x1x32xf32>
      %191 = vector.shape_cast %190 : vector<1x1x32xf32> to vector<1x32xf32>
      %192 = vector.broadcast %189 : vector<26x1xf32> to vector<26x32xf32>
      %193 = vector.broadcast %191 : vector<1x32xf32> to vector<26x32xf32>
      %194 = arith.mulf %192, %193 : vector<26x32xf32>
      %195 = arith.addf %184, %194 : vector<26x32xf32>
      %196 = vector.extract_strided_slice %188 {offsets = [1, 0], sizes = [26, 1], strides = [1, 1]} : vector<28x1xf32> to vector<26x1xf32>
      %c1_141 = arith.constant 1 : index
      %c0_142 = arith.constant 0 : index
      %c0_143 = arith.constant 0 : index
      %197 = vector.load %arg2[%c1_141, %c0_142, %c0_143] : memref<9x1x32xf32, #tpu.memory_space<vmem>>, vector<1x1x32xf32>
      %198 = vector.shape_cast %197 : vector<1x1x32xf32> to vector<1x32xf32>
      %199 = vector.broadcast %196 : vector<26x1xf32> to vector<26x32xf32>
      %200 = vector.broadcast %198 : vector<1x32xf32> to vector<26x32xf32>
      %201 = arith.mulf %199, %200 : vector<26x32xf32>
      %202 = arith.addf %195, %201 : vector<26x32xf32>
      %203 = vector.extract_strided_slice %188 {offsets = [2, 0], sizes = [26, 1], strides = [1, 1]} : vector<28x1xf32> to vector<26x1xf32>
      %c2_144 = arith.constant 2 : index
      %c0_145 = arith.constant 0 : index
      %c0_146 = arith.constant 0 : index
      %204 = vector.load %arg2[%c2_144, %c0_145, %c0_146] : memref<9x1x32xf32, #tpu.memory_space<vmem>>, vector<1x1x32xf32>
      %205 = vector.shape_cast %204 : vector<1x1x32xf32> to vector<1x32xf32>
      %206 = vector.broadcast %203 : vector<26x1xf32> to vector<26x32xf32>
      %207 = vector.broadcast %205 : vector<1x32xf32> to vector<26x32xf32>
      %208 = arith.mulf %206, %207 : vector<26x32xf32>
      %209 = arith.addf %202, %208 : vector<26x32xf32>
      %c1_i32_147 = arith.constant 1 : i32
      %210 = arith.addi %arg23, %c1_i32_147 : i32
      %c0_148 = arith.constant 0 : index
      %211 = arith.index_cast %210 : i32 to index
      %c0_149 = arith.constant 0 : index
      %c0_150 = arith.constant 0 : index
      %212 = vector.load %arg1[%c0_148, %211, %c0_149, %c0_150] : memref<1x28x28x1xf32, #tpu.memory_space<vmem>>, vector<1x1x28x1xf32>
      %213 = vector.shape_cast %212 : vector<1x1x28x1xf32> to vector<28x1xf32>
      %214 = vector.extract_strided_slice %213 {offsets = [0, 0], sizes = [26, 1], strides = [1, 1]} : vector<28x1xf32> to vector<26x1xf32>
      %c3_151 = arith.constant 3 : index
      %c0_152 = arith.constant 0 : index
      %c0_153 = arith.constant 0 : index
      %215 = vector.load %arg2[%c3_151, %c0_152, %c0_153] : memref<9x1x32xf32, #tpu.memory_space<vmem>>, vector<1x1x32xf32>
      %216 = vector.shape_cast %215 : vector<1x1x32xf32> to vector<1x32xf32>
      %217 = vector.broadcast %214 : vector<26x1xf32> to vector<26x32xf32>
      %218 = vector.broadcast %216 : vector<1x32xf32> to vector<26x32xf32>
      %219 = arith.mulf %217, %218 : vector<26x32xf32>
      %220 = arith.addf %209, %219 : vector<26x32xf32>
      %221 = vector.extract_strided_slice %213 {offsets = [1, 0], sizes = [26, 1], strides = [1, 1]} : vector<28x1xf32> to vector<26x1xf32>
      %c4_154 = arith.constant 4 : index
      %c0_155 = arith.constant 0 : index
      %c0_156 = arith.constant 0 : index
      %222 = vector.load %arg2[%c4_154, %c0_155, %c0_156] : memref<9x1x32xf32, #tpu.memory_space<vmem>>, vector<1x1x32xf32>
      %223 = vector.shape_cast %222 : vector<1x1x32xf32> to vector<1x32xf32>
      %224 = vector.broadcast %221 : vector<26x1xf32> to vector<26x32xf32>
      %225 = vector.broadcast %223 : vector<1x32xf32> to vector<26x32xf32>
      %226 = arith.mulf %224, %225 : vector<26x32xf32>
      %227 = arith.addf %220, %226 : vector<26x32xf32>
      %228 = vector.extract_strided_slice %213 {offsets = [2, 0], sizes = [26, 1], strides = [1, 1]} : vector<28x1xf32> to vector<26x1xf32>
      %c5_157 = arith.constant 5 : index
      %c0_158 = arith.constant 0 : index
      %c0_159 = arith.constant 0 : index
      %229 = vector.load %arg2[%c5_157, %c0_158, %c0_159] : memref<9x1x32xf32, #tpu.memory_space<vmem>>, vector<1x1x32xf32>
      %230 = vector.shape_cast %229 : vector<1x1x32xf32> to vector<1x32xf32>
      %231 = vector.broadcast %228 : vector<26x1xf32> to vector<26x32xf32>
      %232 = vector.broadcast %230 : vector<1x32xf32> to vector<26x32xf32>
      %233 = arith.mulf %231, %232 : vector<26x32xf32>
      %234 = arith.addf %227, %233 : vector<26x32xf32>
      %c2_i32 = arith.constant 2 : i32
      %235 = arith.addi %arg23, %c2_i32 : i32
      %c0_160 = arith.constant 0 : index
      %236 = arith.index_cast %235 : i32 to index
      %c0_161 = arith.constant 0 : index
      %c0_162 = arith.constant 0 : index
      %237 = vector.load %arg1[%c0_160, %236, %c0_161, %c0_162] : memref<1x28x28x1xf32, #tpu.memory_space<vmem>>, vector<1x1x28x1xf32>
      %238 = vector.shape_cast %237 : vector<1x1x28x1xf32> to vector<28x1xf32>
      %239 = vector.extract_strided_slice %238 {offsets = [0, 0], sizes = [26, 1], strides = [1, 1]} : vector<28x1xf32> to vector<26x1xf32>
      %c6_163 = arith.constant 6 : index
      %c0_164 = arith.constant 0 : index
      %c0_165 = arith.constant 0 : index
      %240 = vector.load %arg2[%c6_163, %c0_164, %c0_165] : memref<9x1x32xf32, #tpu.memory_space<vmem>>, vector<1x1x32xf32>
      %241 = vector.shape_cast %240 : vector<1x1x32xf32> to vector<1x32xf32>
      %242 = vector.broadcast %239 : vector<26x1xf32> to vector<26x32xf32>
      %243 = vector.broadcast %241 : vector<1x32xf32> to vector<26x32xf32>
      %244 = arith.mulf %242, %243 : vector<26x32xf32>
      %245 = arith.addf %234, %244 : vector<26x32xf32>
      %246 = vector.extract_strided_slice %238 {offsets = [1, 0], sizes = [26, 1], strides = [1, 1]} : vector<28x1xf32> to vector<26x1xf32>
      %c7_166 = arith.constant 7 : index
      %c0_167 = arith.constant 0 : index
      %c0_168 = arith.constant 0 : index
      %247 = vector.load %arg2[%c7_166, %c0_167, %c0_168] : memref<9x1x32xf32, #tpu.memory_space<vmem>>, vector<1x1x32xf32>
      %248 = vector.shape_cast %247 : vector<1x1x32xf32> to vector<1x32xf32>
      %249 = vector.broadcast %246 : vector<26x1xf32> to vector<26x32xf32>
      %250 = vector.broadcast %248 : vector<1x32xf32> to vector<26x32xf32>
      %251 = arith.mulf %249, %250 : vector<26x32xf32>
      %252 = arith.addf %245, %251 : vector<26x32xf32>
      %253 = vector.extract_strided_slice %238 {offsets = [2, 0], sizes = [26, 1], strides = [1, 1]} : vector<28x1xf32> to vector<26x1xf32>
      %c8_169 = arith.constant 8 : index
      %c0_170 = arith.constant 0 : index
      %c0_171 = arith.constant 0 : index
      %254 = vector.load %arg2[%c8_169, %c0_170, %c0_171] : memref<9x1x32xf32, #tpu.memory_space<vmem>>, vector<1x1x32xf32>
      %255 = vector.shape_cast %254 : vector<1x1x32xf32> to vector<1x32xf32>
      %256 = vector.broadcast %253 : vector<26x1xf32> to vector<26x32xf32>
      %257 = vector.broadcast %255 : vector<1x32xf32> to vector<26x32xf32>
      %258 = arith.mulf %256, %257 : vector<26x32xf32>
      %259 = arith.addf %252, %258 : vector<26x32xf32>
      %c0_172 = arith.constant 0 : index
      %c0_173 = arith.constant 0 : index
      %260 = vector.load %arg3[%c0_172, %c0_173] : memref<1x32xf32, #tpu.memory_space<vmem>>, vector<1x32xf32>
      %261 = vector.broadcast %260 : vector<1x32xf32> to vector<26x32xf32>
      %262 = arith.addf %259, %261 : vector<26x32xf32>
      %cst_174 = arith.constant 0.000000e+00 : f32
      %263 = vector.broadcast %cst_174 : f32 to vector<26x32xf32>
      %264 = arith.maximumf %262, %263 : vector<26x32xf32>
      %265 = arith.index_cast %arg23 : i32 to index
      %c0_175 = arith.constant 0 : index
      %c0_176 = arith.constant 0 : index
      %266 = vector.load %arg17[%265, %c0_175, %c0_176] : memref<26x26x32xf32, #tpu.memory_space<vmem>>, vector<1x26x32xf32>
      %267 = vector.shape_cast %266 : vector<1x26x32xf32> to vector<26x32xf32>
      %268 = vector.shape_cast %264 : vector<26x32xf32> to vector<1x26x32xf32>
      tpu.vector_store %arg17[%265, %c0_175, %c0_176], %268 {strides = array<i32>} : memref<26x26x32xf32, #tpu.memory_space<vmem>>, vector<1x26x32xf32>,
    }
    %c26_i32_0 = arith.constant 26 : i32
    %c0_i32_1 = arith.constant 0 : i32
    %c24_i32 = arith.constant 24 : i32
    %1 = arith.addi %c0_i32_1, %c24_i32 : i32
    %c1_i32_2 = arith.constant 1 : i32
    scf.for %arg23 = %c0_i32_1 to %1 step %c1_i32_2  : i32 {
      %cst_133 = arith.constant 0.000000e+00 : f32
      %184 = vector.broadcast %cst_133 : f32 to vector<24x32xf32>
      %c0_i32_134 = arith.constant 0 : i32
      %185 = arith.addi %arg23, %c0_i32_134 : i32
      %186 = arith.index_cast %185 : i32 to index
      %c0_135 = arith.constant 0 : index
      %c0_136 = arith.constant 0 : index
      %187 = vector.load %arg17[%186, %c0_135, %c0_136] : memref<26x26x32xf32, #tpu.memory_space<vmem>>, vector<1x26x32xf32>
      %188 = vector.shape_cast %187 : vector<1x26x32xf32> to vector<26x32xf32>
      %189 = vector.extract_strided_slice %188 {offsets = [0, 0], sizes = [24, 32], strides = [1, 1]} : vector<26x32xf32> to vector<24x32xf32>
      %190 = arith.truncf %189 : vector<24x32xf32> to vector<24x32xbf16>
      %c0_137 = arith.constant 0 : index
      %c0_138 = arith.constant 0 : index
      %c0_139 = arith.constant 0 : index
      %191 = vector.load %arg4[%c0_137, %c0_138, %c0_139] : memref<9x32x32xbf16, #tpu.memory_space<vmem>>, vector<1x32x32xbf16>
      %192 = vector.shape_cast %191 : vector<1x32x32xbf16> to vector<32x32xbf16>
      %cst_140 = arith.constant dense<0.000000e+00> : vector<24x32xf32>
      %193 = tpu.matmul %190, %192, %cst_140 {dimension_numbers = #tpu.dot_dimension_numbers<[1], [0], [0], [1], [0, 0, 1, 1], [], []>} : vector<24x32xbf16>, vector<32x32xbf16>, vector<24x32xf32> -> vector<24x32xf32>
      %194 = arith.addf %184, %193 : vector<24x32xf32>
      %195 = vector.extract_strided_slice %188 {offsets = [1, 0], sizes = [24, 32], strides = [1, 1]} : vector<26x32xf32> to vector<24x32xf32>
      %196 = arith.truncf %195 : vector<24x32xf32> to vector<24x32xbf16>
      %c1_141 = arith.constant 1 : index
      %c0_142 = arith.constant 0 : index
      %c0_143 = arith.constant 0 : index
      %197 = vector.load %arg4[%c1_141, %c0_142, %c0_143] : memref<9x32x32xbf16, #tpu.memory_space<vmem>>, vector<1x32x32xbf16>
      %198 = vector.shape_cast %197 : vector<1x32x32xbf16> to vector<32x32xbf16>
      %cst_144 = arith.constant dense<0.000000e+00> : vector<24x32xf32>
      %199 = tpu.matmul %196, %198, %cst_144 {dimension_numbers = #tpu.dot_dimension_numbers<[1], [0], [0], [1], [0, 0, 1, 1], [], []>} : vector<24x32xbf16>, vector<32x32xbf16>, vector<24x32xf32> -> vector<24x32xf32>
      %200 = arith.addf %194, %199 : vector<24x32xf32>
      %201 = vector.extract_strided_slice %188 {offsets = [2, 0], sizes = [24, 32], strides = [1, 1]} : vector<26x32xf32> to vector<24x32xf32>
      %202 = arith.truncf %201 : vector<24x32xf32> to vector<24x32xbf16>
      %c2_145 = arith.constant 2 : index
      %c0_146 = arith.constant 0 : index
      %c0_147 = arith.constant 0 : index
      %203 = vector.load %arg4[%c2_145, %c0_146, %c0_147] : memref<9x32x32xbf16, #tpu.memory_space<vmem>>, vector<1x32x32xbf16>
      %204 = vector.shape_cast %203 : vector<1x32x32xbf16> to vector<32x32xbf16>
      %cst_148 = arith.constant dense<0.000000e+00> : vector<24x32xf32>
      %205 = tpu.matmul %202, %204, %cst_148 {dimension_numbers = #tpu.dot_dimension_numbers<[1], [0], [0], [1], [0, 0, 1, 1], [], []>} : vector<24x32xbf16>, vector<32x32xbf16>, vector<24x32xf32> -> vector<24x32xf32>
      %206 = arith.addf %200, %205 : vector<24x32xf32>
      %c1_i32_149 = arith.constant 1 : i32
      %207 = arith.addi %arg23, %c1_i32_149 : i32
      %208 = arith.index_cast %207 : i32 to index
      %c0_150 = arith.constant 0 : index
      %c0_151 = arith.constant 0 : index
      %209 = vector.load %arg17[%208, %c0_150, %c0_151] : memref<26x26x32xf32, #tpu.memory_space<vmem>>, vector<1x26x32xf32>
      %210 = vector.shape_cast %209 : vector<1x26x32xf32> to vector<26x32xf32>
      %211 = vector.extract_strided_slice %210 {offsets = [0, 0], sizes = [24, 32], strides = [1, 1]} : vector<26x32xf32> to vector<24x32xf32>
      %212 = arith.truncf %211 : vector<24x32xf32> to vector<24x32xbf16>
      %c3_152 = arith.constant 3 : index
      %c0_153 = arith.constant 0 : index
      %c0_154 = arith.constant 0 : index
      %213 = vector.load %arg4[%c3_152, %c0_153, %c0_154] : memref<9x32x32xbf16, #tpu.memory_space<vmem>>, vector<1x32x32xbf16>
      %214 = vector.shape_cast %213 : vector<1x32x32xbf16> to vector<32x32xbf16>
      %cst_155 = arith.constant dense<0.000000e+00> : vector<24x32xf32>
      %215 = tpu.matmul %212, %214, %cst_155 {dimension_numbers = #tpu.dot_dimension_numbers<[1], [0], [0], [1], [0, 0, 1, 1], [], []>} : vector<24x32xbf16>, vector<32x32xbf16>, vector<24x32xf32> -> vector<24x32xf32>
      %216 = arith.addf %206, %215 : vector<24x32xf32>
      %217 = vector.extract_strided_slice %210 {offsets = [1, 0], sizes = [24, 32], strides = [1, 1]} : vector<26x32xf32> to vector<24x32xf32>
      %218 = arith.truncf %217 : vector<24x32xf32> to vector<24x32xbf16>
      %c4_156 = arith.constant 4 : index
      %c0_157 = arith.constant 0 : index
      %c0_158 = arith.constant 0 : index
      %219 = vector.load %arg4[%c4_156, %c0_157, %c0_158] : memref<9x32x32xbf16, #tpu.memory_space<vmem>>, vector<1x32x32xbf16>
      %220 = vector.shape_cast %219 : vector<1x32x32xbf16> to vector<32x32xbf16>
      %cst_159 = arith.constant dense<0.000000e+00> : vector<24x32xf32>
      %221 = tpu.matmul %218, %220, %cst_159 {dimension_numbers = #tpu.dot_dimension_numbers<[1], [0], [0], [1], [0, 0, 1, 1], [], []>} : vector<24x32xbf16>, vector<32x32xbf16>, vector<24x32xf32> -> vector<24x32xf32>
      %222 = arith.addf %216, %221 : vector<24x32xf32>
      %223 = vector.extract_strided_slice %210 {offsets = [2, 0], sizes = [24, 32], strides = [1, 1]} : vector<26x32xf32> to vector<24x32xf32>
      %224 = arith.truncf %223 : vector<24x32xf32> to vector<24x32xbf16>
      %c5_160 = arith.constant 5 : index
      %c0_161 = arith.constant 0 : index
      %c0_162 = arith.constant 0 : index
      %225 = vector.load %arg4[%c5_160, %c0_161, %c0_162] : memref<9x32x32xbf16, #tpu.memory_space<vmem>>, vector<1x32x32xbf16>
      %226 = vector.shape_cast %225 : vector<1x32x32xbf16> to vector<32x32xbf16>
      %cst_163 = arith.constant dense<0.000000e+00> : vector<24x32xf32>
      %227 = tpu.matmul %224, %226, %cst_163 {dimension_numbers = #tpu.dot_dimension_numbers<[1], [0], [0], [1], [0, 0, 1, 1], [], []>} : vector<24x32xbf16>, vector<32x32xbf16>, vector<24x32xf32> -> vector<24x32xf32>
      %228 = arith.addf %222, %227 : vector<24x32xf32>
      %c2_i32 = arith.constant 2 : i32
      %229 = arith.addi %arg23, %c2_i32 : i32
      %230 = arith.index_cast %229 : i32 to index
      %c0_164 = arith.constant 0 : index
      %c0_165 = arith.constant 0 : index
      %231 = vector.load %arg17[%230, %c0_164, %c0_165] : memref<26x26x32xf32, #tpu.memory_space<vmem>>, vector<1x26x32xf32>
      %232 = vector.shape_cast %231 : vector<1x26x32xf32> to vector<26x32xf32>
      %233 = vector.extract_strided_slice %232 {offsets = [0, 0], sizes = [24, 32], strides = [1, 1]} : vector<26x32xf32> to vector<24x32xf32>
      %234 = arith.truncf %233 : vector<24x32xf32> to vector<24x32xbf16>
      %c6_166 = arith.constant 6 : index
      %c0_167 = arith.constant 0 : index
      %c0_168 = arith.constant 0 : index
      %235 = vector.load %arg4[%c6_166, %c0_167, %c0_168] : memref<9x32x32xbf16, #tpu.memory_space<vmem>>, vector<1x32x32xbf16>
      %236 = vector.shape_cast %235 : vector<1x32x32xbf16> to vector<32x32xbf16>
      %cst_169 = arith.constant dense<0.000000e+00> : vector<24x32xf32>
      %237 = tpu.matmul %234, %236, %cst_169 {dimension_numbers = #tpu.dot_dimension_numbers<[1], [0], [0], [1], [0, 0, 1, 1], [], []>} : vector<24x32xbf16>, vector<32x32xbf16>, vector<24x32xf32> -> vector<24x32xf32>
      %238 = arith.addf %228, %237 : vector<24x32xf32>
      %239 = vector.extract_strided_slice %232 {offsets = [1, 0], sizes = [24, 32], strides = [1, 1]} : vector<26x32xf32> to vector<24x32xf32>
      %240 = arith.truncf %239 : vector<24x32xf32> to vector<24x32xbf16>
      %c7_170 = arith.constant 7 : index
      %c0_171 = arith.constant 0 : index
      %c0_172 = arith.constant 0 : index
      %241 = vector.load %arg4[%c7_170, %c0_171, %c0_172] : memref<9x32x32xbf16, #tpu.memory_space<vmem>>, vector<1x32x32xbf16>
      %242 = vector.shape_cast %241 : vector<1x32x32xbf16> to vector<32x32xbf16>
      %cst_173 = arith.constant dense<0.000000e+00> : vector<24x32xf32>
      %243 = tpu.matmul %240, %242, %cst_173 {dimension_numbers = #tpu.dot_dimension_numbers<[1], [0], [0], [1], [0, 0, 1, 1], [], []>} : vector<24x32xbf16>, vector<32x32xbf16>, vector<24x32xf32> -> vector<24x32xf32>
      %244 = arith.addf %238, %243 : vector<24x32xf32>
      %245 = vector.extract_strided_slice %232 {offsets = [2, 0], sizes = [24, 32], strides = [1, 1]} : vector<26x32xf32> to vector<24x32xf32>
      %246 = arith.truncf %245 : vector<24x32xf32> to vector<24x32xbf16>
      %c8_174 = arith.constant 8 : index
      %c0_175 = arith.constant 0 : index
      %c0_176 = arith.constant 0 : index
      %247 = vector.load %arg4[%c8_174, %c0_175, %c0_176] : memref<9x32x32xbf16, #tpu.memory_space<vmem>>, vector<1x32x32xbf16>
      %248 = vector.shape_cast %247 : vector<1x32x32xbf16> to vector<32x32xbf16>
      %cst_177 = arith.constant dense<0.000000e+00> : vector<24x32xf32>
      %249 = tpu.matmul %246, %248, %cst_177 {dimension_numbers = #tpu.dot_dimension_numbers<[1], [0], [0], [1], [0, 0, 1, 1], [], []>} : vector<24x32xbf16>, vector<32x32xbf16>, vector<24x32xf32> -> vector<24x32xf32>
      %250 = arith.addf %244, %249 : vector<24x32xf32>
      %c0_178 = arith.constant 0 : index
      %c0_179 = arith.constant 0 : index
      %251 = vector.load %arg5[%c0_178, %c0_179] : memref<1x32xf32, #tpu.memory_space<vmem>>, vector<1x32xf32>
      %252 = vector.broadcast %251 : vector<1x32xf32> to vector<24x32xf32>
      %253 = arith.addf %250, %252 : vector<24x32xf32>
      %254 = arith.index_cast %arg23 : i32 to index
      %c0_180 = arith.constant 0 : index
      %c0_181 = arith.constant 0 : index
      %255 = vector.load %arg18[%254, %c0_180, %c0_181] : memref<24x24x32xf32, #tpu.memory_space<vmem>>, vector<1x24x32xf32>
      %256 = vector.shape_cast %255 : vector<1x24x32xf32> to vector<24x32xf32>
      %257 = vector.shape_cast %253 : vector<24x32xf32> to vector<1x24x32xf32>
      tpu.vector_store %arg18[%254, %c0_180, %c0_181], %257 {strides = array<i32>} : memref<24x24x32xf32, #tpu.memory_space<vmem>>, vector<1x24x32xf32>,
    }
    %c24_i32_3 = arith.constant 24 : i32
    %c0_i32_4 = arith.constant 0 : i32
    %c12_i32 = arith.constant 12 : i32
    %2 = arith.addi %c0_i32_4, %c12_i32 : i32
    %c1_i32_5 = arith.constant 1 : i32
    scf.for %arg23 = %c0_i32_4 to %2 step %c1_i32_5  : i32 {
      %c2_i32 = arith.constant 2 : i32
      %184 = arith.muli %c2_i32, %arg23 : i32
      %185 = arith.index_cast %184 : i32 to index
      %c0_133 = arith.constant 0 : index
      %c0_134 = arith.constant 0 : index
      %186 = tpu.strided_load %arg18[%185, %c0_133, %c0_134] {strides = array<i32: 1, 2, 1>} : memref<24x24x32xf32, #tpu.memory_space<vmem>>, vector<1x12x32xf32>
      %187 = vector.shape_cast %186 : vector<1x12x32xf32> to vector<12x32xf32>
      %188 = arith.index_cast %184 : i32 to index
      %c1_135 = arith.constant 1 : index
      %c0_136 = arith.constant 0 : index
      %189 = tpu.strided_load %arg18[%188, %c1_135, %c0_136] {strides = array<i32: 1, 2, 1>} : memref<24x24x32xf32, #tpu.memory_space<vmem>>, vector<1x12x32xf32>
      %190 = vector.shape_cast %189 : vector<1x12x32xf32> to vector<12x32xf32>
      %c1_i32_137 = arith.constant 1 : i32
      %191 = arith.addi %184, %c1_i32_137 : i32
      %192 = arith.index_cast %191 : i32 to index
      %c0_138 = arith.constant 0 : index
      %c0_139 = arith.constant 0 : index
      %193 = tpu.strided_load %arg18[%192, %c0_138, %c0_139] {strides = array<i32: 1, 2, 1>} : memref<24x24x32xf32, #tpu.memory_space<vmem>>, vector<1x12x32xf32>
      %194 = vector.shape_cast %193 : vector<1x12x32xf32> to vector<12x32xf32>
      %c1_i32_140 = arith.constant 1 : i32
      %195 = arith.addi %184, %c1_i32_140 : i32
      %196 = arith.index_cast %195 : i32 to index
      %c1_141 = arith.constant 1 : index
      %c0_142 = arith.constant 0 : index
      %197 = tpu.strided_load %arg18[%196, %c1_141, %c0_142] {strides = array<i32: 1, 2, 1>} : memref<24x24x32xf32, #tpu.memory_space<vmem>>, vector<1x12x32xf32>
      %198 = vector.shape_cast %197 : vector<1x12x32xf32> to vector<12x32xf32>
      %199 = arith.maximumf %187, %190 : vector<12x32xf32>
      %200 = arith.maximumf %194, %198 : vector<12x32xf32>
      %201 = arith.maximumf %199, %200 : vector<12x32xf32>
      %cst_143 = arith.constant 0.000000e+00 : f32
      %202 = vector.broadcast %cst_143 : f32 to vector<12x32xf32>
      %203 = arith.maximumf %201, %202 : vector<12x32xf32>
      %204 = arith.index_cast %arg23 : i32 to index
      %c0_144 = arith.constant 0 : index
      %c0_145 = arith.constant 0 : index
      %205 = vector.load %arg19[%204, %c0_144, %c0_145] : memref<12x12x32xf32, #tpu.memory_space<vmem>>, vector<1x12x32xf32>
      %206 = vector.shape_cast %205 : vector<1x12x32xf32> to vector<12x32xf32>
      %207 = vector.shape_cast %203 : vector<12x32xf32> to vector<1x12x32xf32>
      tpu.vector_store %arg19[%204, %c0_144, %c0_145], %207 {strides = array<i32>} : memref<12x12x32xf32, #tpu.memory_space<vmem>>, vector<1x12x32xf32>,
    }
    %c12_i32_6 = arith.constant 12 : i32
    %c0_i32_7 = arith.constant 0 : i32
    %c10_i32 = arith.constant 10 : i32
    %3 = arith.addi %c0_i32_7, %c10_i32 : i32
    %c1_i32_8 = arith.constant 1 : i32
    scf.for %arg23 = %c0_i32_7 to %3 step %c1_i32_8  : i32 {
      %cst_133 = arith.constant 0.000000e+00 : f32
      %184 = vector.broadcast %cst_133 : f32 to vector<10x64xf32>
      %c0_i32_134 = arith.constant 0 : i32
      %185 = arith.addi %arg23, %c0_i32_134 : i32
      %186 = arith.index_cast %185 : i32 to index
      %c0_135 = arith.constant 0 : index
      %c0_136 = arith.constant 0 : index
      %187 = vector.load %arg19[%186, %c0_135, %c0_136] : memref<12x12x32xf32, #tpu.memory_space<vmem>>, vector<1x12x32xf32>
      %188 = vector.shape_cast %187 : vector<1x12x32xf32> to vector<12x32xf32>
      %189 = vector.extract_strided_slice %188 {offsets = [0, 0], sizes = [10, 32], strides = [1, 1]} : vector<12x32xf32> to vector<10x32xf32>
      %190 = arith.truncf %189 : vector<10x32xf32> to vector<10x32xbf16>
      %c0_137 = arith.constant 0 : index
      %c0_138 = arith.constant 0 : index
      %c0_139 = arith.constant 0 : index
      %191 = vector.load %arg6[%c0_137, %c0_138, %c0_139] : memref<9x32x64xbf16, #tpu.memory_space<vmem>>, vector<1x32x64xbf16>
      %192 = vector.shape_cast %191 : vector<1x32x64xbf16> to vector<32x64xbf16>
      %cst_140 = arith.constant dense<0.000000e+00> : vector<10x64xf32>
      %193 = tpu.matmul %190, %192, %cst_140 {dimension_numbers = #tpu.dot_dimension_numbers<[1], [0], [0], [1], [0, 0, 1, 1], [], []>} : vector<10x32xbf16>, vector<32x64xbf16>, vector<10x64xf32> -> vector<10x64xf32>
      %194 = arith.addf %184, %193 : vector<10x64xf32>
      %195 = vector.extract_strided_slice %188 {offsets = [1, 0], sizes = [10, 32], strides = [1, 1]} : vector<12x32xf32> to vector<10x32xf32>
      %196 = arith.truncf %195 : vector<10x32xf32> to vector<10x32xbf16>
      %c1_141 = arith.constant 1 : index
      %c0_142 = arith.constant 0 : index
      %c0_143 = arith.constant 0 : index
      %197 = vector.load %arg6[%c1_141, %c0_142, %c0_143] : memref<9x32x64xbf16, #tpu.memory_space<vmem>>, vector<1x32x64xbf16>
      %198 = vector.shape_cast %197 : vector<1x32x64xbf16> to vector<32x64xbf16>
      %cst_144 = arith.constant dense<0.000000e+00> : vector<10x64xf32>
      %199 = tpu.matmul %196, %198, %cst_144 {dimension_numbers = #tpu.dot_dimension_numbers<[1], [0], [0], [1], [0, 0, 1, 1], [], []>} : vector<10x32xbf16>, vector<32x64xbf16>, vector<10x64xf32> -> vector<10x64xf32>
      %200 = arith.addf %194, %199 : vector<10x64xf32>
      %201 = vector.extract_strided_slice %188 {offsets = [2, 0], sizes = [10, 32], strides = [1, 1]} : vector<12x32xf32> to vector<10x32xf32>
      %202 = arith.truncf %201 : vector<10x32xf32> to vector<10x32xbf16>
      %c2_145 = arith.constant 2 : index
      %c0_146 = arith.constant 0 : index
      %c0_147 = arith.constant 0 : index
      %203 = vector.load %arg6[%c2_145, %c0_146, %c0_147] : memref<9x32x64xbf16, #tpu.memory_space<vmem>>, vector<1x32x64xbf16>
      %204 = vector.shape_cast %203 : vector<1x32x64xbf16> to vector<32x64xbf16>
      %cst_148 = arith.constant dense<0.000000e+00> : vector<10x64xf32>
      %205 = tpu.matmul %202, %204, %cst_148 {dimension_numbers = #tpu.dot_dimension_numbers<[1], [0], [0], [1], [0, 0, 1, 1], [], []>} : vector<10x32xbf16>, vector<32x64xbf16>, vector<10x64xf32> -> vector<10x64xf32>
      %206 = arith.addf %200, %205 : vector<10x64xf32>
      %c1_i32_149 = arith.constant 1 : i32
      %207 = arith.addi %arg23, %c1_i32_149 : i32
      %208 = arith.index_cast %207 : i32 to index
      %c0_150 = arith.constant 0 : index
      %c0_151 = arith.constant 0 : index
      %209 = vector.load %arg19[%208, %c0_150, %c0_151] : memref<12x12x32xf32, #tpu.memory_space<vmem>>, vector<1x12x32xf32>
      %210 = vector.shape_cast %209 : vector<1x12x32xf32> to vector<12x32xf32>
      %211 = vector.extract_strided_slice %210 {offsets = [0, 0], sizes = [10, 32], strides = [1, 1]} : vector<12x32xf32> to vector<10x32xf32>
      %212 = arith.truncf %211 : vector<10x32xf32> to vector<10x32xbf16>
      %c3_152 = arith.constant 3 : index
      %c0_153 = arith.constant 0 : index
      %c0_154 = arith.constant 0 : index
      %213 = vector.load %arg6[%c3_152, %c0_153, %c0_154] : memref<9x32x64xbf16, #tpu.memory_space<vmem>>, vector<1x32x64xbf16>
      %214 = vector.shape_cast %213 : vector<1x32x64xbf16> to vector<32x64xbf16>
      %cst_155 = arith.constant dense<0.000000e+00> : vector<10x64xf32>
      %215 = tpu.matmul %212, %214, %cst_155 {dimension_numbers = #tpu.dot_dimension_numbers<[1], [0], [0], [1], [0, 0, 1, 1], [], []>} : vector<10x32xbf16>, vector<32x64xbf16>, vector<10x64xf32> -> vector<10x64xf32>
      %216 = arith.addf %206, %215 : vector<10x64xf32>
      %217 = vector.extract_strided_slice %210 {offsets = [1, 0], sizes = [10, 32], strides = [1, 1]} : vector<12x32xf32> to vector<10x32xf32>
      %218 = arith.truncf %217 : vector<10x32xf32> to vector<10x32xbf16>
      %c4_156 = arith.constant 4 : index
      %c0_157 = arith.constant 0 : index
      %c0_158 = arith.constant 0 : index
      %219 = vector.load %arg6[%c4_156, %c0_157, %c0_158] : memref<9x32x64xbf16, #tpu.memory_space<vmem>>, vector<1x32x64xbf16>
      %220 = vector.shape_cast %219 : vector<1x32x64xbf16> to vector<32x64xbf16>
      %cst_159 = arith.constant dense<0.000000e+00> : vector<10x64xf32>
      %221 = tpu.matmul %218, %220, %cst_159 {dimension_numbers = #tpu.dot_dimension_numbers<[1], [0], [0], [1], [0, 0, 1, 1], [], []>} : vector<10x32xbf16>, vector<32x64xbf16>, vector<10x64xf32> -> vector<10x64xf32>
      %222 = arith.addf %216, %221 : vector<10x64xf32>
      %223 = vector.extract_strided_slice %210 {offsets = [2, 0], sizes = [10, 32], strides = [1, 1]} : vector<12x32xf32> to vector<10x32xf32>
      %224 = arith.truncf %223 : vector<10x32xf32> to vector<10x32xbf16>
      %c5_160 = arith.constant 5 : index
      %c0_161 = arith.constant 0 : index
      %c0_162 = arith.constant 0 : index
      %225 = vector.load %arg6[%c5_160, %c0_161, %c0_162] : memref<9x32x64xbf16, #tpu.memory_space<vmem>>, vector<1x32x64xbf16>
      %226 = vector.shape_cast %225 : vector<1x32x64xbf16> to vector<32x64xbf16>
      %cst_163 = arith.constant dense<0.000000e+00> : vector<10x64xf32>
      %227 = tpu.matmul %224, %226, %cst_163 {dimension_numbers = #tpu.dot_dimension_numbers<[1], [0], [0], [1], [0, 0, 1, 1], [], []>} : vector<10x32xbf16>, vector<32x64xbf16>, vector<10x64xf32> -> vector<10x64xf32>
      %228 = arith.addf %222, %227 : vector<10x64xf32>
      %c2_i32 = arith.constant 2 : i32
      %229 = arith.addi %arg23, %c2_i32 : i32
      %230 = arith.index_cast %229 : i32 to index
      %c0_164 = arith.constant 0 : index
      %c0_165 = arith.constant 0 : index
      %231 = vector.load %arg19[%230, %c0_164, %c0_165] : memref<12x12x32xf32, #tpu.memory_space<vmem>>, vector<1x12x32xf32>
      %232 = vector.shape_cast %231 : vector<1x12x32xf32> to vector<12x32xf32>
      %233 = vector.extract_strided_slice %232 {offsets = [0, 0], sizes = [10, 32], strides = [1, 1]} : vector<12x32xf32> to vector<10x32xf32>
      %234 = arith.truncf %233 : vector<10x32xf32> to vector<10x32xbf16>
      %c6_166 = arith.constant 6 : index
      %c0_167 = arith.constant 0 : index
      %c0_168 = arith.constant 0 : index
      %235 = vector.load %arg6[%c6_166, %c0_167, %c0_168] : memref<9x32x64xbf16, #tpu.memory_space<vmem>>, vector<1x32x64xbf16>
      %236 = vector.shape_cast %235 : vector<1x32x64xbf16> to vector<32x64xbf16>
      %cst_169 = arith.constant dense<0.000000e+00> : vector<10x64xf32>
      %237 = tpu.matmul %234, %236, %cst_169 {dimension_numbers = #tpu.dot_dimension_numbers<[1], [0], [0], [1], [0, 0, 1, 1], [], []>} : vector<10x32xbf16>, vector<32x64xbf16>, vector<10x64xf32> -> vector<10x64xf32>
      %238 = arith.addf %228, %237 : vector<10x64xf32>
      %239 = vector.extract_strided_slice %232 {offsets = [1, 0], sizes = [10, 32], strides = [1, 1]} : vector<12x32xf32> to vector<10x32xf32>
      %240 = arith.truncf %239 : vector<10x32xf32> to vector<10x32xbf16>
      %c7_170 = arith.constant 7 : index
      %c0_171 = arith.constant 0 : index
      %c0_172 = arith.constant 0 : index
      %241 = vector.load %arg6[%c7_170, %c0_171, %c0_172] : memref<9x32x64xbf16, #tpu.memory_space<vmem>>, vector<1x32x64xbf16>
      %242 = vector.shape_cast %241 : vector<1x32x64xbf16> to vector<32x64xbf16>
      %cst_173 = arith.constant dense<0.000000e+00> : vector<10x64xf32>
      %243 = tpu.matmul %240, %242, %cst_173 {dimension_numbers = #tpu.dot_dimension_numbers<[1], [0], [0], [1], [0, 0, 1, 1], [], []>} : vector<10x32xbf16>, vector<32x64xbf16>, vector<10x64xf32> -> vector<10x64xf32>
      %244 = arith.addf %238, %243 : vector<10x64xf32>
      %245 = vector.extract_strided_slice %232 {offsets = [2, 0], sizes = [10, 32], strides = [1, 1]} : vector<12x32xf32> to vector<10x32xf32>
      %246 = arith.truncf %245 : vector<10x32xf32> to vector<10x32xbf16>
      %c8_174 = arith.constant 8 : index
      %c0_175 = arith.constant 0 : index
      %c0_176 = arith.constant 0 : index
      %247 = vector.load %arg6[%c8_174, %c0_175, %c0_176] : memref<9x32x64xbf16, #tpu.memory_space<vmem>>, vector<1x32x64xbf16>
      %248 = vector.shape_cast %247 : vector<1x32x64xbf16> to vector<32x64xbf16>
      %cst_177 = arith.constant dense<0.000000e+00> : vector<10x64xf32>
      %249 = tpu.matmul %246, %248, %cst_177 {dimension_numbers = #tpu.dot_dimension_numbers<[1], [0], [0], [1], [0, 0, 1, 1], [], []>} : vector<10x32xbf16>, vector<32x64xbf16>, vector<10x64xf32> -> vector<10x64xf32>
      %250 = arith.addf %244, %249 : vector<10x64xf32>
      %c0_178 = arith.constant 0 : index
      %c0_179 = arith.constant 0 : index
      %251 = vector.load %arg7[%c0_178, %c0_179] : memref<1x64xf32, #tpu.memory_space<vmem>>, vector<1x64xf32>
      %252 = vector.broadcast %251 : vector<1x64xf32> to vector<10x64xf32>
      %253 = arith.addf %250, %252 : vector<10x64xf32>
      %cst_180 = arith.constant 0.000000e+00 : f32
      %254 = vector.broadcast %cst_180 : f32 to vector<10x64xf32>
      %255 = arith.maximumf %253, %254 : vector<10x64xf32>
      %256 = arith.index_cast %arg23 : i32 to index
      %c0_181 = arith.constant 0 : index
      %c0_182 = arith.constant 0 : index
      %257 = vector.load %arg20[%256, %c0_181, %c0_182] : memref<10x10x64xf32, #tpu.memory_space<vmem>>, vector<1x10x64xf32>
      %258 = vector.shape_cast %257 : vector<1x10x64xf32> to vector<10x64xf32>
      %259 = vector.shape_cast %255 : vector<10x64xf32> to vector<1x10x64xf32>
      tpu.vector_store %arg20[%256, %c0_181, %c0_182], %259 {strides = array<i32>} : memref<10x10x64xf32, #tpu.memory_space<vmem>>, vector<1x10x64xf32>,
    }
    %c10_i32_9 = arith.constant 10 : i32
    %c0_i32_10 = arith.constant 0 : i32
    %c8_i32 = arith.constant 8 : i32
    %4 = arith.addi %c0_i32_10, %c8_i32 : i32
    %c1_i32_11 = arith.constant 1 : i32
    scf.for %arg23 = %c0_i32_10 to %4 step %c1_i32_11  : i32 {
      %cst_133 = arith.constant 0.000000e+00 : f32
      %184 = vector.broadcast %cst_133 : f32 to vector<8x64xf32>
      %c0_i32_134 = arith.constant 0 : i32
      %185 = arith.addi %arg23, %c0_i32_134 : i32
      %186 = arith.index_cast %185 : i32 to index
      %c0_135 = arith.constant 0 : index
      %c0_136 = arith.constant 0 : index
      %187 = vector.load %arg20[%186, %c0_135, %c0_136] : memref<10x10x64xf32, #tpu.memory_space<vmem>>, vector<1x10x64xf32>
      %188 = vector.shape_cast %187 : vector<1x10x64xf32> to vector<10x64xf32>
      %189 = vector.extract_strided_slice %188 {offsets = [0, 0], sizes = [8, 64], strides = [1, 1]} : vector<10x64xf32> to vector<8x64xf32>
      %190 = arith.truncf %189 : vector<8x64xf32> to vector<8x64xbf16>
      %c0_137 = arith.constant 0 : index
      %c0_138 = arith.constant 0 : index
      %c0_139 = arith.constant 0 : index
      %191 = vector.load %arg8[%c0_137, %c0_138, %c0_139] : memref<9x64x64xbf16, #tpu.memory_space<vmem>>, vector<1x64x64xbf16>
      %192 = vector.shape_cast %191 : vector<1x64x64xbf16> to vector<64x64xbf16>
      %cst_140 = arith.constant dense<0.000000e+00> : vector<8x64xf32>
      %193 = tpu.matmul %190, %192, %cst_140 {dimension_numbers = #tpu.dot_dimension_numbers<[1], [0], [0], [1], [0, 0, 1, 1], [], []>} : vector<8x64xbf16>, vector<64x64xbf16>, vector<8x64xf32> -> vector<8x64xf32>
      %194 = arith.addf %184, %193 : vector<8x64xf32>
      %195 = vector.extract_strided_slice %188 {offsets = [1, 0], sizes = [8, 64], strides = [1, 1]} : vector<10x64xf32> to vector<8x64xf32>
      %196 = arith.truncf %195 : vector<8x64xf32> to vector<8x64xbf16>
      %c1_141 = arith.constant 1 : index
      %c0_142 = arith.constant 0 : index
      %c0_143 = arith.constant 0 : index
      %197 = vector.load %arg8[%c1_141, %c0_142, %c0_143] : memref<9x64x64xbf16, #tpu.memory_space<vmem>>, vector<1x64x64xbf16>
      %198 = vector.shape_cast %197 : vector<1x64x64xbf16> to vector<64x64xbf16>
      %cst_144 = arith.constant dense<0.000000e+00> : vector<8x64xf32>
      %199 = tpu.matmul %196, %198, %cst_144 {dimension_numbers = #tpu.dot_dimension_numbers<[1], [0], [0], [1], [0, 0, 1, 1], [], []>} : vector<8x64xbf16>, vector<64x64xbf16>, vector<8x64xf32> -> vector<8x64xf32>
      %200 = arith.addf %194, %199 : vector<8x64xf32>
      %201 = vector.extract_strided_slice %188 {offsets = [2, 0], sizes = [8, 64], strides = [1, 1]} : vector<10x64xf32> to vector<8x64xf32>
      %202 = arith.truncf %201 : vector<8x64xf32> to vector<8x64xbf16>
      %c2_145 = arith.constant 2 : index
      %c0_146 = arith.constant 0 : index
      %c0_147 = arith.constant 0 : index
      %203 = vector.load %arg8[%c2_145, %c0_146, %c0_147] : memref<9x64x64xbf16, #tpu.memory_space<vmem>>, vector<1x64x64xbf16>
      %204 = vector.shape_cast %203 : vector<1x64x64xbf16> to vector<64x64xbf16>
      %cst_148 = arith.constant dense<0.000000e+00> : vector<8x64xf32>
      %205 = tpu.matmul %202, %204, %cst_148 {dimension_numbers = #tpu.dot_dimension_numbers<[1], [0], [0], [1], [0, 0, 1, 1], [], []>} : vector<8x64xbf16>, vector<64x64xbf16>, vector<8x64xf32> -> vector<8x64xf32>
      %206 = arith.addf %200, %205 : vector<8x64xf32>
      %c1_i32_149 = arith.constant 1 : i32
      %207 = arith.addi %arg23, %c1_i32_149 : i32
      %208 = arith.index_cast %207 : i32 to index
      %c0_150 = arith.constant 0 : index
      %c0_151 = arith.constant 0 : index
      %209 = vector.load %arg20[%208, %c0_150, %c0_151] : memref<10x10x64xf32, #tpu.memory_space<vmem>>, vector<1x10x64xf32>
      %210 = vector.shape_cast %209 : vector<1x10x64xf32> to vector<10x64xf32>
      %211 = vector.extract_strided_slice %210 {offsets = [0, 0], sizes = [8, 64], strides = [1, 1]} : vector<10x64xf32> to vector<8x64xf32>
      %212 = arith.truncf %211 : vector<8x64xf32> to vector<8x64xbf16>
      %c3_152 = arith.constant 3 : index
      %c0_153 = arith.constant 0 : index
      %c0_154 = arith.constant 0 : index
      %213 = vector.load %arg8[%c3_152, %c0_153, %c0_154] : memref<9x64x64xbf16, #tpu.memory_space<vmem>>, vector<1x64x64xbf16>
      %214 = vector.shape_cast %213 : vector<1x64x64xbf16> to vector<64x64xbf16>
      %cst_155 = arith.constant dense<0.000000e+00> : vector<8x64xf32>
      %215 = tpu.matmul %212, %214, %cst_155 {dimension_numbers = #tpu.dot_dimension_numbers<[1], [0], [0], [1], [0, 0, 1, 1], [], []>} : vector<8x64xbf16>, vector<64x64xbf16>, vector<8x64xf32> -> vector<8x64xf32>
      %216 = arith.addf %206, %215 : vector<8x64xf32>
      %217 = vector.extract_strided_slice %210 {offsets = [1, 0], sizes = [8, 64], strides = [1, 1]} : vector<10x64xf32> to vector<8x64xf32>
      %218 = arith.truncf %217 : vector<8x64xf32> to vector<8x64xbf16>
      %c4_156 = arith.constant 4 : index
      %c0_157 = arith.constant 0 : index
      %c0_158 = arith.constant 0 : index
      %219 = vector.load %arg8[%c4_156, %c0_157, %c0_158] : memref<9x64x64xbf16, #tpu.memory_space<vmem>>, vector<1x64x64xbf16>
      %220 = vector.shape_cast %219 : vector<1x64x64xbf16> to vector<64x64xbf16>
      %cst_159 = arith.constant dense<0.000000e+00> : vector<8x64xf32>
      %221 = tpu.matmul %218, %220, %cst_159 {dimension_numbers = #tpu.dot_dimension_numbers<[1], [0], [0], [1], [0, 0, 1, 1], [], []>} : vector<8x64xbf16>, vector<64x64xbf16>, vector<8x64xf32> -> vector<8x64xf32>
      %222 = arith.addf %216, %221 : vector<8x64xf32>
      %223 = vector.extract_strided_slice %210 {offsets = [2, 0], sizes = [8, 64], strides = [1, 1]} : vector<10x64xf32> to vector<8x64xf32>
      %224 = arith.truncf %223 : vector<8x64xf32> to vector<8x64xbf16>
      %c5_160 = arith.constant 5 : index
      %c0_161 = arith.constant 0 : index
      %c0_162 = arith.constant 0 : index
      %225 = vector.load %arg8[%c5_160, %c0_161, %c0_162] : memref<9x64x64xbf16, #tpu.memory_space<vmem>>, vector<1x64x64xbf16>
      %226 = vector.shape_cast %225 : vector<1x64x64xbf16> to vector<64x64xbf16>
      %cst_163 = arith.constant dense<0.000000e+00> : vector<8x64xf32>
      %227 = tpu.matmul %224, %226, %cst_163 {dimension_numbers = #tpu.dot_dimension_numbers<[1], [0], [0], [1], [0, 0, 1, 1], [], []>} : vector<8x64xbf16>, vector<64x64xbf16>, vector<8x64xf32> -> vector<8x64xf32>
      %228 = arith.addf %222, %227 : vector<8x64xf32>
      %c2_i32 = arith.constant 2 : i32
      %229 = arith.addi %arg23, %c2_i32 : i32
      %230 = arith.index_cast %229 : i32 to index
      %c0_164 = arith.constant 0 : index
      %c0_165 = arith.constant 0 : index
      %231 = vector.load %arg20[%230, %c0_164, %c0_165] : memref<10x10x64xf32, #tpu.memory_space<vmem>>, vector<1x10x64xf32>
      %232 = vector.shape_cast %231 : vector<1x10x64xf32> to vector<10x64xf32>
      %233 = vector.extract_strided_slice %232 {offsets = [0, 0], sizes = [8, 64], strides = [1, 1]} : vector<10x64xf32> to vector<8x64xf32>
      %234 = arith.truncf %233 : vector<8x64xf32> to vector<8x64xbf16>
      %c6_166 = arith.constant 6 : index
      %c0_167 = arith.constant 0 : index
      %c0_168 = arith.constant 0 : index
      %235 = vector.load %arg8[%c6_166, %c0_167, %c0_168] : memref<9x64x64xbf16, #tpu.memory_space<vmem>>, vector<1x64x64xbf16>
      %236 = vector.shape_cast %235 : vector<1x64x64xbf16> to vector<64x64xbf16>
      %cst_169 = arith.constant dense<0.000000e+00> : vector<8x64xf32>
      %237 = tpu.matmul %234, %236, %cst_169 {dimension_numbers = #tpu.dot_dimension_numbers<[1], [0], [0], [1], [0, 0, 1, 1], [], []>} : vector<8x64xbf16>, vector<64x64xbf16>, vector<8x64xf32> -> vector<8x64xf32>
      %238 = arith.addf %228, %237 : vector<8x64xf32>
      %239 = vector.extract_strided_slice %232 {offsets = [1, 0], sizes = [8, 64], strides = [1, 1]} : vector<10x64xf32> to vector<8x64xf32>
      %240 = arith.truncf %239 : vector<8x64xf32> to vector<8x64xbf16>
      %c7_170 = arith.constant 7 : index
      %c0_171 = arith.constant 0 : index
      %c0_172 = arith.constant 0 : index
      %241 = vector.load %arg8[%c7_170, %c0_171, %c0_172] : memref<9x64x64xbf16, #tpu.memory_space<vmem>>, vector<1x64x64xbf16>
      %242 = vector.shape_cast %241 : vector<1x64x64xbf16> to vector<64x64xbf16>
      %cst_173 = arith.constant dense<0.000000e+00> : vector<8x64xf32>
      %243 = tpu.matmul %240, %242, %cst_173 {dimension_numbers = #tpu.dot_dimension_numbers<[1], [0], [0], [1], [0, 0, 1, 1], [], []>} : vector<8x64xbf16>, vector<64x64xbf16>, vector<8x64xf32> -> vector<8x64xf32>
      %244 = arith.addf %238, %243 : vector<8x64xf32>
      %245 = vector.extract_strided_slice %232 {offsets = [2, 0], sizes = [8, 64], strides = [1, 1]} : vector<10x64xf32> to vector<8x64xf32>
      %246 = arith.truncf %245 : vector<8x64xf32> to vector<8x64xbf16>
      %c8_174 = arith.constant 8 : index
      %c0_175 = arith.constant 0 : index
      %c0_176 = arith.constant 0 : index
      %247 = vector.load %arg8[%c8_174, %c0_175, %c0_176] : memref<9x64x64xbf16, #tpu.memory_space<vmem>>, vector<1x64x64xbf16>
      %248 = vector.shape_cast %247 : vector<1x64x64xbf16> to vector<64x64xbf16>
      %cst_177 = arith.constant dense<0.000000e+00> : vector<8x64xf32>
      %249 = tpu.matmul %246, %248, %cst_177 {dimension_numbers = #tpu.dot_dimension_numbers<[1], [0], [0], [1], [0, 0, 1, 1], [], []>} : vector<8x64xbf16>, vector<64x64xbf16>, vector<8x64xf32> -> vector<8x64xf32>
      %250 = arith.addf %244, %249 : vector<8x64xf32>
      %c0_178 = arith.constant 0 : index
      %c0_179 = arith.constant 0 : index
      %251 = vector.load %arg9[%c0_178, %c0_179] : memref<1x64xf32, #tpu.memory_space<vmem>>, vector<1x64xf32>
      %252 = vector.broadcast %251 : vector<1x64xf32> to vector<8x64xf32>
      %253 = arith.addf %250, %252 : vector<8x64xf32>
      %254 = arith.index_cast %arg23 : i32 to index
      %c0_180 = arith.constant 0 : index
      %c0_181 = arith.constant 0 : index
      %255 = vector.load %arg21[%254, %c0_180, %c0_181] : memref<8x8x64xf32, #tpu.memory_space<vmem>>, vector<1x8x64xf32>
      %256 = vector.shape_cast %255 : vector<1x8x64xf32> to vector<8x64xf32>
      %257 = vector.shape_cast %253 : vector<8x64xf32> to vector<1x8x64xf32>
      tpu.vector_store %arg21[%254, %c0_180, %c0_181], %257 {strides = array<i32>} : memref<8x8x64xf32, #tpu.memory_space<vmem>>, vector<1x8x64xf32>,
    }
    %c8_i32_12 = arith.constant 8 : i32
    %c0_i32_13 = arith.constant 0 : i32
    %c4_i32 = arith.constant 4 : i32
    %5 = arith.addi %c0_i32_13, %c4_i32 : i32
    %c1_i32_14 = arith.constant 1 : i32
    scf.for %arg23 = %c0_i32_13 to %5 step %c1_i32_14  : i32 {
      %c2_i32 = arith.constant 2 : i32
      %184 = arith.muli %c2_i32, %arg23 : i32
      %185 = arith.index_cast %184 : i32 to index
      %c0_133 = arith.constant 0 : index
      %c0_134 = arith.constant 0 : index
      %186 = tpu.strided_load %arg21[%185, %c0_133, %c0_134] {strides = array<i32: 1, 2, 1>} : memref<8x8x64xf32, #tpu.memory_space<vmem>>, vector<1x4x64xf32>
      %187 = vector.shape_cast %186 : vector<1x4x64xf32> to vector<4x64xf32>
      %188 = arith.index_cast %184 : i32 to index
      %c1_135 = arith.constant 1 : index
      %c0_136 = arith.constant 0 : index
      %189 = tpu.strided_load %arg21[%188, %c1_135, %c0_136] {strides = array<i32: 1, 2, 1>} : memref<8x8x64xf32, #tpu.memory_space<vmem>>, vector<1x4x64xf32>
      %190 = vector.shape_cast %189 : vector<1x4x64xf32> to vector<4x64xf32>
      %c1_i32_137 = arith.constant 1 : i32
      %191 = arith.addi %184, %c1_i32_137 : i32
      %192 = arith.index_cast %191 : i32 to index
      %c0_138 = arith.constant 0 : index
      %c0_139 = arith.constant 0 : index
      %193 = tpu.strided_load %arg21[%192, %c0_138, %c0_139] {strides = array<i32: 1, 2, 1>} : memref<8x8x64xf32, #tpu.memory_space<vmem>>, vector<1x4x64xf32>
      %194 = vector.shape_cast %193 : vector<1x4x64xf32> to vector<4x64xf32>
      %c1_i32_140 = arith.constant 1 : i32
      %195 = arith.addi %184, %c1_i32_140 : i32
      %196 = arith.index_cast %195 : i32 to index
      %c1_141 = arith.constant 1 : index
      %c0_142 = arith.constant 0 : index
      %197 = tpu.strided_load %arg21[%196, %c1_141, %c0_142] {strides = array<i32: 1, 2, 1>} : memref<8x8x64xf32, #tpu.memory_space<vmem>>, vector<1x4x64xf32>
      %198 = vector.shape_cast %197 : vector<1x4x64xf32> to vector<4x64xf32>
      %199 = arith.maximumf %187, %190 : vector<4x64xf32>
      %200 = arith.maximumf %194, %198 : vector<4x64xf32>
      %201 = arith.maximumf %199, %200 : vector<4x64xf32>
      %cst_143 = arith.constant 0.000000e+00 : f32
      %202 = vector.broadcast %cst_143 : f32 to vector<4x64xf32>
      %203 = arith.maximumf %201, %202 : vector<4x64xf32>
      %204 = arith.index_cast %arg23 : i32 to index
      %c0_144 = arith.constant 0 : index
      %c0_145 = arith.constant 0 : index
      %205 = vector.load %arg22[%204, %c0_144, %c0_145] : memref<4x4x64xf32, #tpu.memory_space<vmem>>, vector<1x4x64xf32>
      %206 = vector.shape_cast %205 : vector<1x4x64xf32> to vector<4x64xf32>
      %207 = vector.shape_cast %203 : vector<4x64xf32> to vector<1x4x64xf32>
      tpu.vector_store %arg22[%204, %c0_144, %c0_145], %207 {strides = array<i32>} : memref<4x4x64xf32, #tpu.memory_space<vmem>>, vector<1x4x64xf32>,
    }
    %c4_i32_15 = arith.constant 4 : i32
    %c0 = arith.constant 0 : index
    %c0_16 = arith.constant 0 : index
    %6 = vector.load %arg13[%c0, %c0_16] : memref<1x64xf32, #tpu.memory_space<vmem>>, vector<1x64xf32>
    %cst = arith.constant 0.000000e+00 : f32
    %7 = vector.broadcast %cst : f32 to vector<2x128xf32>
    %c0_17 = arith.constant 0 : index
    %c0_18 = arith.constant 0 : index
    %c0_19 = arith.constant 0 : index
    %8 = vector.load %arg22[%c0_17, %c0_18, %c0_19] : memref<4x4x64xf32, #tpu.memory_space<vmem>>, vector<1x4x64xf32>
    %9 = vector.shape_cast %8 : vector<1x4x64xf32> to vector<4x64xf32>
    %10 = vector.extract_strided_slice %9 {offsets = [0, 0], sizes = [2, 64], strides = [1, 1]} : vector<4x64xf32> to vector<2x64xf32>
    %11 = arith.truncf %10 : vector<2x64xf32> to vector<2x64xbf16>
    %c0_20 = arith.constant 0 : index
    %c0_21 = arith.constant 0 : index
    %c0_22 = arith.constant 0 : index
    %12 = vector.load %arg10[%c0_20, %c0_21, %c0_22] : memref<9x64x128xbf16, #tpu.memory_space<vmem>>, vector<1x64x128xbf16>
    %13 = vector.shape_cast %12 : vector<1x64x128xbf16> to vector<64x128xbf16>
    %cst_23 = arith.constant dense<0.000000e+00> : vector<2x128xf32>
    %14 = tpu.matmul %11, %13, %cst_23 {dimension_numbers = #tpu.dot_dimension_numbers<[1], [0], [0], [1], [0, 0, 1, 1], [], []>} : vector<2x64xbf16>, vector<64x128xbf16>, vector<2x128xf32> -> vector<2x128xf32>
    %15 = arith.addf %7, %14 : vector<2x128xf32>
    %16 = vector.extract_strided_slice %9 {offsets = [1, 0], sizes = [2, 64], strides = [1, 1]} : vector<4x64xf32> to vector<2x64xf32>
    %17 = arith.truncf %16 : vector<2x64xf32> to vector<2x64xbf16>
    %c1 = arith.constant 1 : index
    %c0_24 = arith.constant 0 : index
    %c0_25 = arith.constant 0 : index
    %18 = vector.load %arg10[%c1, %c0_24, %c0_25] : memref<9x64x128xbf16, #tpu.memory_space<vmem>>, vector<1x64x128xbf16>
    %19 = vector.shape_cast %18 : vector<1x64x128xbf16> to vector<64x128xbf16>
    %cst_26 = arith.constant dense<0.000000e+00> : vector<2x128xf32>
    %20 = tpu.matmul %17, %19, %cst_26 {dimension_numbers = #tpu.dot_dimension_numbers<[1], [0], [0], [1], [0, 0, 1, 1], [], []>} : vector<2x64xbf16>, vector<64x128xbf16>, vector<2x128xf32> -> vector<2x128xf32>
    %21 = arith.addf %15, %20 : vector<2x128xf32>
    %22 = vector.extract_strided_slice %9 {offsets = [2, 0], sizes = [2, 64], strides = [1, 1]} : vector<4x64xf32> to vector<2x64xf32>
    %23 = arith.truncf %22 : vector<2x64xf32> to vector<2x64xbf16>
    %c2 = arith.constant 2 : index
    %c0_27 = arith.constant 0 : index
    %c0_28 = arith.constant 0 : index
    %24 = vector.load %arg10[%c2, %c0_27, %c0_28] : memref<9x64x128xbf16, #tpu.memory_space<vmem>>, vector<1x64x128xbf16>
    %25 = vector.shape_cast %24 : vector<1x64x128xbf16> to vector<64x128xbf16>
    %cst_29 = arith.constant dense<0.000000e+00> : vector<2x128xf32>
    %26 = tpu.matmul %23, %25, %cst_29 {dimension_numbers = #tpu.dot_dimension_numbers<[1], [0], [0], [1], [0, 0, 1, 1], [], []>} : vector<2x64xbf16>, vector<64x128xbf16>, vector<2x128xf32> -> vector<2x128xf32>
    %27 = arith.addf %21, %26 : vector<2x128xf32>
    %c1_30 = arith.constant 1 : index
    %c0_31 = arith.constant 0 : index
    %c0_32 = arith.constant 0 : index
    %28 = vector.load %arg22[%c1_30, %c0_31, %c0_32] : memref<4x4x64xf32, #tpu.memory_space<vmem>>, vector<1x4x64xf32>
    %29 = vector.shape_cast %28 : vector<1x4x64xf32> to vector<4x64xf32>
    %30 = vector.extract_strided_slice %29 {offsets = [0, 0], sizes = [2, 64], strides = [1, 1]} : vector<4x64xf32> to vector<2x64xf32>
    %31 = arith.truncf %30 : vector<2x64xf32> to vector<2x64xbf16>
    %c3 = arith.constant 3 : index
    %c0_33 = arith.constant 0 : index
    %c0_34 = arith.constant 0 : index
    %32 = vector.load %arg10[%c3, %c0_33, %c0_34] : memref<9x64x128xbf16, #tpu.memory_space<vmem>>, vector<1x64x128xbf16>
    %33 = vector.shape_cast %32 : vector<1x64x128xbf16> to vector<64x128xbf16>
    %cst_35 = arith.constant dense<0.000000e+00> : vector<2x128xf32>
    %34 = tpu.matmul %31, %33, %cst_35 {dimension_numbers = #tpu.dot_dimension_numbers<[1], [0], [0], [1], [0, 0, 1, 1], [], []>} : vector<2x64xbf16>, vector<64x128xbf16>, vector<2x128xf32> -> vector<2x128xf32>
    %35 = arith.addf %27, %34 : vector<2x128xf32>
    %36 = vector.extract_strided_slice %29 {offsets = [1, 0], sizes = [2, 64], strides = [1, 1]} : vector<4x64xf32> to vector<2x64xf32>
    %37 = arith.truncf %36 : vector<2x64xf32> to vector<2x64xbf16>
    %c4 = arith.constant 4 : index
    %c0_36 = arith.constant 0 : index
    %c0_37 = arith.constant 0 : index
    %38 = vector.load %arg10[%c4, %c0_36, %c0_37] : memref<9x64x128xbf16, #tpu.memory_space<vmem>>, vector<1x64x128xbf16>
    %39 = vector.shape_cast %38 : vector<1x64x128xbf16> to vector<64x128xbf16>
    %cst_38 = arith.constant dense<0.000000e+00> : vector<2x128xf32>
    %40 = tpu.matmul %37, %39, %cst_38 {dimension_numbers = #tpu.dot_dimension_numbers<[1], [0], [0], [1], [0, 0, 1, 1], [], []>} : vector<2x64xbf16>, vector<64x128xbf16>, vector<2x128xf32> -> vector<2x128xf32>
    %41 = arith.addf %35, %40 : vector<2x128xf32>
    %42 = vector.extract_strided_slice %29 {offsets = [2, 0], sizes = [2, 64], strides = [1, 1]} : vector<4x64xf32> to vector<2x64xf32>
    %43 = arith.truncf %42 : vector<2x64xf32> to vector<2x64xbf16>
    %c5 = arith.constant 5 : index
    %c0_39 = arith.constant 0 : index
    %c0_40 = arith.constant 0 : index
    %44 = vector.load %arg10[%c5, %c0_39, %c0_40] : memref<9x64x128xbf16, #tpu.memory_space<vmem>>, vector<1x64x128xbf16>
    %45 = vector.shape_cast %44 : vector<1x64x128xbf16> to vector<64x128xbf16>
    %cst_41 = arith.constant dense<0.000000e+00> : vector<2x128xf32>
    %46 = tpu.matmul %43, %45, %cst_41 {dimension_numbers = #tpu.dot_dimension_numbers<[1], [0], [0], [1], [0, 0, 1, 1], [], []>} : vector<2x64xbf16>, vector<64x128xbf16>, vector<2x128xf32> -> vector<2x128xf32>
    %47 = arith.addf %41, %46 : vector<2x128xf32>
    %c2_42 = arith.constant 2 : index
    %c0_43 = arith.constant 0 : index
    %c0_44 = arith.constant 0 : index
    %48 = vector.load %arg22[%c2_42, %c0_43, %c0_44] : memref<4x4x64xf32, #tpu.memory_space<vmem>>, vector<1x4x64xf32>
    %49 = vector.shape_cast %48 : vector<1x4x64xf32> to vector<4x64xf32>
    %50 = vector.extract_strided_slice %49 {offsets = [0, 0], sizes = [2, 64], strides = [1, 1]} : vector<4x64xf32> to vector<2x64xf32>
    %51 = arith.truncf %50 : vector<2x64xf32> to vector<2x64xbf16>
    %c6 = arith.constant 6 : index
    %c0_45 = arith.constant 0 : index
    %c0_46 = arith.constant 0 : index
    %52 = vector.load %arg10[%c6, %c0_45, %c0_46] : memref<9x64x128xbf16, #tpu.memory_space<vmem>>, vector<1x64x128xbf16>
    %53 = vector.shape_cast %52 : vector<1x64x128xbf16> to vector<64x128xbf16>
    %cst_47 = arith.constant dense<0.000000e+00> : vector<2x128xf32>
    %54 = tpu.matmul %51, %53, %cst_47 {dimension_numbers = #tpu.dot_dimension_numbers<[1], [0], [0], [1], [0, 0, 1, 1], [], []>} : vector<2x64xbf16>, vector<64x128xbf16>, vector<2x128xf32> -> vector<2x128xf32>
    %55 = arith.addf %47, %54 : vector<2x128xf32>
    %56 = vector.extract_strided_slice %49 {offsets = [1, 0], sizes = [2, 64], strides = [1, 1]} : vector<4x64xf32> to vector<2x64xf32>
    %57 = arith.truncf %56 : vector<2x64xf32> to vector<2x64xbf16>
    %c7 = arith.constant 7 : index
    %c0_48 = arith.constant 0 : index
    %c0_49 = arith.constant 0 : index
    %58 = vector.load %arg10[%c7, %c0_48, %c0_49] : memref<9x64x128xbf16, #tpu.memory_space<vmem>>, vector<1x64x128xbf16>
    %59 = vector.shape_cast %58 : vector<1x64x128xbf16> to vector<64x128xbf16>
    %cst_50 = arith.constant dense<0.000000e+00> : vector<2x128xf32>
    %60 = tpu.matmul %57, %59, %cst_50 {dimension_numbers = #tpu.dot_dimension_numbers<[1], [0], [0], [1], [0, 0, 1, 1], [], []>} : vector<2x64xbf16>, vector<64x128xbf16>, vector<2x128xf32> -> vector<2x128xf32>
    %61 = arith.addf %55, %60 : vector<2x128xf32>
    %62 = vector.extract_strided_slice %49 {offsets = [2, 0], sizes = [2, 64], strides = [1, 1]} : vector<4x64xf32> to vector<2x64xf32>
    %63 = arith.truncf %62 : vector<2x64xf32> to vector<2x64xbf16>
    %c8 = arith.constant 8 : index
    %c0_51 = arith.constant 0 : index
    %c0_52 = arith.constant 0 : index
    %64 = vector.load %arg10[%c8, %c0_51, %c0_52] : memref<9x64x128xbf16, #tpu.memory_space<vmem>>, vector<1x64x128xbf16>
    %65 = vector.shape_cast %64 : vector<1x64x128xbf16> to vector<64x128xbf16>
    %cst_53 = arith.constant dense<0.000000e+00> : vector<2x128xf32>
    %66 = tpu.matmul %63, %65, %cst_53 {dimension_numbers = #tpu.dot_dimension_numbers<[1], [0], [0], [1], [0, 0, 1, 1], [], []>} : vector<2x64xbf16>, vector<64x128xbf16>, vector<2x128xf32> -> vector<2x128xf32>
    %67 = arith.addf %61, %66 : vector<2x128xf32>
    %c0_54 = arith.constant 0 : index
    %c0_55 = arith.constant 0 : index
    %68 = vector.load %arg11[%c0_54, %c0_55] : memref<1x128xf32, #tpu.memory_space<vmem>>, vector<1x128xf32>
    %69 = vector.broadcast %68 : vector<1x128xf32> to vector<2x128xf32>
    %70 = arith.addf %67, %69 : vector<2x128xf32>
    %cst_56 = arith.constant 0.000000e+00 : f32
    %71 = vector.broadcast %cst_56 : f32 to vector<2x128xf32>
    %72 = arith.maximumf %70, %71 : vector<2x128xf32>
    %73 = vector.extract_strided_slice %72 {offsets = [0, 0], sizes = [1, 128], strides = [1, 1]} : vector<2x128xf32> to vector<1x128xf32>
    %74 = arith.truncf %73 : vector<1x128xf32> to vector<1x128xbf16>
    %c0_57 = arith.constant 0 : index
    %c0_58 = arith.constant 0 : index
    %c0_59 = arith.constant 0 : index
    %75 = vector.load %arg12[%c0_57, %c0_58, %c0_59] : memref<4x128x64xbf16, #tpu.memory_space<vmem>>, vector<1x128x64xbf16>
    %76 = vector.shape_cast %75 : vector<1x128x64xbf16> to vector<128x64xbf16>
    %cst_60 = arith.constant dense<0.000000e+00> : vector<1x64xf32>
    %77 = tpu.matmul %74, %76, %cst_60 {dimension_numbers = #tpu.dot_dimension_numbers<[1], [0], [0], [1], [0, 0, 1, 1], [], []>} : vector<1x128xbf16>, vector<128x64xbf16>, vector<1x64xf32> -> vector<1x64xf32>
    %78 = arith.addf %6, %77 : vector<1x64xf32>
    %79 = vector.extract_strided_slice %72 {offsets = [1, 0], sizes = [1, 128], strides = [1, 1]} : vector<2x128xf32> to vector<1x128xf32>
    %80 = arith.truncf %79 : vector<1x128xf32> to vector<1x128xbf16>
    %c1_61 = arith.constant 1 : index
    %c0_62 = arith.constant 0 : index
    %c0_63 = arith.constant 0 : index
    %81 = vector.load %arg12[%c1_61, %c0_62, %c0_63] : memref<4x128x64xbf16, #tpu.memory_space<vmem>>, vector<1x128x64xbf16>
    %82 = vector.shape_cast %81 : vector<1x128x64xbf16> to vector<128x64xbf16>
    %cst_64 = arith.constant dense<0.000000e+00> : vector<1x64xf32>
    %83 = tpu.matmul %80, %82, %cst_64 {dimension_numbers = #tpu.dot_dimension_numbers<[1], [0], [0], [1], [0, 0, 1, 1], [], []>} : vector<1x128xbf16>, vector<128x64xbf16>, vector<1x64xf32> -> vector<1x64xf32>
    %84 = arith.addf %78, %83 : vector<1x64xf32>
    %cst_65 = arith.constant 0.000000e+00 : f32
    %85 = vector.broadcast %cst_65 : f32 to vector<2x128xf32>
    %c1_66 = arith.constant 1 : index
    %c0_67 = arith.constant 0 : index
    %c0_68 = arith.constant 0 : index
    %86 = vector.load %arg22[%c1_66, %c0_67, %c0_68] : memref<4x4x64xf32, #tpu.memory_space<vmem>>, vector<1x4x64xf32>
    %87 = vector.shape_cast %86 : vector<1x4x64xf32> to vector<4x64xf32>
    %88 = vector.extract_strided_slice %87 {offsets = [0, 0], sizes = [2, 64], strides = [1, 1]} : vector<4x64xf32> to vector<2x64xf32>
    %89 = arith.truncf %88 : vector<2x64xf32> to vector<2x64xbf16>
    %c0_69 = arith.constant 0 : index
    %c0_70 = arith.constant 0 : index
    %c0_71 = arith.constant 0 : index
    %90 = vector.load %arg10[%c0_69, %c0_70, %c0_71] : memref<9x64x128xbf16, #tpu.memory_space<vmem>>, vector<1x64x128xbf16>
    %91 = vector.shape_cast %90 : vector<1x64x128xbf16> to vector<64x128xbf16>
    %cst_72 = arith.constant dense<0.000000e+00> : vector<2x128xf32>
    %92 = tpu.matmul %89, %91, %cst_72 {dimension_numbers = #tpu.dot_dimension_numbers<[1], [0], [0], [1], [0, 0, 1, 1], [], []>} : vector<2x64xbf16>, vector<64x128xbf16>, vector<2x128xf32> -> vector<2x128xf32>
    %93 = arith.addf %85, %92 : vector<2x128xf32>
    %94 = vector.extract_strided_slice %87 {offsets = [1, 0], sizes = [2, 64], strides = [1, 1]} : vector<4x64xf32> to vector<2x64xf32>
    %95 = arith.truncf %94 : vector<2x64xf32> to vector<2x64xbf16>
    %c1_73 = arith.constant 1 : index
    %c0_74 = arith.constant 0 : index
    %c0_75 = arith.constant 0 : index
    %96 = vector.load %arg10[%c1_73, %c0_74, %c0_75] : memref<9x64x128xbf16, #tpu.memory_space<vmem>>, vector<1x64x128xbf16>
    %97 = vector.shape_cast %96 : vector<1x64x128xbf16> to vector<64x128xbf16>
    %cst_76 = arith.constant dense<0.000000e+00> : vector<2x128xf32>
    %98 = tpu.matmul %95, %97, %cst_76 {dimension_numbers = #tpu.dot_dimension_numbers<[1], [0], [0], [1], [0, 0, 1, 1], [], []>} : vector<2x64xbf16>, vector<64x128xbf16>, vector<2x128xf32> -> vector<2x128xf32>
    %99 = arith.addf %93, %98 : vector<2x128xf32>
    %100 = vector.extract_strided_slice %87 {offsets = [2, 0], sizes = [2, 64], strides = [1, 1]} : vector<4x64xf32> to vector<2x64xf32>
    %101 = arith.truncf %100 : vector<2x64xf32> to vector<2x64xbf16>
    %c2_77 = arith.constant 2 : index
    %c0_78 = arith.constant 0 : index
    %c0_79 = arith.constant 0 : index
    %102 = vector.load %arg10[%c2_77, %c0_78, %c0_79] : memref<9x64x128xbf16, #tpu.memory_space<vmem>>, vector<1x64x128xbf16>
    %103 = vector.shape_cast %102 : vector<1x64x128xbf16> to vector<64x128xbf16>
    %cst_80 = arith.constant dense<0.000000e+00> : vector<2x128xf32>
    %104 = tpu.matmul %101, %103, %cst_80 {dimension_numbers = #tpu.dot_dimension_numbers<[1], [0], [0], [1], [0, 0, 1, 1], [], []>} : vector<2x64xbf16>, vector<64x128xbf16>, vector<2x128xf32> -> vector<2x128xf32>
    %105 = arith.addf %99, %104 : vector<2x128xf32>
    %c2_81 = arith.constant 2 : index
    %c0_82 = arith.constant 0 : index
    %c0_83 = arith.constant 0 : index
    %106 = vector.load %arg22[%c2_81, %c0_82, %c0_83] : memref<4x4x64xf32, #tpu.memory_space<vmem>>, vector<1x4x64xf32>
    %107 = vector.shape_cast %106 : vector<1x4x64xf32> to vector<4x64xf32>
    %108 = vector.extract_strided_slice %107 {offsets = [0, 0], sizes = [2, 64], strides = [1, 1]} : vector<4x64xf32> to vector<2x64xf32>
    %109 = arith.truncf %108 : vector<2x64xf32> to vector<2x64xbf16>
    %c3_84 = arith.constant 3 : index
    %c0_85 = arith.constant 0 : index
    %c0_86 = arith.constant 0 : index
    %110 = vector.load %arg10[%c3_84, %c0_85, %c0_86] : memref<9x64x128xbf16, #tpu.memory_space<vmem>>, vector<1x64x128xbf16>
    %111 = vector.shape_cast %110 : vector<1x64x128xbf16> to vector<64x128xbf16>
    %cst_87 = arith.constant dense<0.000000e+00> : vector<2x128xf32>
    %112 = tpu.matmul %109, %111, %cst_87 {dimension_numbers = #tpu.dot_dimension_numbers<[1], [0], [0], [1], [0, 0, 1, 1], [], []>} : vector<2x64xbf16>, vector<64x128xbf16>, vector<2x128xf32> -> vector<2x128xf32>
    %113 = arith.addf %105, %112 : vector<2x128xf32>
    %114 = vector.extract_strided_slice %107 {offsets = [1, 0], sizes = [2, 64], strides = [1, 1]} : vector<4x64xf32> to vector<2x64xf32>
    %115 = arith.truncf %114 : vector<2x64xf32> to vector<2x64xbf16>
    %c4_88 = arith.constant 4 : index
    %c0_89 = arith.constant 0 : index
    %c0_90 = arith.constant 0 : index
    %116 = vector.load %arg10[%c4_88, %c0_89, %c0_90] : memref<9x64x128xbf16, #tpu.memory_space<vmem>>, vector<1x64x128xbf16>
    %117 = vector.shape_cast %116 : vector<1x64x128xbf16> to vector<64x128xbf16>
    %cst_91 = arith.constant dense<0.000000e+00> : vector<2x128xf32>
    %118 = tpu.matmul %115, %117, %cst_91 {dimension_numbers = #tpu.dot_dimension_numbers<[1], [0], [0], [1], [0, 0, 1, 1], [], []>} : vector<2x64xbf16>, vector<64x128xbf16>, vector<2x128xf32> -> vector<2x128xf32>
    %119 = arith.addf %113, %118 : vector<2x128xf32>
    %120 = vector.extract_strided_slice %107 {offsets = [2, 0], sizes = [2, 64], strides = [1, 1]} : vector<4x64xf32> to vector<2x64xf32>
    %121 = arith.truncf %120 : vector<2x64xf32> to vector<2x64xbf16>
    %c5_92 = arith.constant 5 : index
    %c0_93 = arith.constant 0 : index
    %c0_94 = arith.constant 0 : index
    %122 = vector.load %arg10[%c5_92, %c0_93, %c0_94] : memref<9x64x128xbf16, #tpu.memory_space<vmem>>, vector<1x64x128xbf16>
    %123 = vector.shape_cast %122 : vector<1x64x128xbf16> to vector<64x128xbf16>
    %cst_95 = arith.constant dense<0.000000e+00> : vector<2x128xf32>
    %124 = tpu.matmul %121, %123, %cst_95 {dimension_numbers = #tpu.dot_dimension_numbers<[1], [0], [0], [1], [0, 0, 1, 1], [], []>} : vector<2x64xbf16>, vector<64x128xbf16>, vector<2x128xf32> -> vector<2x128xf32>
    %125 = arith.addf %119, %124 : vector<2x128xf32>
    %c3_96 = arith.constant 3 : index
    %c0_97 = arith.constant 0 : index
    %c0_98 = arith.constant 0 : index
    %126 = vector.load %arg22[%c3_96, %c0_97, %c0_98] : memref<4x4x64xf32, #tpu.memory_space<vmem>>, vector<1x4x64xf32>
    %127 = vector.shape_cast %126 : vector<1x4x64xf32> to vector<4x64xf32>
    %128 = vector.extract_strided_slice %127 {offsets = [0, 0], sizes = [2, 64], strides = [1, 1]} : vector<4x64xf32> to vector<2x64xf32>
    %129 = arith.truncf %128 : vector<2x64xf32> to vector<2x64xbf16>
    %c6_99 = arith.constant 6 : index
    %c0_100 = arith.constant 0 : index
    %c0_101 = arith.constant 0 : index
    %130 = vector.load %arg10[%c6_99, %c0_100, %c0_101] : memref<9x64x128xbf16, #tpu.memory_space<vmem>>, vector<1x64x128xbf16>
    %131 = vector.shape_cast %130 : vector<1x64x128xbf16> to vector<64x128xbf16>
    %cst_102 = arith.constant dense<0.000000e+00> : vector<2x128xf32>
    %132 = tpu.matmul %129, %131, %cst_102 {dimension_numbers = #tpu.dot_dimension_numbers<[1], [0], [0], [1], [0, 0, 1, 1], [], []>} : vector<2x64xbf16>, vector<64x128xbf16>, vector<2x128xf32> -> vector<2x128xf32>
    %133 = arith.addf %125, %132 : vector<2x128xf32>
    %134 = vector.extract_strided_slice %127 {offsets = [1, 0], sizes = [2, 64], strides = [1, 1]} : vector<4x64xf32> to vector<2x64xf32>
    %135 = arith.truncf %134 : vector<2x64xf32> to vector<2x64xbf16>
    %c7_103 = arith.constant 7 : index
    %c0_104 = arith.constant 0 : index
    %c0_105 = arith.constant 0 : index
    %136 = vector.load %arg10[%c7_103, %c0_104, %c0_105] : memref<9x64x128xbf16, #tpu.memory_space<vmem>>, vector<1x64x128xbf16>
    %137 = vector.shape_cast %136 : vector<1x64x128xbf16> to vector<64x128xbf16>
    %cst_106 = arith.constant dense<0.000000e+00> : vector<2x128xf32>
    %138 = tpu.matmul %135, %137, %cst_106 {dimension_numbers = #tpu.dot_dimension_numbers<[1], [0], [0], [1], [0, 0, 1, 1], [], []>} : vector<2x64xbf16>, vector<64x128xbf16>, vector<2x128xf32> -> vector<2x128xf32>
    %139 = arith.addf %133, %138 : vector<2x128xf32>
    %140 = vector.extract_strided_slice %127 {offsets = [2, 0], sizes = [2, 64], strides = [1, 1]} : vector<4x64xf32> to vector<2x64xf32>
    %141 = arith.truncf %140 : vector<2x64xf32> to vector<2x64xbf16>
    %c8_107 = arith.constant 8 : index
    %c0_108 = arith.constant 0 : index
    %c0_109 = arith.constant 0 : index
    %142 = vector.load %arg10[%c8_107, %c0_108, %c0_109] : memref<9x64x128xbf16, #tpu.memory_space<vmem>>, vector<1x64x128xbf16>
    %143 = vector.shape_cast %142 : vector<1x64x128xbf16> to vector<64x128xbf16>
    %cst_110 = arith.constant dense<0.000000e+00> : vector<2x128xf32>
    %144 = tpu.matmul %141, %143, %cst_110 {dimension_numbers = #tpu.dot_dimension_numbers<[1], [0], [0], [1], [0, 0, 1, 1], [], []>} : vector<2x64xbf16>, vector<64x128xbf16>, vector<2x128xf32> -> vector<2x128xf32>
    %145 = arith.addf %139, %144 : vector<2x128xf32>
    %c0_111 = arith.constant 0 : index
    %c0_112 = arith.constant 0 : index
    %146 = vector.load %arg11[%c0_111, %c0_112] : memref<1x128xf32, #tpu.memory_space<vmem>>, vector<1x128xf32>
    %147 = vector.broadcast %146 : vector<1x128xf32> to vector<2x128xf32>
    %148 = arith.addf %145, %147 : vector<2x128xf32>
    %cst_113 = arith.constant 0.000000e+00 : f32
    %149 = vector.broadcast %cst_113 : f32 to vector<2x128xf32>
    %150 = arith.maximumf %148, %149 : vector<2x128xf32>
    %151 = vector.extract_strided_slice %150 {offsets = [0, 0], sizes = [1, 128], strides = [1, 1]} : vector<2x128xf32> to vector<1x128xf32>
    %152 = arith.truncf %151 : vector<1x128xf32> to vector<1x128xbf16>
    %c2_114 = arith.constant 2 : index
    %c0_115 = arith.constant 0 : index
    %c0_116 = arith.constant 0 : index
    %153 = vector.load %arg12[%c2_114, %c0_115, %c0_116] : memref<4x128x64xbf16, #tpu.memory_space<vmem>>, vector<1x128x64xbf16>
    %154 = vector.shape_cast %153 : vector<1x128x64xbf16> to vector<128x64xbf16>
    %cst_117 = arith.constant dense<0.000000e+00> : vector<1x64xf32>
    %155 = tpu.matmul %152, %154, %cst_117 {dimension_numbers = #tpu.dot_dimension_numbers<[1], [0], [0], [1], [0, 0, 1, 1], [], []>} : vector<1x128xbf16>, vector<128x64xbf16>, vector<1x64xf32> -> vector<1x64xf32>
    %156 = arith.addf %84, %155 : vector<1x64xf32>
    %157 = vector.extract_strided_slice %150 {offsets = [1, 0], sizes = [1, 128], strides = [1, 1]} : vector<2x128xf32> to vector<1x128xf32>
    %158 = arith.truncf %157 : vector<1x128xf32> to vector<1x128xbf16>
    %c3_118 = arith.constant 3 : index
    %c0_119 = arith.constant 0 : index
    %c0_120 = arith.constant 0 : index
    %159 = vector.load %arg12[%c3_118, %c0_119, %c0_120] : memref<4x128x64xbf16, #tpu.memory_space<vmem>>, vector<1x128x64xbf16>
    %160 = vector.shape_cast %159 : vector<1x128x64xbf16> to vector<128x64xbf16>
    %cst_121 = arith.constant dense<0.000000e+00> : vector<1x64xf32>
    %161 = tpu.matmul %158, %160, %cst_121 {dimension_numbers = #tpu.dot_dimension_numbers<[1], [0], [0], [1], [0, 0, 1, 1], [], []>} : vector<1x128xbf16>, vector<128x64xbf16>, vector<1x64xf32> -> vector<1x64xf32>
    %162 = arith.addf %156, %161 : vector<1x64xf32>
    %cst_122 = arith.constant 0.000000e+00 : f32
    %163 = vector.broadcast %cst_122 : f32 to vector<1x64xf32>
    %164 = arith.maximumf %162, %163 : vector<1x64xf32>
    %165 = arith.truncf %164 : vector<1x64xf32> to vector<1x64xbf16>
    %c0_123 = arith.constant 0 : index
    %c0_124 = arith.constant 0 : index
    %166 = vector.load %arg14[%c0_123, %c0_124] : memref<64x10xbf16, #tpu.memory_space<vmem>>, vector<64x10xbf16>
    %cst_125 = arith.constant dense<0.000000e+00> : vector<1x10xf32>
    %167 = tpu.matmul %165, %166, %cst_125 {dimension_numbers = #tpu.dot_dimension_numbers<[1], [0], [0], [1], [0, 0, 1, 1], [], []>} : vector<1x64xbf16>, vector<64x10xbf16>, vector<1x10xf32> -> vector<1x10xf32>
    %c0_126 = arith.constant 0 : index
    %c0_127 = arith.constant 0 : index
    %168 = vector.load %arg15[%c0_126, %c0_127] : memref<1x10xf32, #tpu.memory_space<vmem>>, vector<1x10xf32>
    %169 = arith.addf %167, %168 : vector<1x10xf32>
    %cst_128 = arith.constant dense<0xFF800000> : vector<1xf32>
    %170 = vector.multi_reduction <maximumf>, %169, %cst_128 [1] : vector<1x10xf32> to vector<1xf32>
    %171 = vector.shape_cast %170 : vector<1xf32> to vector<1x1xf32>
    %172 = vector.broadcast %171 : vector<1x1xf32> to vector<1x10xf32>
    %173 = arith.subf %169, %172 : vector<1x10xf32>
    %174 = math.exp %173 : vector<1x10xf32>
    %cst_129 = arith.constant dense<0.000000e+00> : vector<1xf32>
    %175 = vector.multi_reduction <add>, %174, %cst_129 [1] : vector<1x10xf32> to vector<1xf32>
    %176 = vector.shape_cast %175 : vector<1xf32> to vector<1x1xf32>
    %177 = math.log %176 : vector<1x1xf32>
    %178 = arith.addf %171, %177 : vector<1x1xf32>
    %179 = vector.broadcast %178 : vector<1x1xf32> to vector<1x10xf32>
    %180 = arith.subf %169, %179 : vector<1x10xf32>
    %c0_130 = arith.constant 0 : index
    %c0_131 = arith.constant 0 : index
    %c0_132 = arith.constant 0 : index
    %181 = vector.load %arg16[%c0_130, %c0_131, %c0_132] : memref<1x1x10xf32, #tpu.memory_space<vmem>>, vector<1x1x10xf32>
    %182 = vector.shape_cast %181 : vector<1x1x10xf32> to vector<1x10xf32>
    %183 = vector.shape_cast %180 : vector<1x10xf32> to vector<1x1x10xf32>
    tpu.vector_store %arg16[%c0_130, %c0_131, %c0_132], %183 {strides = array<i32>} : memref<1x1x10xf32, #tpu.memory_space<vmem>>, vector<1x1x10xf32>,
    return
  }
  func.func @transform_0(%arg0: i32) -> (i32, i32, i32, i32) {
    %c0_i32 = arith.constant 0 : i32
    %c0_i32_0 = arith.constant 0 : i32
    %c0_i32_1 = arith.constant 0 : i32
    %c0_i32_2 = arith.constant 0 : i32
    return %arg0, %c0_i32, %c0_i32_0, %c0_i32_1 : i32, i32, i32, i32
  }
  func.func @transform_1(%arg0: i32) -> (i32, i32, i32) {
    %c0_i32 = arith.constant 0 : i32
    %c0_i32_0 = arith.constant 0 : i32
    %c0_i32_1 = arith.constant 0 : i32
    %c0_i32_2 = arith.constant 0 : i32
    return %c0_i32, %c0_i32_0, %c0_i32_1 : i32, i32, i32
  }
  func.func @transform_2(%arg0: i32) -> (i32, i32) {
    %c0_i32 = arith.constant 0 : i32
    %c0_i32_0 = arith.constant 0 : i32
    %c0_i32_1 = arith.constant 0 : i32
    return %c0_i32, %c0_i32_0 : i32, i32
  }
  func.func @transform_3(%arg0: i32) -> (i32, i32, i32) {
    %c0_i32 = arith.constant 0 : i32
    %c0_i32_0 = arith.constant 0 : i32
    %c0_i32_1 = arith.constant 0 : i32
    %c0_i32_2 = arith.constant 0 : i32
    return %c0_i32, %c0_i32_0, %c0_i32_1 : i32, i32, i32
  }
  func.func @transform_4(%arg0: i32) -> (i32, i32) {
    %c0_i32 = arith.constant 0 : i32
    %c0_i32_0 = arith.constant 0 : i32
    %c0_i32_1 = arith.constant 0 : i32
    return %c0_i32, %c0_i32_0 : i32, i32
  }
  func.func @transform_5(%arg0: i32) -> (i32, i32, i32) {
    %c0_i32 = arith.constant 0 : i32
    %c0_i32_0 = arith.constant 0 : i32
    %c0_i32_1 = arith.constant 0 : i32
    %c0_i32_2 = arith.constant 0 : i32
    return %c0_i32, %c0_i32_0, %c0_i32_1 : i32, i32, i32
  }
  func.func @transform_6(%arg0: i32) -> (i32, i32) {
    %c0_i32 = arith.constant 0 : i32
    %c0_i32_0 = arith.constant 0 : i32
    %c0_i32_1 = arith.constant 0 : i32
    return %c0_i32, %c0_i32_0 : i32, i32
  }
  func.func @transform_7(%arg0: i32) -> (i32, i32, i32) {
    %c0_i32 = arith.constant 0 : i32
    %c0_i32_0 = arith.constant 0 : i32
    %c0_i32_1 = arith.constant 0 : i32
    %c0_i32_2 = arith.constant 0 : i32
    return %c0_i32, %c0_i32_0, %c0_i32_1 : i32, i32, i32
  }
  func.func @transform_8(%arg0: i32) -> (i32, i32) {
    %c0_i32 = arith.constant 0 : i32
    %c0_i32_0 = arith.constant 0 : i32
    %c0_i32_1 = arith.constant 0 : i32
    return %c0_i32, %c0_i32_0 : i32, i32
  }
  func.func @transform_9(%arg0: i32) -> (i32, i32, i32) {
    %c0_i32 = arith.constant 0 : i32
    %c0_i32_0 = arith.constant 0 : i32
    %c0_i32_1 = arith.constant 0 : i32
    %c0_i32_2 = arith.constant 0 : i32
    return %c0_i32, %c0_i32_0, %c0_i32_1 : i32, i32, i32
  }
  func.func @transform_10(%arg0: i32) -> (i32, i32) {
    %c0_i32 = arith.constant 0 : i32
    %c0_i32_0 = arith.constant 0 : i32
    %c0_i32_1 = arith.constant 0 : i32
    return %c0_i32, %c0_i32_0 : i32, i32
  }
  func.func @transform_11(%arg0: i32) -> (i32, i32, i32) {
    %c0_i32 = arith.constant 0 : i32
    %c0_i32_0 = arith.constant 0 : i32
    %c0_i32_1 = arith.constant 0 : i32
    %c0_i32_2 = arith.constant 0 : i32
    return %c0_i32, %c0_i32_0, %c0_i32_1 : i32, i32, i32
  }
  func.func @transform_12(%arg0: i32) -> (i32, i32) {
    %c0_i32 = arith.constant 0 : i32
    %c0_i32_0 = arith.constant 0 : i32
    %c0_i32_1 = arith.constant 0 : i32
    return %c0_i32, %c0_i32_0 : i32, i32
  }
  func.func @transform_13(%arg0: i32) -> (i32, i32) {
    %c0_i32 = arith.constant 0 : i32
    %c0_i32_0 = arith.constant 0 : i32
    %c0_i32_1 = arith.constant 0 : i32
    return %c0_i32, %c0_i32_0 : i32, i32
  }
  func.func @transform_14(%arg0: i32) -> (i32, i32) {
    %c0_i32 = arith.constant 0 : i32
    %c0_i32_0 = arith.constant 0 : i32
    %c0_i32_1 = arith.constant 0 : i32
    return %c0_i32, %c0_i32_0 : i32, i32
  }
  func.func @transform_15(%arg0: i32) -> (i32, i32, i32) {
    %c0_i32 = arith.constant 0 : i32
    %c0_i32_0 = arith.constant 0 : i32
    %c0_i32_1 = arith.constant 0 : i32
    return %arg0, %c0_i32, %c0_i32_0 : i32, i32, i32
  }
}

</mosaic_0001>

<llo_original>
// kernel: net_forward.1
$region0: #{net_forward.1}
  #allocation0 [shape = 'u32[]', space=smem, size = 0x4, offset = 0x4, fixed_abs, tag = 'smem constant byte address 0x4 - core index']
  #allocation1 [shape = 'u32[144,128]{1,0:T(1,128)}', space=vmem, size = 0x12000, scoped, tag = 'internal scratch']
  #allocation2 [shape = 'f32[26,26,32]{2,1,0:T(8,128)}', space=vmem, size = 0x68000, scoped, tag = 'scratch operand']
  #allocation3 [shape = 'f32[24,24,32]{2,1,0:T(8,128)}', space=vmem, size = 0x48000, scoped, tag = 'scratch operand']
  #allocation4 [shape = 'f32[12,12,32]{2,1,0:T(8,128)}', space=vmem, size = 0x18000, scoped, tag = 'scratch operand']
  #allocation5 [shape = 'f32[10,10,64]{2,1,0:T(8,128)}', space=vmem, size = 0x14000, scoped, tag = 'scratch operand']
  #allocation6 [shape = 'f32[8,8,64]{2,1,0:T(8,128)}', space=vmem, size = 0x8000, scoped, tag = 'scratch operand']
  #allocation7 [shape = 'f32[4,4,64]{2,1,0:T(4,128)}', space=vmem, size = 0x2000, scoped, tag = 'scratch operand']
  %s0 = inlined_call_operand.vmem [shape: f32[2,28,28,1], index: 0, kind: input, shape index: {}]
  %s1 = inlined_call_operand.vmem [shape: f32[9,1,32], index: 1, kind: input, shape index: {}]
  %s2 = inlined_call_operand.vmem [shape: f32[1,32], index: 2, kind: input, shape index: {}]
  %s3 = inlined_call_operand.vmem [shape: bf16[9,32,32], index: 3, kind: input, shape index: {}]
  %s4 = inlined_call_operand.vmem [shape: f32[1,32], index: 4, kind: input, shape index: {}]
  %s5 = inlined_call_operand.vmem [shape: bf16[9,32,64], index: 5, kind: input, shape index: {}]
  %s6 = inlined_call_operand.vmem [shape: f32[1,64], index: 6, kind: input, shape index: {}]
  %s7 = inlined_call_operand.vmem [shape: bf16[9,64,64], index: 7, kind: input, shape index: {}]
  %s8 = inlined_call_operand.vmem [shape: f32[1,64], index: 8, kind: input, shape index: {}]
  %s9 = inlined_call_operand.vmem [shape: bf16[9,64,128], index: 9, kind: input, shape index: {}]
  %s10 = inlined_call_operand.vmem [shape: f32[1,128], index: 10, kind: input, shape index: {}]
  %s11 = inlined_call_operand.vmem [shape: bf16[4,128,64], index: 11, kind: input, shape index: {}]
  %s12 = inlined_call_operand.vmem [shape: f32[1,64], index: 12, kind: input, shape index: {}]
  %s13 = inlined_call_operand.vmem [shape: bf16[64,10], index: 13, kind: input, shape index: {}]
  %s14 = inlined_call_operand.vmem [shape: f32[1,10], index: 14, kind: input, shape index: {}]
  %s15 = inlined_call_operand.hbm [shape: f32[2,1,10], index: 15, kind: output, shape index: {}]
  %s16 = sld [smem:[#allocation0]]
  $region135: #{net_forward.1} parent=0
    _
  %s18 = ssub.s32 1, %s16
  %s19 = scalar_select 0, %s18, %s16
  $region1: #{net_forward.1} parent=0
    #allocation8 [shape = 'u8[1024]{0}', space=vmem, size = 0x400, scoped, tag = 'output window, operand 0']
    #allocation9 [shape = 's32[2]{0}', space=sflag, size = 0x8, scoped, tag = 'scoped memory for net_forward.1']
    %20 = vsyncpa [#allocation9], 0
    %s21 = scalar_lea.sflag [#allocation9], 1
    %22 = vsyncpa %s21, 0
    loop: start=0, step=1, limit=4
    $region2: #{net_forward.1} parent=1 // loop_pre_header
      _
    $region3: #{net_forward.1} parent=1 // loop_header
      %s24 = sphi 0, %s28
      %p25 = scmp.ge.s32.totalorder %s24, 4
      %s34 = sphi 0, %s36
      %s37 = sphi 0, %s34
      %s38 = sphi 0, %s37
      %s54 = sphi 0, %s38
      %s58 = sphi 0, %s58
      %s60 = sphi 0, %s58
      %s61 = sphi 0, %s60
      %s75 = sphi 0, %s61
      %s79 = sphi 0, %s79
      %s81 = sphi 0, %s79
      %s82 = sphi 0, %s81
      %s96 = sphi 0, %s82
      %s100 = sphi 0, %s100
      %s102 = sphi 0, %s100
      %s103 = sphi 0, %s102
      %s117 = sphi 0, %s103
      %s121 = sphi 0, %s121
      %s123 = sphi 0, %s121
      %s124 = sphi 0, %s123
      %s138 = sphi 0, %s124
      %s142 = sphi 0, %s142
      %s144 = sphi 0, %s142
      %s145 = sphi 0, %s144
      %s159 = sphi 0, %s145
      %s163 = sphi 0, %s163
      %s165 = sphi 0, %s163
      %s166 = sphi 0, %s165
      %s180 = sphi 0, %s166
      %s184 = sphi 0, %s184
      %s186 = sphi 0, %s184
      %s187 = sphi 0, %s186
      %s201 = sphi 0, %s187
      %s205 = sphi 0, %s205
      %s207 = sphi 0, %s205
      %s208 = sphi 0, %s207
      %s222 = sphi 0, %s208
      %s226 = sphi 0, %s226
      %s228 = sphi 0, %s226
      %s229 = sphi 0, %s228
      %s243 = sphi 0, %s229
      %s247 = sphi 0, %s247
      %s249 = sphi 0, %s247
      %s250 = sphi 0, %s249
      %s264 = sphi 0, %s250
      %s268 = sphi 0, %s268
      %s270 = sphi 0, %s268
      %s271 = sphi 0, %s270
      %s285 = sphi 0, %s271
      %s289 = sphi 0, %s289
      %s291 = sphi 0, %s289
      %s292 = sphi 0, %s291
      %s306 = sphi 0, %s292
      %s310 = sphi 0, %s310
      %s312 = sphi 0, %s310
      %s313 = sphi 0, %s312
      %s327 = sphi 0, %s313
      %s331 = sphi 0, %s331
      %s333 = sphi 0, %s331
      %s334 = sphi 0, %s333
      %s348 = sphi 0, %s334
      %s354 = sphi 0, %s356
      %s357 = sphi 0, %s354
      %s358 = sphi 0, %s357
      %s374 = sphi 0, %s358
    $region4: #{net_forward.1} parent=1 // loop_header_branch
      %27 = sbr.rel (%p25) target = $region8
    $region5: #{net_forward.1} parent=1 // loop_body
      %s29 = ssub.s32 %s24, 1
      %s30 = ssub.s32 %s24, 2
      %s31 = sadd.s32 %s24, 1
      %s32 = ssub.s32 %s24, %s31
      %p33 = scmp.eq.s32.totalorder %s32, 0
      %s35 = sadd.s32 %s34, 1
      %s36 = scalar_select %p33, %s34, %s35
      %p39 = pneg %p33
      %p40 = scmp.eq.s32.totalorder %s24, 1
      %p41 = por %p39, %p40
      %p42 = scmp.ne.s32.totalorder %s34, %s37
      %p43 = scmp.eq.s32.totalorder %s24, 0
      %p44 = por %p42, %p43
      %p45 = scmp.ne.s32.totalorder %s34, %s37
      %p46 = scmp.eq.s32.totalorder %s29, 1
      %p47 = por %p45, %p46
      %p48 = scmp.ne.s32.totalorder %s37, %s38
      %p49 = scmp.eq.s32.totalorder %s29, 0
      %p50 = por %p48, %p49
      %p51 = scmp.ne.s32.totalorder %s37, %s38
      %p52 = scmp.eq.s32.totalorder %s30, 1
      %p53 = por %p51, %p52
      %p55 = scmp.ne.s32.totalorder %s38, %s54
      %p56 = scmp.eq.s32.totalorder %s30, 0
      %p57 = por %p55, %p56
      %s59 = sadd.s32 %s58, 1
      %p62 = scmp.eq.s32.totalorder %s24, 1
      %p63 = scmp.ne.s32.totalorder %s58, %s60
      %p64 = scmp.eq.s32.totalorder %s24, 0
      %p65 = por %p63, %p64
      %p66 = scmp.ne.s32.totalorder %s58, %s60
      %p67 = scmp.eq.s32.totalorder %s29, 1
      %p68 = por %p66, %p67
      %p69 = scmp.ne.s32.totalorder %s60, %s61
      %p70 = scmp.eq.s32.totalorder %s29, 0
      %p71 = por %p69, %p70
      %p72 = scmp.ne.s32.totalorder %s60, %s61
      %p73 = scmp.eq.s32.totalorder %s30, 1
      %p74 = por %p72, %p73
      %p76 = scmp.ne.s32.totalorder %s61, %s75
      %p77 = scmp.eq.s32.totalorder %s30, 0
      %p78 = por %p76, %p77
      %s80 = sadd.s32 %s79, 1
      %p83 = scmp.eq.s32.totalorder %s24, 1
      %p84 = scmp.ne.s32.totalorder %s79, %s81
      %p85 = scmp.eq.s32.totalorder %s24, 0
      %p86 = por %p84, %p85
      %p87 = scmp.ne.s32.totalorder %s79, %s81
      %p88 = scmp.eq.s32.totalorder %s29, 1
      %p89 = por %p87, %p88
      %p90 = scmp.ne.s32.totalorder %s81, %s82
      %p91 = scmp.eq.s32.totalorder %s29, 0
      %p92 = por %p90, %p91
      %p93 = scmp.ne.s32.totalorder %s81, %s82
      %p94 = scmp.eq.s32.totalorder %s30, 1
      %p95 = por %p93, %p94
      %p97 = scmp.ne.s32.totalorder %s82, %s96
      %p98 = scmp.eq.s32.totalorder %s30, 0
      %p99 = por %p97, %p98
      %s101 = sadd.s32 %s100, 1
      %p104 = scmp.eq.s32.totalorder %s24, 1
      %p105 = scmp.ne.s32.totalorder %s100, %s102
      %p106 = scmp.eq.s32.totalorder %s24, 0
      %p107 = por %p105, %p106
      %p108 = scmp.ne.s32.totalorder %s100, %s102
      %p109 = scmp.eq.s32.totalorder %s29, 1
      %p110 = por %p108, %p109
      %p111 = scmp.ne.s32.totalorder %s102, %s103
      %p112 = scmp.eq.s32.totalorder %s29, 0
      %p113 = por %p111, %p112
      %p114 = scmp.ne.s32.totalorder %s102, %s103
      %p115 = scmp.eq.s32.totalorder %s30, 1
      %p116 = por %p114, %p115
      %p118 = scmp.ne.s32.totalorder %s103, %s117
      %p119 = scmp.eq.s32.totalorder %s30, 0
      %p120 = por %p118, %p119
      %s122 = sadd.s32 %s121, 1
      %p125 = scmp.eq.s32.totalorder %s24, 1
      %p126 = scmp.ne.s32.totalorder %s121, %s123
      %p127 = scmp.eq.s32.totalorder %s24, 0
      %p128 = por %p126, %p127
      %p129 = scmp.ne.s32.totalorder %s121, %s123
      %p130 = scmp.eq.s32.totalorder %s29, 1
      %p131 = por %p129, %p130
      %p132 = scmp.ne.s32.totalorder %s123, %s124
      %p133 = scmp.eq.s32.totalorder %s29, 0
      %p134 = por %p132, %p133
      %p135 = scmp.ne.s32.totalorder %s123, %s124
      %p136 = scmp.eq.s32.totalorder %s30, 1
      %p137 = por %p135, %p136
      %p139 = scmp.ne.s32.totalorder %s124, %s138
      %p140 = scmp.eq.s32.totalorder %s30, 0
      %p141 = por %p139, %p140
      %s143 = sadd.s32 %s142, 1
      %p146 = scmp.eq.s32.totalorder %s24, 1
      %p147 = scmp.ne.s32.totalorder %s142, %s144
      %p148 = scmp.eq.s32.totalorder %s24, 0
      %p149 = por %p147, %p148
      %p150 = scmp.ne.s32.totalorder %s142, %s144
      %p151 = scmp.eq.s32.totalorder %s29, 1
      %p152 = por %p150, %p151
      %p153 = scmp.ne.s32.totalorder %s144, %s145
      %p154 = scmp.eq.s32.totalorder %s29, 0
      %p155 = por %p153, %p154
      %p156 = scmp.ne.s32.totalorder %s144, %s145
      %p157 = scmp.eq.s32.totalorder %s30, 1
      %p158 = por %p156, %p157
      %p160 = scmp.ne.s32.totalorder %s145, %s159
      %p161 = scmp.eq.s32.totalorder %s30, 0
      %p162 = por %p160, %p161
      %s164 = sadd.s32 %s163, 1
      %p167 = scmp.eq.s32.totalorder %s24, 1
      %p168 = scmp.ne.s32.totalorder %s163, %s165
      %p169 = scmp.eq.s32.totalorder %s24, 0
      %p170 = por %p168, %p169
      %p171 = scmp.ne.s32.totalorder %s163, %s165
      %p172 = scmp.eq.s32.totalorder %s29, 1
      %p173 = por %p171, %p172
      %p174 = scmp.ne.s32.totalorder %s165, %s166
      %p175 = scmp.eq.s32.totalorder %s29, 0
      %p176 = por %p174, %p175
      %p177 = scmp.ne.s32.totalorder %s165, %s166
      %p178 = scmp.eq.s32.totalorder %s30, 1
      %p179 = por %p177, %p178
      %p181 = scmp.ne.s32.totalorder %s166, %s180
      %p182 = scmp.eq.s32.totalorder %s30, 0
      %p183 = por %p181, %p182
      %s185 = sadd.s32 %s184, 1
      %p188 = scmp.eq.s32.totalorder %s24, 1
      %p189 = scmp.ne.s32.totalorder %s184, %s186
      %p190 = scmp.eq.s32.totalorder %s24, 0
      %p191 = por %p189, %p190
      %p192 = scmp.ne.s32.totalorder %s184, %s186
      %p193 = scmp.eq.s32.totalorder %s29, 1
      %p194 = por %p192, %p193
      %p195 = scmp.ne.s32.totalorder %s186, %s187
      %p196 = scmp.eq.s32.totalorder %s29, 0
      %p197 = por %p195, %p196
      %p198 = scmp.ne.s32.totalorder %s186, %s187
      %p199 = scmp.eq.s32.totalorder %s30, 1
      %p200 = por %p198, %p199
      %p202 = scmp.ne.s32.totalorder %s187, %s201
      %p203 = scmp.eq.s32.totalorder %s30, 0
      %p204 = por %p202, %p203
      %s206 = sadd.s32 %s205, 1
      %p209 = scmp.eq.s32.totalorder %s24, 1
      %p210 = scmp.ne.s32.totalorder %s205, %s207
      %p211 = scmp.eq.s32.totalorder %s24, 0
      %p212 = por %p210, %p211
      %p213 = scmp.ne.s32.totalorder %s205, %s207
      %p214 = scmp.eq.s32.totalorder %s29, 1
      %p215 = por %p213, %p214
      %p216 = scmp.ne.s32.totalorder %s207, %s208
      %p217 = scmp.eq.s32.totalorder %s29, 0
      %p218 = por %p216, %p217
      %p219 = scmp.ne.s32.totalorder %s207, %s208
      %p220 = scmp.eq.s32.totalorder %s30, 1
      %p221 = por %p219, %p220
      %p223 = scmp.ne.s32.totalorder %s208, %s222
      %p224 = scmp.eq.s32.totalorder %s30, 0
      %p225 = por %p223, %p224
      %s227 = sadd.s32 %s226, 1
      %p230 = scmp.eq.s32.totalorder %s24, 1
      %p231 = scmp.ne.s32.totalorder %s226, %s228
      %p232 = scmp.eq.s32.totalorder %s24, 0
      %p233 = por %p231, %p232
      %p234 = scmp.ne.s32.totalorder %s226, %s228
      %p235 = scmp.eq.s32.totalorder %s29, 1
      %p236 = por %p234, %p235
      %p237 = scmp.ne.s32.totalorder %s228, %s229
      %p238 = scmp.eq.s32.totalorder %s29, 0
      %p239 = por %p237, %p238
      %p240 = scmp.ne.s32.totalorder %s228, %s229
      %p241 = scmp.eq.s32.totalorder %s30, 1
      %p242 = por %p240, %p241
      %p244 = scmp.ne.s32.totalorder %s229, %s243
      %p245 = scmp.eq.s32.totalorder %s30, 0
      %p246 = por %p244, %p245
      %s248 = sadd.s32 %s247, 1
      %p251 = scmp.eq.s32.totalorder %s24, 1
      %p252 = scmp.ne.s32.totalorder %s247, %s249
      %p253 = scmp.eq.s32.totalorder %s24, 0
      %p254 = por %p252, %p253
      %p255 = scmp.ne.s32.totalorder %s247, %s249
      %p256 = scmp.eq.s32.totalorder %s29, 1
      %p257 = por %p255, %p256
      %p258 = scmp.ne.s32.totalorder %s249, %s250
      %p259 = scmp.eq.s32.totalorder %s29, 0
      %p260 = por %p258, %p259
      %p261 = scmp.ne.s32.totalorder %s249, %s250
      %p262 = scmp.eq.s32.totalorder %s30, 1
      %p263 = por %p261, %p262
      %p265 = scmp.ne.s32.totalorder %s250, %s264
      %p266 = scmp.eq.s32.totalorder %s30, 0
      %p267 = por %p265, %p266
      %s269 = sadd.s32 %s268, 1
      %p272 = scmp.eq.s32.totalorder %s24, 1
      %p273 = scmp.ne.s32.totalorder %s268, %s270
      %p274 = scmp.eq.s32.totalorder %s24, 0
      %p275 = por %p273, %p274
      %p276 = scmp.ne.s32.totalorder %s268, %s270
      %p277 = scmp.eq.s32.totalorder %s29, 1
      %p278 = por %p276, %p277
      %p279 = scmp.ne.s32.totalorder %s270, %s271
      %p280 = scmp.eq.s32.totalorder %s29, 0
      %p281 = por %p279, %p280
      %p282 = scmp.ne.s32.totalorder %s270, %s271
      %p283 = scmp.eq.s32.totalorder %s30, 1
      %p284 = por %p282, %p283
      %p286 = scmp.ne.s32.totalorder %s271, %s285
      %p287 = scmp.eq.s32.totalorder %s30, 0
      %p288 = por %p286, %p287
      %s290 = sadd.s32 %s289, 1
      %p293 = scmp.eq.s32.totalorder %s24, 1
      %p294 = scmp.ne.s32.totalorder %s289, %s291
      %p295 = scmp.eq.s32.totalorder %s24, 0
      %p296 = por %p294, %p295
      %p297 = scmp.ne.s32.totalorder %s289, %s291
      %p298 = scmp.eq.s32.totalorder %s29, 1
      %p299 = por %p297, %p298
      %p300 = scmp.ne.s32.totalorder %s291, %s292
      %p301 = scmp.eq.s32.totalorder %s29, 0
      %p302 = por %p300, %p301
      %p303 = scmp.ne.s32.totalorder %s291, %s292
      %p304 = scmp.eq.s32.totalorder %s30, 1
      %p305 = por %p303, %p304
      %p307 = scmp.ne.s32.totalorder %s292, %s306
      %p308 = scmp.eq.s32.totalorder %s30, 0
      %p309 = por %p307, %p308
      %s311 = sadd.s32 %s310, 1
      %p314 = scmp.eq.s32.totalorder %s24, 1
      %p315 = scmp.ne.s32.totalorder %s310, %s312
      %p316 = scmp.eq.s32.totalorder %s24, 0
      %p317 = por %p315, %p316
      %p318 = scmp.ne.s32.totalorder %s310, %s312
      %p319 = scmp.eq.s32.totalorder %s29, 1
      %p320 = por %p318, %p319
      %p321 = scmp.ne.s32.totalorder %s312, %s313
      %p322 = scmp.eq.s32.totalorder %s29, 0
      %p323 = por %p321, %p322
      %p324 = scmp.ne.s32.totalorder %s312, %s313
      %p325 = scmp.eq.s32.totalorder %s30, 1
      %p326 = por %p324, %p325
      %p328 = scmp.ne.s32.totalorder %s313, %s327
      %p329 = scmp.eq.s32.totalorder %s30, 0
      %p330 = por %p328, %p329
      %s332 = sadd.s32 %s331, 1
      %p335 = scmp.eq.s32.totalorder %s24, 1
      %p336 = scmp.ne.s32.totalorder %s331, %s333
      %p337 = scmp.eq.s32.totalorder %s24, 0
      %p338 = por %p336, %p337
      %p339 = scmp.ne.s32.totalorder %s331, %s333
      %p340 = scmp.eq.s32.totalorder %s29, 1
      %p341 = por %p339, %p340
      %p342 = scmp.ne.s32.totalorder %s333, %s334
      %p343 = scmp.eq.s32.totalorder %s29, 0
      %p344 = por %p342, %p343
      %p345 = scmp.ne.s32.totalorder %s333, %s334
      %p346 = scmp.eq.s32.totalorder %s30, 1
      %p347 = por %p345, %p346
      %p349 = scmp.ne.s32.totalorder %s334, %s348
      %p350 = scmp.eq.s32.totalorder %s30, 0
      %p351 = por %p349, %p350
      %s352 = ssub.s32 %s24, %s31
      %p353 = scmp.eq.s32.totalorder %s352, 0
      %s355 = sadd.s32 %s354, 1
      %s356 = scalar_select %p353, %s354, %s355
      %p359 = pneg %p353
      %p360 = scmp.eq.s32.totalorder %s24, 1
      %p361 = por %p359, %p360
      %p362 = scmp.ne.s32.totalorder %s354, %s357
      %p363 = scmp.eq.s32.totalorder %s24, 0
      %p364 = por %p362, %p363
      %p365 = scmp.ne.s32.totalorder %s354, %s357
      %p366 = scmp.eq.s32.totalorder %s29, 1
      %p367 = por %p365, %p366
      %p368 = scmp.ne.s32.totalorder %s357, %s358
      %p369 = scmp.eq.s32.totalorder %s29, 0
      %p370 = por %p368, %p369
      %p371 = scmp.ne.s32.totalorder %s357, %s358
      %p372 = scmp.eq.s32.totalorder %s30, 1
      %p373 = por %p371, %p372
      %p375 = scmp.ne.s32.totalorder %s358, %s374
      %p376 = scmp.eq.s32.totalorder %s30, 0
      %p377 = por %p375, %p376
      %p378 = scmp.le.s32.totalorder 1, %s24
      %p379 = scmp.lt.s32.totalorder %s24, 3
      %p380 = pnand %p378, %p379
      %p381 = pneg %p380
      // Predicated region
      $region9: #{net_forward.1} parent=5 // pred_check
        _
      $region10: #{net_forward.1} parent=5 // pred_check_branch
        %383 = sbr.rel (%p380) target = $region12
      $region11: #{net_forward.1} parent=5 // pred_region
        %s384 = ssub.s32 %s24, 1
        // Predicated region
        $region13: #{net_forward.1} parent=11 // pred_check
          %p385 = pneg %p71
        $region14: #{net_forward.1} parent=11 // pred_check_branch
          %387 = sbr.rel (%p385) target = $region16
        $region15: #{net_forward.1} parent=11 // pred_region
          _
        $region16: #{net_forward.1} parent=11 // pred_fallthru
          _
        // Predicated region
        $region17: #{net_forward.1} parent=11 // pred_check
          %p388 = pneg %p92
        $region18: #{net_forward.1} parent=11 // pred_check_branch
          %390 = sbr.rel (%p388) target = $region20
        $region19: #{net_forward.1} parent=11 // pred_region
          _
        $region20: #{net_forward.1} parent=11 // pred_fallthru
          _
        // Predicated region
        $region21: #{net_forward.1} parent=11 // pred_check
          %p391 = pneg %p113
        $region22: #{net_forward.1} parent=11 // pred_check_branch
          %393 = sbr.rel (%p391) target = $region24
        $region23: #{net_forward.1} parent=11 // pred_region
          _
        $region24: #{net_forward.1} parent=11 // pred_fallthru
          _
        // Predicated region
        $region25: #{net_forward.1} parent=11 // pred_check
          %p394 = pneg %p134
        $region26: #{net_forward.1} parent=11 // pred_check_branch
          %396 = sbr.rel (%p394) target = $region28
        $region27: #{net_forward.1} parent=11 // pred_region
          _
        $region28: #{net_forward.1} parent=11 // pred_fallthru
          _
        // Predicated region
        $region29: #{net_forward.1} parent=11 // pred_check
          %p397 = pneg %p155
        $region30: #{net_forward.1} parent=11 // pred_check_branch
          %399 = sbr.rel (%p397) target = $region32
        $region31: #{net_forward.1} parent=11 // pred_region
          _
        $region32: #{net_forward.1} parent=11 // pred_fallthru
          _
        // Predicated region
        $region33: #{net_forward.1} parent=11 // pred_check
          %p400 = pneg %p176
        $region34: #{net_forward.1} parent=11 // pred_check_branch
          %402 = sbr.rel (%p400) target = $region36
        $region35: #{net_forward.1} parent=11 // pred_region
          _
        $region36: #{net_forward.1} parent=11 // pred_fallthru
          _
        // Predicated region
        $region37: #{net_forward.1} parent=11 // pred_check
          %p403 = pneg %p197
        $region38: #{net_forward.1} parent=11 // pred_check_branch
          %405 = sbr.rel (%p403) target = $region40
        $region39: #{net_forward.1} parent=11 // pred_region
          _
        $region40: #{net_forward.1} parent=11 // pred_fallthru
          _
        // Predicated region
        $region41: #{net_forward.1} parent=11 // pred_check
          %p406 = pneg %p218
        $region42: #{net_forward.1} parent=11 // pred_check_branch
          %408 = sbr.rel (%p406) target = $region44
        $region43: #{net_forward.1} parent=11 // pred_region
          _
        $region44: #{net_forward.1} parent=11 // pred_fallthru
          _
        // Predicated region
        $region45: #{net_forward.1} parent=11 // pred_check
          %p409 = pneg %p239
        $region46: #{net_forward.1} parent=11 // pred_check_branch
          %411 = sbr.rel (%p409) target = $region48
        $region47: #{net_forward.1} parent=11 // pred_region
          _
        $region48: #{net_forward.1} parent=11 // pred_fallthru
          _
        // Predicated region
        $region49: #{net_forward.1} parent=11 // pred_check
          %p412 = pneg %p260
        $region50: #{net_forward.1} parent=11 // pred_check_branch
          %414 = sbr.rel (%p412) target = $region52
        $region51: #{net_forward.1} parent=11 // pred_region
          _
        $region52: #{net_forward.1} parent=11 // pred_fallthru
          _
        // Predicated region
        $region53: #{net_forward.1} parent=11 // pred_check
          %p415 = pneg %p281
        $region54: #{net_forward.1} parent=11 // pred_check_branch
          %417 = sbr.rel (%p415) target = $region56
        $region55: #{net_forward.1} parent=11 // pred_region
          _
        $region56: #{net_forward.1} parent=11 // pred_fallthru
          _
        // Predicated region
        $region57: #{net_forward.1} parent=11 // pred_check
          %p418 = pneg %p302
        $region58: #{net_forward.1} parent=11 // pred_check_branch
          %420 = sbr.rel (%p418) target = $region60
        $region59: #{net_forward.1} parent=11 // pred_region
          _
        $region60: #{net_forward.1} parent=11 // pred_fallthru
          _
        // Predicated region
        $region61: #{net_forward.1} parent=11 // pred_check
          %p421 = pneg %p323
        $region62: #{net_forward.1} parent=11 // pred_check_branch
          %423 = sbr.rel (%p421) target = $region64
        $region63: #{net_forward.1} parent=11 // pred_region
          _
        $region64: #{net_forward.1} parent=11 // pred_fallthru
          _
        // Predicated region
        $region65: #{net_forward.1} parent=11 // pred_check
          %p424 = pneg %p344
        $region66: #{net_forward.1} parent=11 // pred_check_branch
          %426 = sbr.rel (%p424) target = $region68
        $region67: #{net_forward.1} parent=11 // pred_region
          _
        $region68: #{net_forward.1} parent=11 // pred_fallthru
          _
      $region12: #{net_forward.1} parent=5 // pred_fallthru
        _
      %p427 = scmp.lt.s32.totalorder %s24, 2
      // Predicated region
      $region69: #{net_forward.1} parent=5 // pred_check
        %p428 = pneg %p427
      $region70: #{net_forward.1} parent=5 // pred_check_branch
        %430 = sbr.rel (%p428) target = $region72
      $region71: #{net_forward.1} parent=5 // pred_region
        // Predicated region
        $region73: #{net_forward.1} parent=71 // pred_check
          %p431 = pneg %p44
        $region74: #{net_forward.1} parent=71 // pred_check_branch
          %433 = sbr.rel (%p431) target = $region76
        $region75: #{net_forward.1} parent=71 // pred_region
          %p434 = scmp.lt.s32.totalorder %s24, 1
          %s435 = scalar_select %p434, %s24, 1
          %s436 = smul.addr %s435, 112
          %s437 = smul.addr %s436, 8
          %s438 = scalar_lea.vmem %s0, %s437
        $region76: #{net_forward.1} parent=71 // pred_fallthru
          _
      $region72: #{net_forward.1} parent=5 // pred_fallthru
        _
      %p439 = scmp.le.s32.totalorder 1, %s24
      %p440 = scmp.lt.s32.totalorder %s24, 3
      %p441 = pnand %p439, %p440
      %p442 = pneg %p441
      // Predicated region
      $region77: #{net_forward.1} parent=5 // pred_check
        _
      $region78: #{net_forward.1} parent=5 // pred_check_branch
        %444 = sbr.rel (%p441) target = $region80
      $region79: #{net_forward.1} parent=5 // pred_region
        %s445 = ssub.s32 %s24, 1
        %p446 = scmp.lt.s32.totalorder %s29, 1
        %s447 = scalar_select %p446, %s29, 1
        %s448 = smul.addr %s447, 112
        %s449 = smul.addr %s448, 8
        %s450 = scalar_lea.vmem %s0, %s449
        %p451 = pneg %p50
        %p452 = pneg %p47
        %p453 = pneg %p71
        %p454 = pneg %p68
        %p455 = pneg %p92
        %p456 = pneg %p89
        %p457 = pneg %p113
        %p458 = pneg %p110
        %p459 = pneg %p134
        %p460 = pneg %p131
        %p461 = pneg %p155
        %p462 = pneg %p152
        %p463 = pneg %p176
        %p464 = pneg %p173
        %p465 = pneg %p197
        %p466 = pneg %p194
        %p467 = pneg %p218
        %p468 = pneg %p215
        %p469 = pneg %p239
        %p470 = pneg %p236
        %p471 = pneg %p260
        %p472 = pneg %p257
        %p473 = pneg %p281
        %p474 = pneg %p278
        %p475 = pneg %p302
        %p476 = pneg %p299
        %p477 = pneg %p323
        %p478 = pneg %p320
        %p479 = pneg %p344
        %p480 = pneg %p341
        %p481 = pneg %p370
        %p482 = pneg %p367
        %s483 = sand.u32 %s357, 1
        %s484 = scalar_lea.sflag [#allocation9], %s483
        %s485 = sand.u32 %s357, 1
        %s486 = scalar_lea.vmem [#allocation8], %s485
        %p487 = scmp.lt.s32.totalorder %s29, 1
        %s488 = scalar_select %p487, %s29, 1
        %s489 = smul.addr %s488, 112
        %s490 = smul.addr %s489, 8
        %s491 = scalar_lea.vmem %s0, %s490
        loop: start=0, step=1, limit=26
        $region81: #{net_forward.1} parent=79 // loop_pre_header
          _
        $region82: #{net_forward.1} parent=79 // loop_header
          %s494 = sphi 0, %s498
          %p495 = scmp.ge.s32.totalorder %s494, 26
        $region83: #{net_forward.1} parent=79 // loop_header_branch
          %497 = sbr.rel (%p495) target = $region87
        $region84: #{net_forward.1} parent=79 // loop_body
          %s499 = smul.u32 %s494, 32
          %s500 = scalar_lea.vmem %s491, %s499
          %v501 = vld [vmem:[%s500] sm:$0xff]
          %v502 = vld [vmem:[%s500 + $0x8] sm:$0xff]
          %v503 = vld [vmem:[%s500 + $0x10] sm:$0xff]
          %v504 = vld [vmem:[%s500 + $0x18] sm:$0xf]
          %v505 = vld [vmem:[%s1] sm:$0x1]
          %507 = vset.pattern.permute.xlu0 0
          %508 = vperm.xlu0 %507, %v501
          %v509 = vpop.permute.xlu0 %508
          %512 = vset.pattern.permute.xlu0 0
          %513 = vperm.xlu0 %512, %v502
          %v514 = vpop.permute.xlu0 %513
          %517 = vset.pattern.permute.xlu0 0
          %518 = vperm.xlu0 %517, %v503
          %v519 = vpop.permute.xlu0 %518
          %522 = vset.pattern.permute.xlu0 0
          %523 = vperm.xlu0 %522, %v504
          %v524 = vpop.permute.xlu0 %523
          %v527 = vlaneseq
          %v528 = vshrl.u32 %v527, 7
          %v529 = vsub.s32 0, %v528
          %v530 = vrot.slane %v505, %v529
          %v532 = vmul.f32 %v509, %v530
          %v533 = vmul.f32 %v514, %v530
          %v534 = vmul.f32 %v519, %v530
          %v535 = vmul.f32 %v524, %v530
          %v536 = vadd.f32 %v532, 0.0
          %v537 = vadd.f32 %v533, 0.0
          %v538 = vadd.f32 %v534, 0.0
          %v539 = vadd.f32 %v535, 0.0
          %s540 = scalar_lea.vmem %s1, 1
          %v541 = vld [vmem:[%s540] sm:$0x1]
          %v543 = vlaneseq
          %v544 = vshrl.u32 %v543, 7
          %v545 = vsub.s32 0, %v544
          %v546 = vrot.slane %v541, %v545
          %v548 = vmul.f32 %v509, %v546
          %v549 = vmul.f32 %v514, %v546
          %v550 = vmul.f32 %v519, %v546
          %v551 = vmul.f32 %v524, %v546
          %vm556 = vcmask 1046528
          %v557 = vrot.slane %v548, 1
          %v558 = vrot.slane %v549, 1
          %v559 = vsel %vm556, %v557, %v558
          %v560 = vrot.slane %v550, 1
          %v561 = vsel %vm556, %v558, %v560
          %v562 = vrot.slane %v551, 1
          %v563 = vsel %vm556, %v560, %v562
          %v568 = vadd.f32 %v536, %v559
          %v569 = vadd.f32 %v537, %v561
          %v570 = vadd.f32 %v538, %v563
          %v571 = vadd.f32 %v539, %v562
          %s572 = scalar_lea.vmem %s1, 2
          %v573 = vld [vmem:[%s572] sm:$0x1]
          %v575 = vlaneseq
          %v576 = vshrl.u32 %v575, 7
          %v577 = vsub.s32 0, %v576
          %v578 = vrot.slane %v573, %v577
          %v580 = vmul.f32 %v509, %v578
          %v581 = vmul.f32 %v514, %v578
          %v582 = vmul.f32 %v519, %v578
          %v583 = vmul.f32 %v524, %v578
          %vm588 = vcmask 1045504
          %v589 = vrot.slane %v580, 2
          %v590 = vrot.slane %v581, 2
          %v591 = vsel %vm588, %v589, %v590
          %v592 = vrot.slane %v582, 2
          %v593 = vsel %vm588, %v590, %v592
          %v594 = vrot.slane %v583, 2
          %v595 = vsel %vm588, %v592, %v594
          %v600 = vadd.f32 %v568, %v591
          %v601 = vadd.f32 %v569, %v593
          %v602 = vadd.f32 %v570, %v595
          %v603 = vadd.f32 %v571, %v594
          %s604 = sadd.s32 %s494, 1
          %s605 = smul.u32 %s604, 32
          %s606 = scalar_lea.vmem %s491, %s605
          %v607 = vld [vmem:[%s606] sm:$0xff]
          %v608 = vld [vmem:[%s606 + $0x8] sm:$0xff]
          %v609 = vld [vmem:[%s606 + $0x10] sm:$0xff]
          %v610 = vld [vmem:[%s606 + $0x18] sm:$0xf]
          %s611 = scalar_lea.vmem %s1, 3
          %v612 = vld [vmem:[%s611] sm:$0x1]
          %614 = vset.pattern.permute.xlu0 0
          %615 = vperm.xlu0 %614, %v607
          %v616 = vpop.permute.xlu0 %615
          %619 = vset.pattern.permute.xlu0 0
          %620 = vperm.xlu0 %619, %v608
          %v621 = vpop.permute.xlu0 %620
          %624 = vset.pattern.permute.xlu0 0
          %625 = vperm.xlu0 %624, %v609
          %v626 = vpop.permute.xlu0 %625
          %629 = vset.pattern.permute.xlu0 0
          %630 = vperm.xlu0 %629, %v610
          %v631 = vpop.permute.xlu0 %630
          %v634 = vlaneseq
          %v635 = vshrl.u32 %v634, 7
          %v636 = vsub.s32 0, %v635
          %v637 = vrot.slane %v612, %v636
          %v639 = vmul.f32 %v616, %v637
          %v640 = vmul.f32 %v621, %v637
          %v641 = vmul.f32 %v626, %v637
          %v642 = vmul.f32 %v631, %v637
          %v643 = vadd.f32 %v600, %v639
          %v644 = vadd.f32 %v601, %v640
          %v645 = vadd.f32 %v602, %v641
          %v646 = vadd.f32 %v603, %v642
          %s647 = scalar_lea.vmem %s1, 4
          %v648 = vld [vmem:[%s647] sm:$0x1]
          %v650 = vlaneseq
          %v651 = vshrl.u32 %v650, 7
          %v652 = vsub.s32 0, %v651
          %v653 = vrot.slane %v648, %v652
          %v655 = vmul.f32 %v616, %v653
          %v656 = vmul.f32 %v621, %v653
          %v657 = vmul.f32 %v626, %v653
          %v658 = vmul.f32 %v631, %v653
          %v663 = vrot.slane %v655, 1
          %v664 = vrot.slane %v656, 1
          %v665 = vsel %vm556, %v663, %v664
          %v666 = vrot.slane %v657, 1
          %v667 = vsel %vm556, %v664, %v666
          %v668 = vrot.slane %v658, 1
          %v669 = vsel %vm556, %v666, %v668
          %v674 = vadd.f32 %v643, %v665
          %v675 = vadd.f32 %v644, %v667
          %v676 = vadd.f32 %v645, %v669
          %v677 = vadd.f32 %v646, %v668
          %s678 = scalar_lea.vmem %s1, 5
          %v679 = vld [vmem:[%s678] sm:$0x1]
          %v681 = vlaneseq
          %v682 = vshrl.u32 %v681, 7
          %v683 = vsub.s32 0, %v682
          %v684 = vrot.slane %v679, %v683
          %v686 = vmul.f32 %v616, %v684
          %v687 = vmul.f32 %v621, %v684
          %v688 = vmul.f32 %v626, %v684
          %v689 = vmul.f32 %v631, %v684
          %v694 = vrot.slane %v686, 2
          %v695 = vrot.slane %v687, 2
          %v696 = vsel %vm588, %v694, %v695
          %v697 = vrot.slane %v688, 2
          %v698 = vsel %vm588, %v695, %v697
          %v699 = vrot.slane %v689, 2
          %v700 = vsel %vm588, %v697, %v699
          %v705 = vadd.f32 %v674, %v696
          %v706 = vadd.f32 %v675, %v698
          %v707 = vadd.f32 %v676, %v700
          %v708 = vadd.f32 %v677, %v699
          %s709 = sadd.s32 %s494, 2
          %s710 = smul.u32 %s709, 32
          %s711 = scalar_lea.vmem %s491, %s710
          %v712 = vld [vmem:[%s711] sm:$0xff]
          %v713 = vld [vmem:[%s711 + $0x8] sm:$0xff]
          %v714 = vld [vmem:[%s711 + $0x10] sm:$0xff]
          %v715 = vld [vmem:[%s711 + $0x18] sm:$0xf]
          %s716 = scalar_lea.vmem %s1, 6
          %v717 = vld [vmem:[%s716] sm:$0x1]
          %719 = vset.pattern.permute.xlu0 0
          %720 = vperm.xlu0 %719, %v712
          %v721 = vpop.permute.xlu0 %720
          %724 = vset.pattern.permute.xlu0 0
          %725 = vperm.xlu0 %724, %v713
          %v726 = vpop.permute.xlu0 %725
          %729 = vset.pattern.permute.xlu0 0
          %730 = vperm.xlu0 %729, %v714
          %v731 = vpop.permute.xlu0 %730
          %734 = vset.pattern.permute.xlu0 0
          %735 = vperm.xlu0 %734, %v715
          %v736 = vpop.permute.xlu0 %735
          %v739 = vlaneseq
          %v740 = vshrl.u32 %v739, 7
          %v741 = vsub.s32 0, %v740
          %v742 = vrot.slane %v717, %v741
          %v744 = vmul.f32 %v721, %v742
          %v745 = vmul.f32 %v726, %v742
          %v746 = vmul.f32 %v731, %v742
          %v747 = vmul.f32 %v736, %v742
          %v748 = vadd.f32 %v705, %v744
          %v749 = vadd.f32 %v706, %v745
          %v750 = vadd.f32 %v707, %v746
          %v751 = vadd.f32 %v708, %v747
          %s752 = scalar_lea.vmem %s1, 7
          %v753 = vld [vmem:[%s752] sm:$0x1]
          %v755 = vlaneseq
          %v756 = vshrl.u32 %v755, 7
          %v757 = vsub.s32 0, %v756
          %v758 = vrot.slane %v753, %v757
          %v760 = vmul.f32 %v721, %v758
          %v761 = vmul.f32 %v726, %v758
          %v762 = vmul.f32 %v731, %v758
          %v763 = vmul.f32 %v736, %v758
          %v768 = vrot.slane %v760, 1
          %v769 = vrot.slane %v761, 1
          %v770 = vsel %vm556, %v768, %v769
          %v771 = vrot.slane %v762, 1
          %v772 = vsel %vm556, %v769, %v771
          %v773 = vrot.slane %v763, 1
          %v774 = vsel %vm556, %v771, %v773
          %v779 = vadd.f32 %v748, %v770
          %v780 = vadd.f32 %v749, %v772
          %v781 = vadd.f32 %v750, %v774
          %v782 = vadd.f32 %v751, %v773
          %s783 = scalar_lea.vmem %s1, 8
          %v784 = vld [vmem:[%s783] sm:$0x1]
          %v786 = vlaneseq
          %v787 = vshrl.u32 %v786, 7
          %v788 = vsub.s32 0, %v787
          %v789 = vrot.slane %v784, %v788
          %v791 = vmul.f32 %v721, %v789
          %v792 = vmul.f32 %v726, %v789
          %v793 = vmul.f32 %v731, %v789
          %v794 = vmul.f32 %v736, %v789
          %v799 = vrot.slane %v791, 2
          %v800 = vrot.slane %v792, 2
          %v801 = vsel %vm588, %v799, %v800
          %v802 = vrot.slane %v793, 2
          %v803 = vsel %vm588, %v800, %v802
          %v804 = vrot.slane %v794, 2
          %v805 = vsel %vm588, %v802, %v804
          %v810 = vadd.f32 %v779, %v801
          %v811 = vadd.f32 %v780, %v803
          %v812 = vadd.f32 %v781, %v805
          %v813 = vadd.f32 %v782, %v804
          %v814 = vld [vmem:[%s2] sm:$0x1]
          %v816 = vlaneseq
          %v817 = vshrl.u32 %v816, 7
          %v818 = vsub.s32 0, %v817
          %v819 = vrot.slane %v814, %v818
          %v821 = vadd.f32 %v810, %v819
          %v822 = vadd.f32 %v811, %v819
          %v823 = vadd.f32 %v812, %v819
          %v824 = vadd.f32 %v813, %v819
          %v825 = vmax.f32 %v821, 0.0
          %v826 = vmax.f32 %v822, 0.0
          %v827 = vmax.f32 %v823, 0.0
          %v828 = vmax.f32 %v824, 0.0
          %s829 = scalar_lea.vmem [#allocation2], %s499
          %vm830 = vcmask 261120
          %831 = vst.msk [vmem:[%s829] sm:$0xff] %vm830, %v825
          %832 = vst.msk [vmem:[%s829 + $0x8] sm:$0xff] %vm830, %v826
          %833 = vst.msk [vmem:[%s829 + $0x10] sm:$0xff] %vm830, %v827
          %vm834 = vcmask 254976
          %835 = vst.msk [vmem:[%s829 + $0x18] sm:$0x3] %vm834, %v828
        $region85: #{net_forward.1} parent=79 // loop_footer
          %s498 = sadd.s32 1, %s494
        $region86: #{net_forward.1} parent=79 // loop_footer_branch
          %493 = sbr.rel target = $region82
        $region87: #{net_forward.1} parent=79 // loop_exit
          _
        loop: start=0, step=1, limit=24
        $region88: #{net_forward.1} parent=79 // loop_pre_header
          _
        $region89: #{net_forward.1} parent=79 // loop_header
          %s837 = sphi 0, %s841
          %p838 = scmp.ge.s32.totalorder %s837, 24
        $region90: #{net_forward.1} parent=79 // loop_header_branch
          %840 = sbr.rel (%p838) target = $region94
        $region91: #{net_forward.1} parent=79 // loop_body
          %s842 = smul.u32 %s837, 32
          %s843 = scalar_lea.vmem [#allocation2], %s842
          %v844 = vld [vmem:[%s843] sm:$0xff]
          %v845 = vld [vmem:[%s843 + $0x8] sm:$0xff]
          %v846 = vld [vmem:[%s843 + $0x10] sm:$0xff]
          %v847 = vld [vmem:[%s843 + $0x18] sm:$0x3]
          %v848 = vpack.c.bf16 %v845, %v844
          %v849 = vpack.c.bf16 %v846, %v846
          %v850 = vld [vmem:[%s3] sm:$0xf]
          %v851 = vld [vmem:[%s3 + $0x4] sm:$0xf]
          %v852 = vld [vmem:[%s3 + $0x8] sm:$0xf]
          %v853 = vld [vmem:[%s3 + $0xc] sm:$0xf]
          %v854 = vpack.c.bf16 %v847, %v846
          %s855 = scalar_lea.vmem %s3, 16
          %v856 = vld [vmem:[%s855] sm:$0xf]
          %v857 = vld [vmem:[%s855 + $0x4] sm:$0xf]
          %v858 = vld [vmem:[%s855 + $0x8] sm:$0xf]
          %v859 = vld [vmem:[%s855 + $0xc] sm:$0xf]
          %vm860 = vsmask.f32 7424
          %v862 = vshrl.u32 %v848, 16
          %v864 = vshll.u32 %v848, 16
          %v866 = vrot.slane %v864, 1
          %v867 = vor.u32 %v862, %v866
          %v869 = vshll.u32 %v854, 16
          %v871 = vrot.slane %v869, 1
          %v872 = vsel %vm860, %v867, %v871
          %v873 = vshrl.u32 %v854, 16
          %v875 = vor.u32 %v873, %v871
          %v880 = vunpack.c.l.b16 %v856
          %v881 = vunpack.c.l.b16 %v857
          %v882 = vunpack.c.l.b16 %v858
          %v883 = vunpack.c.l.b16 %v859
          %v884 = vpack.c.b16 %v881, %v880
          %v885 = vpack.c.b16 %v883, %v882
          %vm888 = vcmask 261120
          %v890 = vsel %vm888, %v872, 0
          %v893 = vsel %vm888, %v875, 0
          %895 = vmatprep.subr.bf16.mxu0 0
          %896 = vmatpush1.bf16.msra.mxu0 0
          %897 = vmatprep.subr.bf16.mxu0 0
          %898 = vmatpush1.bf16.msra.mxu0 0
          %899 = vmatprep.subr.bf16.mxu0 0
          %900 = vmatpush1.bf16.msra.mxu0 0
          %901 = vmatprep.subr.bf16.mxu0 0
          %902 = vmatpush1.bf16.msra.mxu0 0
          %903 = vmatprep.subr.bf16.mxu0 0
          %904 = vmatpush1.bf16.msra.mxu0 0
          %905 = vmatprep.subr.bf16.mxu0 0
          %906 = vmatpush1.bf16.msra.mxu0 0
          %907 = vmatprep.subr.bf16.mxu0 0
          %908 = vmatpush1.bf16.msra.mxu0 %v885
          %909 = vmatprep.subr.bf16.mxu0 0
          %910 = vmatpush1.bf16.msra.mxu0 %v884
          %911 = vmatprep.subr.bf16.mxu0 0
          %912 = vmatpush2.bf16.msra.mxu0 0
          %913 = vmatprep.subr.bf16.mxu0 0
          %914 = vmatpush2.bf16.msra.mxu0 0
          %915 = vmatprep.subr.bf16.mxu0 0
          %916 = vmatpush2.bf16.msra.mxu0 0
          %917 = vmatprep.subr.bf16.mxu0 0
          %918 = vmatpush2.bf16.msra.mxu0 0
          %919 = vmatprep.subr.bf16.mxu0 0
          %920 = vmatpush2.bf16.msra.mxu0 0
          %921 = vmatprep.subr.bf16.mxu0 0
          %922 = vmatpush2.bf16.msra.mxu0 0
          %923 = vmatprep.subr.bf16.mxu0 0
          %924 = vmatpush2.bf16.msra.mxu0 0
          %925 = vmatprep.subr.bf16.mxu0 0
          %926 = vmatpush2.bf16.msra.mxu0 0
          %927 = vmatprep.mubr.bf16.mxu0 0
          %928 = vmatmul.mubr.bf16.gmra.mxu0 %v890
          %v929 = vpop.f32.mrf.mxu0
          %v930 = vadd.f32 0.0, %v929
          %v931 = vpop.f32.mrf.mxu0
          %v932 = vpop.f32.mrf.mxu0
          %v933 = vadd.f32 0.0, %v932
          %v934 = vpop.f32.mrf.mxu0
          %935 = vmatprep.mubr.bf16.mxu0 0
          %936 = vmatmul.mubr.bf16.gmra.mxu0 %v893
          %v937 = vpop.f32.mrf.mxu0
          %v938 = vadd.f32 0.0, %v937
          %v939 = vpop.f32.mrf.mxu0
          %v940 = vpop.f32.mrf.mxu0
          %v941 = vpop.f32.mrf.mxu0
          %942 = vdwg.mxu0
          %v947 = vunpack.c.l.b16 %v850
          %v948 = vunpack.c.l.b16 %v851
          %v949 = vunpack.c.l.b16 %v852
          %v950 = vunpack.c.l.b16 %v853
          %v951 = vpack.c.b16 %v948, %v947
          %v952 = vpack.c.b16 %v950, %v949
          %v955 = vsel %vm888, %v848, 0
          %v958 = vsel %vm888, %v849, 0
          %960 = vmatprep.subr.bf16.mxu0 0
          %961 = vmatpush1.bf16.msra.mxu0 0
          %962 = vmatprep.subr.bf16.mxu0 0
          %963 = vmatpush1.bf16.msra.mxu0 0
          %964 = vmatprep.subr.bf16.mxu0 0
          %965 = vmatpush1.bf16.msra.mxu0 0
          %966 = vmatprep.subr.bf16.mxu0 0
          %967 = vmatpush1.bf16.msra.mxu0 0
          %968 = vmatprep.subr.bf16.mxu0 0
          %969 = vmatpush1.bf16.msra.mxu0 0
          %970 = vmatprep.subr.bf16.mxu0 0
          %971 = vmatpush1.bf16.msra.mxu0 0
          %972 = vmatprep.subr.bf16.mxu0 0
          %973 = vmatpush1.bf16.msra.mxu0 %v952
          %974 = vmatprep.subr.bf16.mxu0 0
          %975 = vmatpush1.bf16.msra.mxu0 %v951
          %976 = vmatprep.subr.bf16.mxu0 0
          %977 = vmatpush2.bf16.msra.mxu0 0
          %978 = vmatprep.subr.bf16.mxu0 0
          %979 = vmatpush2.bf16.msra.mxu0 0
          %980 = vmatprep.subr.bf16.mxu0 0
          %981 = vmatpush2.bf16.msra.mxu0 0
          %982 = vmatprep.subr.bf16.mxu0 0
          %983 = vmatpush2.bf16.msra.mxu0 0
          %984 = vmatprep.subr.bf16.mxu0 0
          %985 = vmatpush2.bf16.msra.mxu0 0
          %986 = vmatprep.subr.bf16.mxu0 0
          %987 = vmatpush2.bf16.msra.mxu0 0
          %988 = vmatprep.subr.bf16.mxu0 0
          %989 = vmatpush2.bf16.msra.mxu0 0
          %990 = vmatprep.subr.bf16.mxu0 0
          %991 = vmatpush2.bf16.msra.mxu0 0
          %992 = vmatprep.mubr.bf16.mxu0 0
          %993 = vmatmul.mubr.bf16.gmra.mxu0 %v955
          %v994 = vpop.f32.mrf.mxu0
          %v995 = vadd.f32 %v930, %v994
          %v996 = vpop.f32.mrf.mxu0
          %v997 = vpop.f32.mrf.mxu0
          %v998 = vadd.f32 %v933, %v997
          %v999 = vpop.f32.mrf.mxu0
          %1000 = vmatprep.mubr.bf16.mxu0 0
          %1001 = vmatmul.mubr.bf16.gmra.mxu0 %v958
          %v1002 = vpop.f32.mrf.mxu0
          %v1003 = vadd.f32 %v938, %v1002
          %v1004 = vpop.f32.mrf.mxu0
          %v1005 = vpop.f32.mrf.mxu0
          %v1006 = vpop.f32.mrf.mxu0
          %1007 = vdwg.mxu0
          %s1008 = scalar_lea.vmem %s3, 32
          %v1009 = vld [vmem:[%s1008] sm:$0xf]
          %v1010 = vld [vmem:[%s1008 + $0x4] sm:$0xf]
          %v1011 = vld [vmem:[%s1008 + $0x8] sm:$0xf]
          %v1012 = vld [vmem:[%s1008 + $0xc] sm:$0xf]
          %vm1015 = vcmask 1046528
          %v1016 = vrot.slane %v848, 1
          %v1017 = vrot.slane %v854, 1
          %v1018 = vsel %vm1015, %v1016, %v1017
          %v1023 = vunpack.c.l.b16 %v1009
          %v1024 = vunpack.c.l.b16 %v1010
          %v1025 = vunpack.c.l.b16 %v1011
          %v1026 = vunpack.c.l.b16 %v1012
          %v1027 = vpack.c.b16 %v1024, %v1023
          %v1028 = vpack.c.b16 %v1026, %v1025
          %v1032 = vsel %vm888, %v1018, 0
          %v1035 = vsel %vm888, %v1017, 0
          %1037 = vmatprep.subr.bf16.mxu0 0
          %1038 = vmatpush1.bf16.msra.mxu0 0
          %1039 = vmatprep.subr.bf16.mxu0 0
          %1040 = vmatpush1.bf16.msra.mxu0 0
          %1041 = vmatprep.subr.bf16.mxu0 0
          %1042 = vmatpush1.bf16.msra.mxu0 0
          %1043 = vmatprep.subr.bf16.mxu0 0
          %1044 = vmatpush1.bf16.msra.mxu0 0
          %1045 = vmatprep.subr.bf16.mxu0 0
          %1046 = vmatpush1.bf16.msra.mxu0 0
          %1047 = vmatprep.subr.bf16.mxu0 0
          %1048 = vmatpush1.bf16.msra.mxu0 0
          %1049 = vmatprep.subr.bf16.mxu0 0
          %1050 = vmatpush1.bf16.msra.mxu0 %v1028
          %1051 = vmatprep.subr.bf16.mxu0 0
          %1052 = vmatpush1.bf16.msra.mxu0 %v1027
          %1053 = vmatprep.subr.bf16.mxu0 0
          %1054 = vmatpush2.bf16.msra.mxu0 0
          %1055 = vmatprep.subr.bf16.mxu0 0
          %1056 = vmatpush2.bf16.msra.mxu0 0
          %1057 = vmatprep.subr.bf16.mxu0 0
          %1058 = vmatpush2.bf16.msra.mxu0 0
          %1059 = vmatprep.subr.bf16.mxu0 0
          %1060 = vmatpush2.bf16.msra.mxu0 0
          %1061 = vmatprep.subr.bf16.mxu0 0
          %1062 = vmatpush2.bf16.msra.mxu0 0
          %1063 = vmatprep.subr.bf16.mxu0 0
          %1064 = vmatpush2.bf16.msra.mxu0 0
          %1065 = vmatprep.subr.bf16.mxu0 0
          %1066 = vmatpush2.bf16.msra.mxu0 0
          %1067 = vmatprep.subr.bf16.mxu0 0
          %1068 = vmatpush2.bf16.msra.mxu0 0
          %1069 = vmatprep.mubr.bf16.mxu0 0
          %1070 = vmatmul.mubr.bf16.gmra.mxu0 %v1032
          %v1071 = vpop.f32.mrf.mxu0
          %v1072 = vadd.f32 0.0, %v1071
          %v1073 = vpop.f32.mrf.mxu0
          %v1074 = vpop.f32.mrf.mxu0
          %v1075 = vadd.f32 0.0, %v1074
          %v1076 = vpop.f32.mrf.mxu0
          %1077 = vmatprep.mubr.bf16.mxu0 0
          %1078 = vmatmul.mubr.bf16.gmra.mxu0 %v1035
          %v1079 = vpop.f32.mrf.mxu0
          %v1080 = vadd.f32 0.0, %v1079
          %v1081 = vpop.f32.mrf.mxu0
          %v1082 = vpop.f32.mrf.mxu0
          %v1083 = vpop.f32.mrf.mxu0
          %1084 = vdwg.mxu0
          %v1085 = vadd.f32 %v995, %v1072
          %v1086 = vadd.f32 %v998, %v1075
          %v1087 = vadd.f32 %v1003, %v1080
          %s1088 = sadd.s32 %s837, 1
          %s1089 = smul.u32 %s1088, 32
          %s1090 = scalar_lea.vmem [#allocation2], %s1089
          %v1091 = vld [vmem:[%s1090] sm:$0xff]
          %v1092 = vld [vmem:[%s1090 + $0x8] sm:$0xff]
          %v1093 = vld [vmem:[%s1090 + $0x10] sm:$0xff]
          %v1094 = vld [vmem:[%s1090 + $0x18] sm:$0x3]
          %v1095 = vpack.c.bf16 %v1092, %v1091
          %v1096 = vpack.c.bf16 %v1093, %v1093
          %s1097 = scalar_lea.vmem %s3, 48
          %v1098 = vld [vmem:[%s1097] sm:$0xf]
          %v1099 = vld [vmem:[%s1097 + $0x4] sm:$0xf]
          %v1100 = vld [vmem:[%s1097 + $0x8] sm:$0xf]
          %v1101 = vld [vmem:[%s1097 + $0xc] sm:$0xf]
          %v1106 = vunpack.c.l.b16 %v1098
          %v1107 = vunpack.c.l.b16 %v1099
          %v1108 = vunpack.c.l.b16 %v1100
          %v1109 = vunpack.c.l.b16 %v1101
          %v1110 = vpack.c.b16 %v1107, %v1106
          %v1111 = vpack.c.b16 %v1109, %v1108
          %v1115 = vsel %vm888, %v1095, 0
          %v1118 = vsel %vm888, %v1096, 0
          %1120 = vmatprep.subr.bf16.mxu0 0
          %1121 = vmatpush1.bf16.msra.mxu0 0
          %1122 = vmatprep.subr.bf16.mxu0 0
          %1123 = vmatpush1.bf16.msra.mxu0 0
          %1124 = vmatprep.subr.bf16.mxu0 0
          %1125 = vmatpush1.bf16.msra.mxu0 0
          %1126 = vmatprep.subr.bf16.mxu0 0
          %1127 = vmatpush1.bf16.msra.mxu0 0
          %1128 = vmatprep.subr.bf16.mxu0 0
          %1129 = vmatpush1.bf16.msra.mxu0 0
          %1130 = vmatprep.subr.bf16.mxu0 0
          %1131 = vmatpush1.bf16.msra.mxu0 0
          %1132 = vmatprep.subr.bf16.mxu0 0
          %1133 = vmatpush1.bf16.msra.mxu0 %v1111
          %1134 = vmatprep.subr.bf16.mxu0 0
          %1135 = vmatpush1.bf16.msra.mxu0 %v1110
          %1136 = vmatprep.subr.bf16.mxu0 0
          %1137 = vmatpush2.bf16.msra.mxu0 0
          %1138 = vmatprep.subr.bf16.mxu0 0
          %1139 = vmatpush2.bf16.msra.mxu0 0
          %1140 = vmatprep.subr.bf16.mxu0 0
          %1141 = vmatpush2.bf16.msra.mxu0 0
          %1142 = vmatprep.subr.bf16.mxu0 0
          %1143 = vmatpush2.bf16.msra.mxu0 0
          %1144 = vmatprep.subr.bf16.mxu0 0
          %1145 = vmatpush2.bf16.msra.mxu0 0
          %1146 = vmatprep.subr.bf16.mxu0 0
          %1147 = vmatpush2.bf16.msra.mxu0 0
          %1148 = vmatprep.subr.bf16.mxu0 0
          %1149 = vmatpush2.bf16.msra.mxu0 0
          %1150 = vmatprep.subr.bf16.mxu0 0
          %1151 = vmatpush2.bf16.msra.mxu0 0
          %1152 = vmatprep.mubr.bf16.mxu0 0
          %1153 = vmatmul.mubr.bf16.gmra.mxu0 %v1115
          %v1154 = vpop.f32.mrf.mxu0
          %v1155 = vadd.f32 0.0, %v1154
          %v1156 = vpop.f32.mrf.mxu0
          %v1157 = vpop.f32.mrf.mxu0
          %v1158 = vadd.f32 0.0, %v1157
          %v1159 = vpop.f32.mrf.mxu0
          %1160 = vmatprep.mubr.bf16.mxu0 0
          %1161 = vmatmul.mubr.bf16.gmra.mxu0 %v1118
          %v1162 = vpop.f32.mrf.mxu0
          %v1163 = vadd.f32 0.0, %v1162
          %v1164 = vpop.f32.mrf.mxu0
          %v1165 = vpop.f32.mrf.mxu0
          %v1166 = vpop.f32.mrf.mxu0
          %1167 = vdwg.mxu0
          %v1168 = vadd.f32 %v1085, %v1155
          %v1169 = vadd.f32 %v1086, %v1158
          %v1170 = vadd.f32 %v1087, %v1163
          %v1171 = vpack.c.bf16 %v1094, %v1093
          %s1172 = scalar_lea.vmem %s3, 64
          %v1173 = vld [vmem:[%s1172] sm:$0xf]
          %v1174 = vld [vmem:[%s1172 + $0x4] sm:$0xf]
          %v1175 = vld [vmem:[%s1172 + $0x8] sm:$0xf]
          %v1176 = vld [vmem:[%s1172 + $0xc] sm:$0xf]
          %v1177 = vshrl.u32 %v1095, 16
          %v1179 = vshll.u32 %v1095, 16
          %v1181 = vrot.slane %v1179, 1
          %v1182 = vor.u32 %v1177, %v1181
          %v1184 = vshll.u32 %v1171, 16
          %v1186 = vrot.slane %v1184, 1
          %v1187 = vsel %vm860, %v1182, %v1186
          %v1188 = vshrl.u32 %v1171, 16
          %v1190 = vor.u32 %v1188, %v1186
          %v1195 = vunpack.c.l.b16 %v1173
          %v1196 = vunpack.c.l.b16 %v1174
          %v1197 = vunpack.c.l.b16 %v1175
          %v1198 = vunpack.c.l.b16 %v1176
          %v1199 = vpack.c.b16 %v1196, %v1195
          %v1200 = vpack.c.b16 %v1198, %v1197
          %v1204 = vsel %vm888, %v1187, 0
          %v1207 = vsel %vm888, %v1190, 0
          %1209 = vmatprep.subr.bf16.mxu0 0
          %1210 = vmatpush1.bf16.msra.mxu0 0
          %1211 = vmatprep.subr.bf16.mxu0 0
          %1212 = vmatpush1.bf16.msra.mxu0 0
          %1213 = vmatprep.subr.bf16.mxu0 0
          %1214 = vmatpush1.bf16.msra.mxu0 0
          %1215 = vmatprep.subr.bf16.mxu0 0
          %1216 = vmatpush1.bf16.msra.mxu0 0
          %1217 = vmatprep.subr.bf16.mxu0 0
          %1218 = vmatpush1.bf16.msra.mxu0 0
          %1219 = vmatprep.subr.bf16.mxu0 0
          %1220 = vmatpush1.bf16.msra.mxu0 0
          %1221 = vmatprep.subr.bf16.mxu0 0
          %1222 = vmatpush1.bf16.msra.mxu0 %v1200
          %1223 = vmatprep.subr.bf16.mxu0 0
          %1224 = vmatpush1.bf16.msra.mxu0 %v1199
          %1225 = vmatprep.subr.bf16.mxu0 0
          %1226 = vmatpush2.bf16.msra.mxu0 0
          %1227 = vmatprep.subr.bf16.mxu0 0
          %1228 = vmatpush2.bf16.msra.mxu0 0
          %1229 = vmatprep.subr.bf16.mxu0 0
          %1230 = vmatpush2.bf16.msra.mxu0 0
          %1231 = vmatprep.subr.bf16.mxu0 0
          %1232 = vmatpush2.bf16.msra.mxu0 0
          %1233 = vmatprep.subr.bf16.mxu0 0
          %1234 = vmatpush2.bf16.msra.mxu0 0
          %1235 = vmatprep.subr.bf16.mxu0 0
          %1236 = vmatpush2.bf16.msra.mxu0 0
          %1237 = vmatprep.subr.bf16.mxu0 0
          %1238 = vmatpush2.bf16.msra.mxu0 0
          %1239 = vmatprep.subr.bf16.mxu0 0
          %1240 = vmatpush2.bf16.msra.mxu0 0
          %1241 = vmatprep.mubr.bf16.mxu0 0
          %1242 = vmatmul.mubr.bf16.gmra.mxu0 %v1204
          %v1243 = vpop.f32.mrf.mxu0
          %v1244 = vadd.f32 0.0, %v1243
          %v1245 = vpop.f32.mrf.mxu0
          %v1246 = vpop.f32.mrf.mxu0
          %v1247 = vadd.f32 0.0, %v1246
          %v1248 = vpop.f32.mrf.mxu0
          %1249 = vmatprep.mubr.bf16.mxu0 0
          %1250 = vmatmul.mubr.bf16.gmra.mxu0 %v1207
          %v1251 = vpop.f32.mrf.mxu0
          %v1252 = vadd.f32 0.0, %v1251
          %v1253 = vpop.f32.mrf.mxu0
          %v1254 = vpop.f32.mrf.mxu0
          %v1255 = vpop.f32.mrf.mxu0
          %1256 = vdwg.mxu0
          %v1257 = vadd.f32 %v1168, %v1244
          %v1258 = vadd.f32 %v1169, %v1247
          %v1259 = vadd.f32 %v1170, %v1252
          %s1260 = scalar_lea.vmem %s3, 80
          %v1261 = vld [vmem:[%s1260] sm:$0xf]
          %v1262 = vld [vmem:[%s1260 + $0x4] sm:$0xf]
          %v1263 = vld [vmem:[%s1260 + $0x8] sm:$0xf]
          %v1264 = vld [vmem:[%s1260 + $0xc] sm:$0xf]
          %v1267 = vrot.slane %v1095, 1
          %v1268 = vrot.slane %v1171, 1
          %v1269 = vsel %vm1015, %v1267, %v1268
          %v1274 = vunpack.c.l.b16 %v1261
          %v1275 = vunpack.c.l.b16 %v1262
          %v1276 = vunpack.c.l.b16 %v1263
          %v1277 = vunpack.c.l.b16 %v1264
          %v1278 = vpack.c.b16 %v1275, %v1274
          %v1279 = vpack.c.b16 %v1277, %v1276
          %v1283 = vsel %vm888, %v1269, 0
          %v1286 = vsel %vm888, %v1268, 0
          %1288 = vmatprep.subr.bf16.mxu0 0
          %1289 = vmatpush1.bf16.msra.mxu0 0
          %1290 = vmatprep.subr.bf16.mxu0 0
          %1291 = vmatpush1.bf16.msra.mxu0 0
          %1292 = vmatprep.subr.bf16.mxu0 0
          %1293 = vmatpush1.bf16.msra.mxu0 0
          %1294 = vmatprep.subr.bf16.mxu0 0
          %1295 = vmatpush1.bf16.msra.mxu0 0
          %1296 = vmatprep.subr.bf16.mxu0 0
          %1297 = vmatpush1.bf16.msra.mxu0 0
          %1298 = vmatprep.subr.bf16.mxu0 0
          %1299 = vmatpush1.bf16.msra.mxu0 0
          %1300 = vmatprep.subr.bf16.mxu0 0
          %1301 = vmatpush1.bf16.msra.mxu0 %v1279
          %1302 = vmatprep.subr.bf16.mxu0 0
          %1303 = vmatpush1.bf16.msra.mxu0 %v1278
          %1304 = vmatprep.subr.bf16.mxu0 0
          %1305 = vmatpush2.bf16.msra.mxu0 0
          %1306 = vmatprep.subr.bf16.mxu0 0
          %1307 = vmatpush2.bf16.msra.mxu0 0
          %1308 = vmatprep.subr.bf16.mxu0 0
          %1309 = vmatpush2.bf16.msra.mxu0 0
          %1310 = vmatprep.subr.bf16.mxu0 0
          %1311 = vmatpush2.bf16.msra.mxu0 0
          %1312 = vmatprep.subr.bf16.mxu0 0
          %1313 = vmatpush2.bf16.msra.mxu0 0
          %1314 = vmatprep.subr.bf16.mxu0 0
          %1315 = vmatpush2.bf16.msra.mxu0 0
          %1316 = vmatprep.subr.bf16.mxu0 0
          %1317 = vmatpush2.bf16.msra.mxu0 0
          %1318 = vmatprep.subr.bf16.mxu0 0
          %1319 = vmatpush2.bf16.msra.mxu0 0
          %1320 = vmatprep.mubr.bf16.mxu0 0
          %1321 = vmatmul.mubr.bf16.gmra.mxu0 %v1283
          %v1322 = vpop.f32.mrf.mxu0
          %v1323 = vadd.f32 0.0, %v1322
          %v1324 = vpop.f32.mrf.mxu0
          %v1325 = vpop.f32.mrf.mxu0
          %v1326 = vadd.f32 0.0, %v1325
          %v1327 = vpop.f32.mrf.mxu0
          %1328 = vmatprep.mubr.bf16.mxu0 0
          %1329 = vmatmul.mubr.bf16.gmra.mxu0 %v1286
          %v1330 = vpop.f32.mrf.mxu0
          %v1331 = vadd.f32 0.0, %v1330
          %v1332 = vpop.f32.mrf.mxu0
          %v1333 = vpop.f32.mrf.mxu0
          %v1334 = vpop.f32.mrf.mxu0
          %1335 = vdwg.mxu0
          %v1336 = vadd.f32 %v1257, %v1323
          %v1337 = vadd.f32 %v1258, %v1326
          %v1338 = vadd.f32 %v1259, %v1331
          %s1339 = sadd.s32 %s837, 2
          %s1340 = smul.u32 %s1339, 32
          %s1341 = scalar_lea.vmem [#allocation2], %s1340
          %v1342 = vld [vmem:[%s1341] sm:$0xff]
          %v1343 = vld [vmem:[%s1341 + $0x8] sm:$0xff]
          %v1344 = vld [vmem:[%s1341 + $0x10] sm:$0xff]
          %v1345 = vld [vmem:[%s1341 + $0x18] sm:$0x3]
          %v1346 = vpack.c.bf16 %v1343, %v1342
          %v1347 = vpack.c.bf16 %v1344, %v1344
          %s1348 = scalar_lea.vmem %s3, 96
          %v1349 = vld [vmem:[%s1348] sm:$0xf]
          %v1350 = vld [vmem:[%s1348 + $0x4] sm:$0xf]
          %v1351 = vld [vmem:[%s1348 + $0x8] sm:$0xf]
          %v1352 = vld [vmem:[%s1348 + $0xc] sm:$0xf]
          %v1357 = vunpack.c.l.b16 %v1349
          %v1358 = vunpack.c.l.b16 %v1350
          %v1359 = vunpack.c.l.b16 %v1351
          %v1360 = vunpack.c.l.b16 %v1352
          %v1361 = vpack.c.b16 %v1358, %v1357
          %v1362 = vpack.c.b16 %v1360, %v1359
          %v1366 = vsel %vm888, %v1346, 0
          %v1369 = vsel %vm888, %v1347, 0
          %1371 = vmatprep.subr.bf16.mxu0 0
          %1372 = vmatpush1.bf16.msra.mxu0 0
          %1373 = vmatprep.subr.bf16.mxu0 0
          %1374 = vmatpush1.bf16.msra.mxu0 0
          %1375 = vmatprep.subr.bf16.mxu0 0
          %1376 = vmatpush1.bf16.msra.mxu0 0
          %1377 = vmatprep.subr.bf16.mxu0 0
          %1378 = vmatpush1.bf16.msra.mxu0 0
          %1379 = vmatprep.subr.bf16.mxu0 0
          %1380 = vmatpush1.bf16.msra.mxu0 0
          %1381 = vmatprep.subr.bf16.mxu0 0
          %1382 = vmatpush1.bf16.msra.mxu0 0
          %1383 = vmatprep.subr.bf16.mxu0 0
          %1384 = vmatpush1.bf16.msra.mxu0 %v1362
          %1385 = vmatprep.subr.bf16.mxu0 0
          %1386 = vmatpush1.bf16.msra.mxu0 %v1361
          %1387 = vmatprep.subr.bf16.mxu0 0
          %1388 = vmatpush2.bf16.msra.mxu0 0
          %1389 = vmatprep.subr.bf16.mxu0 0
          %1390 = vmatpush2.bf16.msra.mxu0 0
          %1391 = vmatprep.subr.bf16.mxu0 0
          %1392 = vmatpush2.bf16.msra.mxu0 0
          %1393 = vmatprep.subr.bf16.mxu0 0
          %1394 = vmatpush2.bf16.msra.mxu0 0
          %1395 = vmatprep.subr.bf16.mxu0 0
          %1396 = vmatpush2.bf16.msra.mxu0 0
          %1397 = vmatprep.subr.bf16.mxu0 0
          %1398 = vmatpush2.bf16.msra.mxu0 0
          %1399 = vmatprep.subr.bf16.mxu0 0
          %1400 = vmatpush2.bf16.msra.mxu0 0
          %1401 = vmatprep.subr.bf16.mxu0 0
          %1402 = vmatpush2.bf16.msra.mxu0 0
          %1403 = vmatprep.mubr.bf16.mxu0 0
          %1404 = vmatmul.mubr.bf16.gmra.mxu0 %v1366
          %v1405 = vpop.f32.mrf.mxu0
          %v1406 = vadd.f32 0.0, %v1405
          %v1407 = vpop.f32.mrf.mxu0
          %v1408 = vpop.f32.mrf.mxu0
          %v1409 = vadd.f32 0.0, %v1408
          %v1410 = vpop.f32.mrf.mxu0
          %1411 = vmatprep.mubr.bf16.mxu0 0
          %1412 = vmatmul.mubr.bf16.gmra.mxu0 %v1369
          %v1413 = vpop.f32.mrf.mxu0
          %v1414 = vadd.f32 0.0, %v1413
          %v1415 = vpop.f32.mrf.mxu0
          %v1416 = vpop.f32.mrf.mxu0
          %v1417 = vpop.f32.mrf.mxu0
          %1418 = vdwg.mxu0
          %v1419 = vadd.f32 %v1336, %v1406
          %v1420 = vadd.f32 %v1337, %v1409
          %v1421 = vadd.f32 %v1338, %v1414
          %v1422 = vpack.c.bf16 %v1345, %v1344
          %s1423 = scalar_lea.vmem %s3, 112
          %v1424 = vld [vmem:[%s1423] sm:$0xf]
          %v1425 = vld [vmem:[%s1423 + $0x4] sm:$0xf]
          %v1426 = vld [vmem:[%s1423 + $0x8] sm:$0xf]
          %v1427 = vld [vmem:[%s1423 + $0xc] sm:$0xf]
          %v1428 = vshrl.u32 %v1346, 16
          %v1430 = vshll.u32 %v1346, 16
          %v1432 = vrot.slane %v1430, 1
          %v1433 = vor.u32 %v1428, %v1432
          %v1435 = vshll.u32 %v1422, 16
          %v1437 = vrot.slane %v1435, 1
          %v1438 = vsel %vm860, %v1433, %v1437
          %v1439 = vshrl.u32 %v1422, 16
          %v1441 = vor.u32 %v1439, %v1437
          %v1446 = vunpack.c.l.b16 %v1424
          %v1447 = vunpack.c.l.b16 %v1425
          %v1448 = vunpack.c.l.b16 %v1426
          %v1449 = vunpack.c.l.b16 %v1427
          %v1450 = vpack.c.b16 %v1447, %v1446
          %v1451 = vpack.c.b16 %v1449, %v1448
          %v1455 = vsel %vm888, %v1438, 0
          %v1458 = vsel %vm888, %v1441, 0
          %1460 = vmatprep.subr.bf16.mxu0 0
          %1461 = vmatpush1.bf16.msra.mxu0 0
          %1462 = vmatprep.subr.bf16.mxu0 0
          %1463 = vmatpush1.bf16.msra.mxu0 0
          %1464 = vmatprep.subr.bf16.mxu0 0
          %1465 = vmatpush1.bf16.msra.mxu0 0
          %1466 = vmatprep.subr.bf16.mxu0 0
          %1467 = vmatpush1.bf16.msra.mxu0 0
          %1468 = vmatprep.subr.bf16.mxu0 0
          %1469 = vmatpush1.bf16.msra.mxu0 0
          %1470 = vmatprep.subr.bf16.mxu0 0
          %1471 = vmatpush1.bf16.msra.mxu0 0
          %1472 = vmatprep.subr.bf16.mxu0 0
          %1473 = vmatpush1.bf16.msra.mxu0 %v1451
          %1474 = vmatprep.subr.bf16.mxu0 0
          %1475 = vmatpush1.bf16.msra.mxu0 %v1450
          %1476 = vmatprep.subr.bf16.mxu0 0
          %1477 = vmatpush2.bf16.msra.mxu0 0
          %1478 = vmatprep.subr.bf16.mxu0 0
          %1479 = vmatpush2.bf16.msra.mxu0 0
          %1480 = vmatprep.subr.bf16.mxu0 0
          %1481 = vmatpush2.bf16.msra.mxu0 0
          %1482 = vmatprep.subr.bf16.mxu0 0
          %1483 = vmatpush2.bf16.msra.mxu0 0
          %1484 = vmatprep.subr.bf16.mxu0 0
          %1485 = vmatpush2.bf16.msra.mxu0 0
          %1486 = vmatprep.subr.bf16.mxu0 0
          %1487 = vmatpush2.bf16.msra.mxu0 0
          %1488 = vmatprep.subr.bf16.mxu0 0
          %1489 = vmatpush2.bf16.msra.mxu0 0
          %1490 = vmatprep.subr.bf16.mxu0 0
          %1491 = vmatpush2.bf16.msra.mxu0 0
          %1492 = vmatprep.mubr.bf16.mxu0 0
          %1493 = vmatmul.mubr.bf16.gmra.mxu0 %v1455
          %v1494 = vpop.f32.mrf.mxu0
          %v1495 = vadd.f32 0.0, %v1494
          %v1496 = vpop.f32.mrf.mxu0
          %v1497 = vpop.f32.mrf.mxu0
          %v1498 = vadd.f32 0.0, %v1497
          %v1499 = vpop.f32.mrf.mxu0
          %1500 = vmatprep.mubr.bf16.mxu0 0
          %1501 = vmatmul.mubr.bf16.gmra.mxu0 %v1458
          %v1502 = vpop.f32.mrf.mxu0
          %v1503 = vadd.f32 0.0, %v1502
          %v1504 = vpop.f32.mrf.mxu0
          %v1505 = vpop.f32.mrf.mxu0
          %v1506 = vpop.f32.mrf.mxu0
          %1507 = vdwg.mxu0
          %v1508 = vadd.f32 %v1419, %v1495
          %v1509 = vadd.f32 %v1420, %v1498
          %v1510 = vadd.f32 %v1421, %v1503
          %s1511 = scalar_lea.vmem %s3, 128
          %v1512 = vld [vmem:[%s1511] sm:$0xf]
          %v1513 = vld [vmem:[%s1511 + $0x4] sm:$0xf]
          %v1514 = vld [vmem:[%s1511 + $0x8] sm:$0xf]
          %v1515 = vld [vmem:[%s1511 + $0xc] sm:$0xf]
          %v1518 = vrot.slane %v1346, 1
          %v1519 = vrot.slane %v1422, 1
          %v1520 = vsel %vm1015, %v1518, %v1519
          %v1525 = vunpack.c.l.b16 %v1512
          %v1526 = vunpack.c.l.b16 %v1513
          %v1527 = vunpack.c.l.b16 %v1514
          %v1528 = vunpack.c.l.b16 %v1515
          %v1529 = vpack.c.b16 %v1526, %v1525
          %v1530 = vpack.c.b16 %v1528, %v1527
          %v1534 = vsel %vm888, %v1520, 0
          %v1537 = vsel %vm888, %v1519, 0
          %1539 = vmatprep.subr.bf16.mxu0 0
          %1540 = vmatpush1.bf16.msra.mxu0 0
          %1541 = vmatprep.subr.bf16.mxu0 0
          %1542 = vmatpush1.bf16.msra.mxu0 0
          %1543 = vmatprep.subr.bf16.mxu0 0
          %1544 = vmatpush1.bf16.msra.mxu0 0
          %1545 = vmatprep.subr.bf16.mxu0 0
          %1546 = vmatpush1.bf16.msra.mxu0 0
          %1547 = vmatprep.subr.bf16.mxu0 0
          %1548 = vmatpush1.bf16.msra.mxu0 0
          %1549 = vmatprep.subr.bf16.mxu0 0
          %1550 = vmatpush1.bf16.msra.mxu0 0
          %1551 = vmatprep.subr.bf16.mxu0 0
          %1552 = vmatpush1.bf16.msra.mxu0 %v1530
          %1553 = vmatprep.subr.bf16.mxu0 0
          %1554 = vmatpush1.bf16.msra.mxu0 %v1529
          %1555 = vmatprep.subr.bf16.mxu0 0
          %1556 = vmatpush2.bf16.msra.mxu0 0
          %1557 = vmatprep.subr.bf16.mxu0 0
          %1558 = vmatpush2.bf16.msra.mxu0 0
          %1559 = vmatprep.subr.bf16.mxu0 0
          %1560 = vmatpush2.bf16.msra.mxu0 0
          %1561 = vmatprep.subr.bf16.mxu0 0
          %1562 = vmatpush2.bf16.msra.mxu0 0
          %1563 = vmatprep.subr.bf16.mxu0 0
          %1564 = vmatpush2.bf16.msra.mxu0 0
          %1565 = vmatprep.subr.bf16.mxu0 0
          %1566 = vmatpush2.bf16.msra.mxu0 0
          %1567 = vmatprep.subr.bf16.mxu0 0
          %1568 = vmatpush2.bf16.msra.mxu0 0
          %1569 = vmatprep.subr.bf16.mxu0 0
          %1570 = vmatpush2.bf16.msra.mxu0 0
          %1571 = vmatprep.mubr.bf16.mxu0 0
          %1572 = vmatmul.mubr.bf16.gmra.mxu0 %v1534
          %v1573 = vpop.f32.mrf.mxu0
          %v1574 = vadd.f32 0.0, %v1573
          %v1575 = vpop.f32.mrf.mxu0
          %v1576 = vpop.f32.mrf.mxu0
          %v1577 = vadd.f32 0.0, %v1576
          %v1578 = vpop.f32.mrf.mxu0
          %1579 = vmatprep.mubr.bf16.mxu0 0
          %1580 = vmatmul.mubr.bf16.gmra.mxu0 %v1537
          %v1581 = vpop.f32.mrf.mxu0
          %v1582 = vadd.f32 0.0, %v1581
          %v1583 = vpop.f32.mrf.mxu0
          %v1584 = vpop.f32.mrf.mxu0
          %v1585 = vpop.f32.mrf.mxu0
          %1586 = vdwg.mxu0
          %v1587 = vadd.f32 %v1508, %v1574
          %v1588 = vadd.f32 %v1509, %v1577
          %v1589 = vadd.f32 %v1510, %v1582
          %v1590 = vld [vmem:[%s4] sm:$0x1]
          %v1592 = vlaneseq
          %v1593 = vshrl.u32 %v1592, 7
          %v1594 = vsub.s32 0, %v1593
          %v1595 = vrot.slane %v1590, %v1594
          %v1597 = vadd.f32 %v1587, %v1595
          %v1598 = vadd.f32 %v1588, %v1595
          %v1599 = vadd.f32 %v1589, %v1595
          %s1600 = smul.u32 %s837, 24
          %s1601 = scalar_lea.vmem [#allocation3], %s1600
          %1602 = vst.msk [vmem:[%s1601] sm:$0xff] %vm888, %v1597
          %1603 = vst.msk [vmem:[%s1601 + $0x8] sm:$0xff] %vm888, %v1598
          %1604 = vst.msk [vmem:[%s1601 + $0x10] sm:$0xff] %vm888, %v1599
        $region92: #{net_forward.1} parent=79 // loop_footer
          %s841 = sadd.s32 1, %s837
        $region93: #{net_forward.1} parent=79 // loop_footer_branch
          %836 = sbr.rel target = $region89
        $region94: #{net_forward.1} parent=79 // loop_exit
          _
        loop: start=0, step=1, limit=12
        $region95: #{net_forward.1} parent=79 // loop_pre_header
          _
        $region96: #{net_forward.1} parent=79 // loop_header
          %s1606 = sphi 0, %s1610
          %p1607 = scmp.ge.s32.totalorder %s1606, 12
        $region97: #{net_forward.1} parent=79 // loop_header_branch
          %1609 = sbr.rel (%p1607) target = $region101
        $region98: #{net_forward.1} parent=79 // loop_body
          %s1611 = smul.u32 %s1606, 2
          %s1612 = smul.u32 %s1611, 24
          %s1613 = scalar_lea.vmem [#allocation3], %s1612
          %v1614 = vld [vmem:[%s1613] ss:$2 sm:$0xff]
          %s1615 = scalar_lea.vmem %s1613, 16 [#allocation3]
          %v1616 = vld [vmem:[%s1615] ss:$2 sm:$0xf]
          %s1617 = scalar_lea.vmem %s1613, 1 [#allocation3]
          %v1618 = vld [vmem:[%s1617] ss:$2 sm:$0xff]
          %s1619 = scalar_lea.vmem %s1613, 17 [#allocation3]
          %v1620 = vld [vmem:[%s1619] ss:$2 sm:$0xf]
          %s1621 = sadd.s32 %s1611, 1
          %s1622 = smul.u32 %s1621, 24
          %s1623 = scalar_lea.vmem [#allocation3], %s1622
          %v1624 = vld [vmem:[%s1623] ss:$2 sm:$0xff]
          %s1625 = scalar_lea.vmem %s1623, 16 [#allocation3]
          %v1626 = vld [vmem:[%s1625] ss:$2 sm:$0xf]
          %s1627 = scalar_lea.vmem %s1623, 1 [#allocation3]
          %v1628 = vld [vmem:[%s1627] ss:$2 sm:$0xff]
          %s1629 = scalar_lea.vmem %s1623, 17 [#allocation3]
          %v1630 = vld [vmem:[%s1629] ss:$2 sm:$0xf]
          %v1631 = vmax.f32 %v1614, %v1618
          %v1632 = vmax.f32 %v1616, %v1620
          %v1633 = vmax.f32 %v1624, %v1628
          %v1634 = vmax.f32 %v1626, %v1630
          %v1635 = vmax.f32 %v1631, %v1633
          %v1636 = vmax.f32 %v1632, %v1634
          %v1637 = vmax.f32 %v1635, 0.0
          %v1638 = vmax.f32 %v1636, 0.0
          %s1639 = smul.u32 %s1606, 16
          %s1640 = scalar_lea.vmem [#allocation4], %s1639
          %vm1641 = vcmask 261120
          %1642 = vst.msk [vmem:[%s1640] sm:$0xff] %vm1641, %v1637
          %vm1643 = vcmask 257024
          %1644 = vst.msk [vmem:[%s1640 + $0x8] sm:$0xf] %vm1643, %v1638
        $region99: #{net_forward.1} parent=79 // loop_footer
          %s1610 = sadd.s32 1, %s1606
        $region100: #{net_forward.1} parent=79 // loop_footer_branch
          %1605 = sbr.rel target = $region96
        $region101: #{net_forward.1} parent=79 // loop_exit
          _
        loop: start=0, step=1, limit=10
        $region102: #{net_forward.1} parent=79 // loop_pre_header
          _
        $region103: #{net_forward.1} parent=79 // loop_header
          %s1646 = sphi 0, %s1650
          %p1647 = scmp.ge.s32.totalorder %s1646, 10
        $region104: #{net_forward.1} parent=79 // loop_header_branch
          %1649 = sbr.rel (%p1647) target = $region108
        $region105: #{net_forward.1} parent=79 // loop_body
          %s1651 = smul.u32 %s1646, 16
          %s1652 = scalar_lea.vmem [#allocation4], %s1651
          %v1653 = vld [vmem:[%s1652] sm:$0xff]
          %v1654 = vld [vmem:[%s1652 + $0x8] sm:$0xf]
          %v1655 = vpack.c.bf16 %v1654, %v1653
          %v1656 = vld [vmem:[%s5] sm:$0xf]
          %v1657 = vld [vmem:[%s5 + $0x4] sm:$0xf]
          %v1658 = vld [vmem:[%s5 + $0x8] sm:$0xf]
          %v1659 = vld [vmem:[%s5 + $0xc] sm:$0xf]
          %s1660 = scalar_lea.vmem %s5, 16
          %v1661 = vld [vmem:[%s1660] sm:$0xf]
          %v1662 = vld [vmem:[%s1660 + $0x4] sm:$0xf]
          %v1663 = vld [vmem:[%s1660 + $0x8] sm:$0xf]
          %v1664 = vld [vmem:[%s1660 + $0xc] sm:$0xf]
          %v1666 = vshrl.u32 %v1655, 16
          %v1668 = vshll.u32 %v1655, 16
          %v1670 = vrot.slane %v1668, 1
          %v1671 = vor.u32 %v1666, %v1670
          %v1676 = vunpack.c.l.b16 %v1661
          %v1677 = vunpack.c.l.b16 %v1662
          %v1678 = vunpack.c.l.b16 %v1663
          %v1679 = vunpack.c.l.b16 %v1664
          %v1680 = vpack.c.b16 %v1677, %v1676
          %v1681 = vpack.c.b16 %v1679, %v1678
          %vm1684 = vcmask 261120
          %v1686 = vsel %vm1684, %v1671, 0
          %1688 = vmatprep.subr.bf16.mxu0 0
          %1689 = vmatpush1.bf16.msra.mxu0 0
          %1690 = vmatprep.subr.bf16.mxu0 0
          %1691 = vmatpush1.bf16.msra.mxu0 0
          %1692 = vmatprep.subr.bf16.mxu0 0
          %1693 = vmatpush1.bf16.msra.mxu0 0
          %1694 = vmatprep.subr.bf16.mxu0 0
          %1695 = vmatpush1.bf16.msra.mxu0 0
          %1696 = vmatprep.subr.bf16.mxu0 0
          %1697 = vmatpush1.bf16.msra.mxu0 0
          %1698 = vmatprep.subr.bf16.mxu0 0
          %1699 = vmatpush1.bf16.msra.mxu0 0
          %1700 = vmatprep.subr.bf16.mxu0 0
          %1701 = vmatpush1.bf16.msra.mxu0 %v1681
          %1702 = vmatprep.subr.bf16.mxu0 0
          %1703 = vmatpush1.bf16.msra.mxu0 %v1680
          %1704 = vmatprep.subr.bf16.mxu0 0
          %1705 = vmatpush2.bf16.msra.mxu0 0
          %1706 = vmatprep.subr.bf16.mxu0 0
          %1707 = vmatpush2.bf16.msra.mxu0 0
          %1708 = vmatprep.subr.bf16.mxu0 0
          %1709 = vmatpush2.bf16.msra.mxu0 0
          %1710 = vmatprep.subr.bf16.mxu0 0
          %1711 = vmatpush2.bf16.msra.mxu0 0
          %1712 = vmatprep.subr.bf16.mxu0 0
          %1713 = vmatpush2.bf16.msra.mxu0 0
          %1714 = vmatprep.subr.bf16.mxu0 0
          %1715 = vmatpush2.bf16.msra.mxu0 0
          %1716 = vmatprep.subr.bf16.mxu0 0
          %1717 = vmatpush2.bf16.msra.mxu0 0
          %1718 = vmatprep.subr.bf16.mxu0 0
          %1719 = vmatpush2.bf16.msra.mxu0 0
          %1720 = vmatprep.mubr.bf16.mxu0 0
          %1721 = vmatmul.mubr.bf16.gmra.mxu0 %v1686
          %v1722 = vpop.f32.mrf.mxu0
          %v1723 = vadd.f32 0.0, %v1722
          %v1724 = vpop.f32.mrf.mxu0
          %v1725 = vpop.f32.mrf.mxu0
          %v1726 = vadd.f32 0.0, %v1725
          %v1727 = vpop.f32.mrf.mxu0
          %1728 = vdwg.mxu0
          %v1733 = vunpack.c.l.b16 %v1656
          %v1734 = vunpack.c.l.b16 %v1657
          %v1735 = vunpack.c.l.b16 %v1658
          %v1736 = vunpack.c.l.b16 %v1659
          %v1737 = vpack.c.b16 %v1734, %v1733
          %v1738 = vpack.c.b16 %v1736, %v1735
          %v1741 = vsel %vm1684, %v1655, 0
          %1743 = vmatprep.subr.bf16.mxu0 0
          %1744 = vmatpush1.bf16.msra.mxu0 0
          %1745 = vmatprep.subr.bf16.mxu0 0
          %1746 = vmatpush1.bf16.msra.mxu0 0
          %1747 = vmatprep.subr.bf16.mxu0 0
          %1748 = vmatpush1.bf16.msra.mxu0 0
          %1749 = vmatprep.subr.bf16.mxu0 0
          %1750 = vmatpush1.bf16.msra.mxu0 0
          %1751 = vmatprep.subr.bf16.mxu0 0
          %1752 = vmatpush1.bf16.msra.mxu0 0
          %1753 = vmatprep.subr.bf16.mxu0 0
          %1754 = vmatpush1.bf16.msra.mxu0 0
          %1755 = vmatprep.subr.bf16.mxu0 0
          %1756 = vmatpush1.bf16.msra.mxu0 %v1738
          %1757 = vmatprep.subr.bf16.mxu0 0
          %1758 = vmatpush1.bf16.msra.mxu0 %v1737
          %1759 = vmatprep.subr.bf16.mxu0 0
          %1760 = vmatpush2.bf16.msra.mxu0 0
          %1761 = vmatprep.subr.bf16.mxu0 0
          %1762 = vmatpush2.bf16.msra.mxu0 0
          %1763 = vmatprep.subr.bf16.mxu0 0
          %1764 = vmatpush2.bf16.msra.mxu0 0
          %1765 = vmatprep.subr.bf16.mxu0 0
          %1766 = vmatpush2.bf16.msra.mxu0 0
          %1767 = vmatprep.subr.bf16.mxu0 0
          %1768 = vmatpush2.bf16.msra.mxu0 0
          %1769 = vmatprep.subr.bf16.mxu0 0
          %1770 = vmatpush2.bf16.msra.mxu0 0
          %1771 = vmatprep.subr.bf16.mxu0 0
          %1772 = vmatpush2.bf16.msra.mxu0 0
          %1773 = vmatprep.subr.bf16.mxu0 0
          %1774 = vmatpush2.bf16.msra.mxu0 0
          %1775 = vmatprep.mubr.bf16.mxu0 0
          %1776 = vmatmul.mubr.bf16.gmra.mxu0 %v1741
          %v1777 = vpop.f32.mrf.mxu0
          %v1778 = vadd.f32 %v1723, %v1777
          %v1779 = vpop.f32.mrf.mxu0
          %v1780 = vpop.f32.mrf.mxu0
          %v1781 = vadd.f32 %v1726, %v1780
          %v1782 = vpop.f32.mrf.mxu0
          %1783 = vdwg.mxu0
          %s1784 = scalar_lea.vmem %s5, 32
          %v1785 = vld [vmem:[%s1784] sm:$0xf]
          %v1786 = vld [vmem:[%s1784 + $0x4] sm:$0xf]
          %v1787 = vld [vmem:[%s1784 + $0x8] sm:$0xf]
          %v1788 = vld [vmem:[%s1784 + $0xc] sm:$0xf]
          %v1790 = vrot.slane %v1655, 1
          %v1795 = vunpack.c.l.b16 %v1785
          %v1796 = vunpack.c.l.b16 %v1786
          %v1797 = vunpack.c.l.b16 %v1787
          %v1798 = vunpack.c.l.b16 %v1788
          %v1799 = vpack.c.b16 %v1796, %v1795
          %v1800 = vpack.c.b16 %v1798, %v1797
          %v1804 = vsel %vm1684, %v1790, 0
          %1806 = vmatprep.subr.bf16.mxu0 0
          %1807 = vmatpush1.bf16.msra.mxu0 0
          %1808 = vmatprep.subr.bf16.mxu0 0
          %1809 = vmatpush1.bf16.msra.mxu0 0
          %1810 = vmatprep.subr.bf16.mxu0 0
          %1811 = vmatpush1.bf16.msra.mxu0 0
          %1812 = vmatprep.subr.bf16.mxu0 0
          %1813 = vmatpush1.bf16.msra.mxu0 0
          %1814 = vmatprep.subr.bf16.mxu0 0
          %1815 = vmatpush1.bf16.msra.mxu0 0
          %1816 = vmatprep.subr.bf16.mxu0 0
          %1817 = vmatpush1.bf16.msra.mxu0 0
          %1818 = vmatprep.subr.bf16.mxu0 0
          %1819 = vmatpush1.bf16.msra.mxu0 %v1800
          %1820 = vmatprep.subr.bf16.mxu0 0
          %1821 = vmatpush1.bf16.msra.mxu0 %v1799
          %1822 = vmatprep.subr.bf16.mxu0 0
          %1823 = vmatpush2.bf16.msra.mxu0 0
          %1824 = vmatprep.subr.bf16.mxu0 0
          %1825 = vmatpush2.bf16.msra.mxu0 0
          %1826 = vmatprep.subr.bf16.mxu0 0
          %1827 = vmatpush2.bf16.msra.mxu0 0
          %1828 = vmatprep.subr.bf16.mxu0 0
          %1829 = vmatpush2.bf16.msra.mxu0 0
          %1830 = vmatprep.subr.bf16.mxu0 0
          %1831 = vmatpush2.bf16.msra.mxu0 0
          %1832 = vmatprep.subr.bf16.mxu0 0
          %1833 = vmatpush2.bf16.msra.mxu0 0
          %1834 = vmatprep.subr.bf16.mxu0 0
          %1835 = vmatpush2.bf16.msra.mxu0 0
          %1836 = vmatprep.subr.bf16.mxu0 0
          %1837 = vmatpush2.bf16.msra.mxu0 0
          %1838 = vmatprep.mubr.bf16.mxu0 0
          %1839 = vmatmul.mubr.bf16.gmra.mxu0 %v1804
          %v1840 = vpop.f32.mrf.mxu0
          %v1841 = vadd.f32 0.0, %v1840
          %v1842 = vpop.f32.mrf.mxu0
          %v1843 = vpop.f32.mrf.mxu0
          %v1844 = vadd.f32 0.0, %v1843
          %v1845 = vpop.f32.mrf.mxu0
          %1846 = vdwg.mxu0
          %v1847 = vadd.f32 %v1778, %v1841
          %v1848 = vadd.f32 %v1781, %v1844
          %s1849 = sadd.s32 %s1646, 1
          %s1850 = smul.u32 %s1849, 16
          %s1851 = scalar_lea.vmem [#allocation4], %s1850
          %v1852 = vld [vmem:[%s1851] sm:$0xff]
          %v1853 = vld [vmem:[%s1851 + $0x8] sm:$0xf]
          %v1854 = vpack.c.bf16 %v1853, %v1852
          %s1855 = scalar_lea.vmem %s5, 48
          %v1856 = vld [vmem:[%s1855] sm:$0xf]
          %v1857 = vld [vmem:[%s1855 + $0x4] sm:$0xf]
          %v1858 = vld [vmem:[%s1855 + $0x8] sm:$0xf]
          %v1859 = vld [vmem:[%s1855 + $0xc] sm:$0xf]
          %v1864 = vunpack.c.l.b16 %v1856
          %v1865 = vunpack.c.l.b16 %v1857
          %v1866 = vunpack.c.l.b16 %v1858
          %v1867 = vunpack.c.l.b16 %v1859
          %v1868 = vpack.c.b16 %v1865, %v1864
          %v1869 = vpack.c.b16 %v1867, %v1866
          %v1873 = vsel %vm1684, %v1854, 0
          %1875 = vmatprep.subr.bf16.mxu0 0
          %1876 = vmatpush1.bf16.msra.mxu0 0
          %1877 = vmatprep.subr.bf16.mxu0 0
          %1878 = vmatpush1.bf16.msra.mxu0 0
          %1879 = vmatprep.subr.bf16.mxu0 0
          %1880 = vmatpush1.bf16.msra.mxu0 0
          %1881 = vmatprep.subr.bf16.mxu0 0
          %1882 = vmatpush1.bf16.msra.mxu0 0
          %1883 = vmatprep.subr.bf16.mxu0 0
          %1884 = vmatpush1.bf16.msra.mxu0 0
          %1885 = vmatprep.subr.bf16.mxu0 0
          %1886 = vmatpush1.bf16.msra.mxu0 0
          %1887 = vmatprep.subr.bf16.mxu0 0
          %1888 = vmatpush1.bf16.msra.mxu0 %v1869
          %1889 = vmatprep.subr.bf16.mxu0 0
          %1890 = vmatpush1.bf16.msra.mxu0 %v1868
          %1891 = vmatprep.subr.bf16.mxu0 0
          %1892 = vmatpush2.bf16.msra.mxu0 0
          %1893 = vmatprep.subr.bf16.mxu0 0
          %1894 = vmatpush2.bf16.msra.mxu0 0
          %1895 = vmatprep.subr.bf16.mxu0 0
          %1896 = vmatpush2.bf16.msra.mxu0 0
          %1897 = vmatprep.subr.bf16.mxu0 0
          %1898 = vmatpush2.bf16.msra.mxu0 0
          %1899 = vmatprep.subr.bf16.mxu0 0
          %1900 = vmatpush2.bf16.msra.mxu0 0
          %1901 = vmatprep.subr.bf16.mxu0 0
          %1902 = vmatpush2.bf16.msra.mxu0 0
          %1903 = vmatprep.subr.bf16.mxu0 0
          %1904 = vmatpush2.bf16.msra.mxu0 0
          %1905 = vmatprep.subr.bf16.mxu0 0
          %1906 = vmatpush2.bf16.msra.mxu0 0
          %1907 = vmatprep.mubr.bf16.mxu0 0
          %1908 = vmatmul.mubr.bf16.gmra.mxu0 %v1873
          %v1909 = vpop.f32.mrf.mxu0
          %v1910 = vadd.f32 0.0, %v1909
          %v1911 = vpop.f32.mrf.mxu0
          %v1912 = vpop.f32.mrf.mxu0
          %v1913 = vadd.f32 0.0, %v1912
          %v1914 = vpop.f32.mrf.mxu0
          %1915 = vdwg.mxu0
          %v1916 = vadd.f32 %v1847, %v1910
          %v1917 = vadd.f32 %v1848, %v1913
          %s1918 = scalar_lea.vmem %s5, 64
          %v1919 = vld [vmem:[%s1918] sm:$0xf]
          %v1920 = vld [vmem:[%s1918 + $0x4] sm:$0xf]
          %v1921 = vld [vmem:[%s1918 + $0x8] sm:$0xf]
          %v1922 = vld [vmem:[%s1918 + $0xc] sm:$0xf]
          %v1923 = vshrl.u32 %v1854, 16
          %v1925 = vshll.u32 %v1854, 16
          %v1927 = vrot.slane %v1925, 1
          %v1928 = vor.u32 %v1923, %v1927
          %v1933 = vunpack.c.l.b16 %v1919
          %v1934 = vunpack.c.l.b16 %v1920
          %v1935 = vunpack.c.l.b16 %v1921
          %v1936 = vunpack.c.l.b16 %v1922
          %v1937 = vpack.c.b16 %v1934, %v1933
          %v1938 = vpack.c.b16 %v1936, %v1935
          %v1942 = vsel %vm1684, %v1928, 0
          %1944 = vmatprep.subr.bf16.mxu0 0
          %1945 = vmatpush1.bf16.msra.mxu0 0
          %1946 = vmatprep.subr.bf16.mxu0 0
          %1947 = vmatpush1.bf16.msra.mxu0 0
          %1948 = vmatprep.subr.bf16.mxu0 0
          %1949 = vmatpush1.bf16.msra.mxu0 0
          %1950 = vmatprep.subr.bf16.mxu0 0
          %1951 = vmatpush1.bf16.msra.mxu0 0
          %1952 = vmatprep.subr.bf16.mxu0 0
          %1953 = vmatpush1.bf16.msra.mxu0 0
          %1954 = vmatprep.subr.bf16.mxu0 0
          %1955 = vmatpush1.bf16.msra.mxu0 0
          %1956 = vmatprep.subr.bf16.mxu0 0
          %1957 = vmatpush1.bf16.msra.mxu0 %v1938
          %1958 = vmatprep.subr.bf16.mxu0 0
          %1959 = vmatpush1.bf16.msra.mxu0 %v1937
          %1960 = vmatprep.subr.bf16.mxu0 0
          %1961 = vmatpush2.bf16.msra.mxu0 0
          %1962 = vmatprep.subr.bf16.mxu0 0
          %1963 = vmatpush2.bf16.msra.mxu0 0
          %1964 = vmatprep.subr.bf16.mxu0 0
          %1965 = vmatpush2.bf16.msra.mxu0 0
          %1966 = vmatprep.subr.bf16.mxu0 0
          %1967 = vmatpush2.bf16.msra.mxu0 0
          %1968 = vmatprep.subr.bf16.mxu0 0
          %1969 = vmatpush2.bf16.msra.mxu0 0
          %1970 = vmatprep.subr.bf16.mxu0 0
          %1971 = vmatpush2.bf16.msra.mxu0 0
          %1972 = vmatprep.subr.bf16.mxu0 0
          %1973 = vmatpush2.bf16.msra.mxu0 0
          %1974 = vmatprep.subr.bf16.mxu0 0
          %1975 = vmatpush2.bf16.msra.mxu0 0
          %1976 = vmatprep.mubr.bf16.mxu0 0
          %1977 = vmatmul.mubr.bf16.gmra.mxu0 %v1942
          %v1978 = vpop.f32.mrf.mxu0
          %v1979 = vadd.f32 0.0, %v1978
          %v1980 = vpop.f32.mrf.mxu0
          %v1981 = vpop.f32.mrf.mxu0
          %v1982 = vadd.f32 0.0, %v1981
          %v1983 = vpop.f32.mrf.mxu0
          %1984 = vdwg.mxu0
          %v1985 = vadd.f32 %v1916, %v1979
          %v1986 = vadd.f32 %v1917, %v1982
          %s1987 = scalar_lea.vmem %s5, 80
          %v1988 = vld [vmem:[%s1987] sm:$0xf]
          %v1989 = vld [vmem:[%s1987 + $0x4] sm:$0xf]
          %v1990 = vld [vmem:[%s1987 + $0x8] sm:$0xf]
          %v1991 = vld [vmem:[%s1987 + $0xc] sm:$0xf]
          %v1993 = vrot.slane %v1854, 1
          %v1998 = vunpack.c.l.b16 %v1988
          %v1999 = vunpack.c.l.b16 %v1989
          %v2000 = vunpack.c.l.b16 %v1990
          %v2001 = vunpack.c.l.b16 %v1991
          %v2002 = vpack.c.b16 %v1999, %v1998
          %v2003 = vpack.c.b16 %v2001, %v2000
          %v2007 = vsel %vm1684, %v1993, 0
          %2009 = vmatprep.subr.bf16.mxu0 0
          %2010 = vmatpush1.bf16.msra.mxu0 0
          %2011 = vmatprep.subr.bf16.mxu0 0
          %2012 = vmatpush1.bf16.msra.mxu0 0
          %2013 = vmatprep.subr.bf16.mxu0 0
          %2014 = vmatpush1.bf16.msra.mxu0 0
          %2015 = vmatprep.subr.bf16.mxu0 0
          %2016 = vmatpush1.bf16.msra.mxu0 0
          %2017 = vmatprep.subr.bf16.mxu0 0
          %2018 = vmatpush1.bf16.msra.mxu0 0
          %2019 = vmatprep.subr.bf16.mxu0 0
          %2020 = vmatpush1.bf16.msra.mxu0 0
          %2021 = vmatprep.subr.bf16.mxu0 0
          %2022 = vmatpush1.bf16.msra.mxu0 %v2003
          %2023 = vmatprep.subr.bf16.mxu0 0
          %2024 = vmatpush1.bf16.msra.mxu0 %v2002
          %2025 = vmatprep.subr.bf16.mxu0 0
          %2026 = vmatpush2.bf16.msra.mxu0 0
          %2027 = vmatprep.subr.bf16.mxu0 0
          %2028 = vmatpush2.bf16.msra.mxu0 0
          %2029 = vmatprep.subr.bf16.mxu0 0
          %2030 = vmatpush2.bf16.msra.mxu0 0
          %2031 = vmatprep.subr.bf16.mxu0 0
          %2032 = vmatpush2.bf16.msra.mxu0 0
          %2033 = vmatprep.subr.bf16.mxu0 0
          %2034 = vmatpush2.bf16.msra.mxu0 0
          %2035 = vmatprep.subr.bf16.mxu0 0
          %2036 = vmatpush2.bf16.msra.mxu0 0
          %2037 = vmatprep.subr.bf16.mxu0 0
          %2038 = vmatpush2.bf16.msra.mxu0 0
          %2039 = vmatprep.subr.bf16.mxu0 0
          %2040 = vmatpush2.bf16.msra.mxu0 0
          %2041 = vmatprep.mubr.bf16.mxu0 0
          %2042 = vmatmul.mubr.bf16.gmra.mxu0 %v2007
          %v2043 = vpop.f32.mrf.mxu0
          %v2044 = vadd.f32 0.0, %v2043
          %v2045 = vpop.f32.mrf.mxu0
          %v2046 = vpop.f32.mrf.mxu0
          %v2047 = vadd.f32 0.0, %v2046
          %v2048 = vpop.f32.mrf.mxu0
          %2049 = vdwg.mxu0
          %v2050 = vadd.f32 %v1985, %v2044
          %v2051 = vadd.f32 %v1986, %v2047
          %s2052 = sadd.s32 %s1646, 2
          %s2053 = smul.u32 %s2052, 16
          %s2054 = scalar_lea.vmem [#allocation4], %s2053
          %v2055 = vld [vmem:[%s2054] sm:$0xff]
          %v2056 = vld [vmem:[%s2054 + $0x8] sm:$0xf]
          %v2057 = vpack.c.bf16 %v2056, %v2055
          %s2058 = scalar_lea.vmem %s5, 96
          %v2059 = vld [vmem:[%s2058] sm:$0xf]
          %v2060 = vld [vmem:[%s2058 + $0x4] sm:$0xf]
          %v2061 = vld [vmem:[%s2058 + $0x8] sm:$0xf]
          %v2062 = vld [vmem:[%s2058 + $0xc] sm:$0xf]
          %v2067 = vunpack.c.l.b16 %v2059
          %v2068 = vunpack.c.l.b16 %v2060
          %v2069 = vunpack.c.l.b16 %v2061
          %v2070 = vunpack.c.l.b16 %v2062
          %v2071 = vpack.c.b16 %v2068, %v2067
          %v2072 = vpack.c.b16 %v2070, %v2069
          %v2076 = vsel %vm1684, %v2057, 0
          %2078 = vmatprep.subr.bf16.mxu0 0
          %2079 = vmatpush1.bf16.msra.mxu0 0
          %2080 = vmatprep.subr.bf16.mxu0 0
          %2081 = vmatpush1.bf16.msra.mxu0 0
          %2082 = vmatprep.subr.bf16.mxu0 0
          %2083 = vmatpush1.bf16.msra.mxu0 0
          %2084 = vmatprep.subr.bf16.mxu0 0
          %2085 = vmatpush1.bf16.msra.mxu0 0
          %2086 = vmatprep.subr.bf16.mxu0 0
          %2087 = vmatpush1.bf16.msra.mxu0 0
          %2088 = vmatprep.subr.bf16.mxu0 0
          %2089 = vmatpush1.bf16.msra.mxu0 0
          %2090 = vmatprep.subr.bf16.mxu0 0
          %2091 = vmatpush1.bf16.msra.mxu0 %v2072
          %2092 = vmatprep.subr.bf16.mxu0 0
          %2093 = vmatpush1.bf16.msra.mxu0 %v2071
          %2094 = vmatprep.subr.bf16.mxu0 0
          %2095 = vmatpush2.bf16.msra.mxu0 0
          %2096 = vmatprep.subr.bf16.mxu0 0
          %2097 = vmatpush2.bf16.msra.mxu0 0
          %2098 = vmatprep.subr.bf16.mxu0 0
          %2099 = vmatpush2.bf16.msra.mxu0 0
          %2100 = vmatprep.subr.bf16.mxu0 0
          %2101 = vmatpush2.bf16.msra.mxu0 0
          %2102 = vmatprep.subr.bf16.mxu0 0
          %2103 = vmatpush2.bf16.msra.mxu0 0
          %2104 = vmatprep.subr.bf16.mxu0 0
          %2105 = vmatpush2.bf16.msra.mxu0 0
          %2106 = vmatprep.subr.bf16.mxu0 0
          %2107 = vmatpush2.bf16.msra.mxu0 0
          %2108 = vmatprep.subr.bf16.mxu0 0
          %2109 = vmatpush2.bf16.msra.mxu0 0
          %2110 = vmatprep.mubr.bf16.mxu0 0
          %2111 = vmatmul.mubr.bf16.gmra.mxu0 %v2076
          %v2112 = vpop.f32.mrf.mxu0
          %v2113 = vadd.f32 0.0, %v2112
          %v2114 = vpop.f32.mrf.mxu0
          %v2115 = vpop.f32.mrf.mxu0
          %v2116 = vadd.f32 0.0, %v2115
          %v2117 = vpop.f32.mrf.mxu0
          %2118 = vdwg.mxu0
          %v2119 = vadd.f32 %v2050, %v2113
          %v2120 = vadd.f32 %v2051, %v2116
          %s2121 = scalar_lea.vmem %s5, 112
          %v2122 = vld [vmem:[%s2121] sm:$0xf]
          %v2123 = vld [vmem:[%s2121 + $0x4] sm:$0xf]
          %v2124 = vld [vmem:[%s2121 + $0x8] sm:$0xf]
          %v2125 = vld [vmem:[%s2121 + $0xc] sm:$0xf]
          %v2126 = vshrl.u32 %v2057, 16
          %v2128 = vshll.u32 %v2057, 16
          %v2130 = vrot.slane %v2128, 1
          %v2131 = vor.u32 %v2126, %v2130
          %v2136 = vunpack.c.l.b16 %v2122
          %v2137 = vunpack.c.l.b16 %v2123
          %v2138 = vunpack.c.l.b16 %v2124
          %v2139 = vunpack.c.l.b16 %v2125
          %v2140 = vpack.c.b16 %v2137, %v2136
          %v2141 = vpack.c.b16 %v2139, %v2138
          %v2145 = vsel %vm1684, %v2131, 0
          %2147 = vmatprep.subr.bf16.mxu0 0
          %2148 = vmatpush1.bf16.msra.mxu0 0
          %2149 = vmatprep.subr.bf16.mxu0 0
          %2150 = vmatpush1.bf16.msra.mxu0 0
          %2151 = vmatprep.subr.bf16.mxu0 0
          %2152 = vmatpush1.bf16.msra.mxu0 0
          %2153 = vmatprep.subr.bf16.mxu0 0
          %2154 = vmatpush1.bf16.msra.mxu0 0
          %2155 = vmatprep.subr.bf16.mxu0 0
          %2156 = vmatpush1.bf16.msra.mxu0 0
          %2157 = vmatprep.subr.bf16.mxu0 0
          %2158 = vmatpush1.bf16.msra.mxu0 0
          %2159 = vmatprep.subr.bf16.mxu0 0
          %2160 = vmatpush1.bf16.msra.mxu0 %v2141
          %2161 = vmatprep.subr.bf16.mxu0 0
          %2162 = vmatpush1.bf16.msra.mxu0 %v2140
          %2163 = vmatprep.subr.bf16.mxu0 0
          %2164 = vmatpush2.bf16.msra.mxu0 0
          %2165 = vmatprep.subr.bf16.mxu0 0
          %2166 = vmatpush2.bf16.msra.mxu0 0
          %2167 = vmatprep.subr.bf16.mxu0 0
          %2168 = vmatpush2.bf16.msra.mxu0 0
          %2169 = vmatprep.subr.bf16.mxu0 0
          %2170 = vmatpush2.bf16.msra.mxu0 0
          %2171 = vmatprep.subr.bf16.mxu0 0
          %2172 = vmatpush2.bf16.msra.mxu0 0
          %2173 = vmatprep.subr.bf16.mxu0 0
          %2174 = vmatpush2.bf16.msra.mxu0 0
          %2175 = vmatprep.subr.bf16.mxu0 0
          %2176 = vmatpush2.bf16.msra.mxu0 0
          %2177 = vmatprep.subr.bf16.mxu0 0
          %2178 = vmatpush2.bf16.msra.mxu0 0
          %2179 = vmatprep.mubr.bf16.mxu0 0
          %2180 = vmatmul.mubr.bf16.gmra.mxu0 %v2145
          %v2181 = vpop.f32.mrf.mxu0
          %v2182 = vadd.f32 0.0, %v2181
          %v2183 = vpop.f32.mrf.mxu0
          %v2184 = vpop.f32.mrf.mxu0
          %v2185 = vadd.f32 0.0, %v2184
          %v2186 = vpop.f32.mrf.mxu0
          %2187 = vdwg.mxu0
          %v2188 = vadd.f32 %v2119, %v2182
          %v2189 = vadd.f32 %v2120, %v2185
          %s2190 = scalar_lea.vmem %s5, 128
          %v2191 = vld [vmem:[%s2190] sm:$0xf]
          %v2192 = vld [vmem:[%s2190 + $0x4] sm:$0xf]
          %v2193 = vld [vmem:[%s2190 + $0x8] sm:$0xf]
          %v2194 = vld [vmem:[%s2190 + $0xc] sm:$0xf]
          %v2196 = vrot.slane %v2057, 1
          %v2201 = vunpack.c.l.b16 %v2191
          %v2202 = vunpack.c.l.b16 %v2192
          %v2203 = vunpack.c.l.b16 %v2193
          %v2204 = vunpack.c.l.b16 %v2194
          %v2205 = vpack.c.b16 %v2202, %v2201
          %v2206 = vpack.c.b16 %v2204, %v2203
          %v2210 = vsel %vm1684, %v2196, 0
          %2212 = vmatprep.subr.bf16.mxu0 0
          %2213 = vmatpush1.bf16.msra.mxu0 0
          %2214 = vmatprep.subr.bf16.mxu0 0
          %2215 = vmatpush1.bf16.msra.mxu0 0
          %2216 = vmatprep.subr.bf16.mxu0 0
          %2217 = vmatpush1.bf16.msra.mxu0 0
          %2218 = vmatprep.subr.bf16.mxu0 0
          %2219 = vmatpush1.bf16.msra.mxu0 0
          %2220 = vmatprep.subr.bf16.mxu0 0
          %2221 = vmatpush1.bf16.msra.mxu0 0
          %2222 = vmatprep.subr.bf16.mxu0 0
          %2223 = vmatpush1.bf16.msra.mxu0 0
          %2224 = vmatprep.subr.bf16.mxu0 0
          %2225 = vmatpush1.bf16.msra.mxu0 %v2206
          %2226 = vmatprep.subr.bf16.mxu0 0
          %2227 = vmatpush1.bf16.msra.mxu0 %v2205
          %2228 = vmatprep.subr.bf16.mxu0 0
          %2229 = vmatpush2.bf16.msra.mxu0 0
          %2230 = vmatprep.subr.bf16.mxu0 0
          %2231 = vmatpush2.bf16.msra.mxu0 0
          %2232 = vmatprep.subr.bf16.mxu0 0
          %2233 = vmatpush2.bf16.msra.mxu0 0
          %2234 = vmatprep.subr.bf16.mxu0 0
          %2235 = vmatpush2.bf16.msra.mxu0 0
          %2236 = vmatprep.subr.bf16.mxu0 0
          %2237 = vmatpush2.bf16.msra.mxu0 0
          %2238 = vmatprep.subr.bf16.mxu0 0
          %2239 = vmatpush2.bf16.msra.mxu0 0
          %2240 = vmatprep.subr.bf16.mxu0 0
          %2241 = vmatpush2.bf16.msra.mxu0 0
          %2242 = vmatprep.subr.bf16.mxu0 0
          %2243 = vmatpush2.bf16.msra.mxu0 0
          %2244 = vmatprep.mubr.bf16.mxu0 0
          %2245 = vmatmul.mubr.bf16.gmra.mxu0 %v2210
          %v2246 = vpop.f32.mrf.mxu0
          %v2247 = vadd.f32 0.0, %v2246
          %v2248 = vpop.f32.mrf.mxu0
          %v2249 = vpop.f32.mrf.mxu0
          %v2250 = vadd.f32 0.0, %v2249
          %v2251 = vpop.f32.mrf.mxu0
          %2252 = vdwg.mxu0
          %v2253 = vadd.f32 %v2188, %v2247
          %v2254 = vadd.f32 %v2189, %v2250
          %v2255 = vld [vmem:[%s6] sm:$0x1]
          %v2257 = vlaneseq
          %v2258 = vshrl.u32 %v2257, 7
          %v2259 = vsub.s32 0, %v2258
          %v2260 = vrot.slane %v2255, %v2259
          %v2262 = vadd.f32 %v2253, %v2260
          %v2263 = vadd.f32 %v2254, %v2260
          %v2264 = vmax.f32 %v2262, 0.0
          %v2265 = vmax.f32 %v2263, 0.0
          %s2266 = scalar_lea.vmem [#allocation5], %s1651
          %vm2267 = vcmask 523264
          %2268 = vst.msk [vmem:[%s2266] sm:$0xff] %vm2267, %v2264
          %vm2269 = vcmask 517120
          %2270 = vst.msk [vmem:[%s2266 + $0x8] sm:$0x3] %vm2269, %v2265
        $region106: #{net_forward.1} parent=79 // loop_footer
          %s1650 = sadd.s32 1, %s1646
        $region107: #{net_forward.1} parent=79 // loop_footer_branch
          %1645 = sbr.rel target = $region103
        $region108: #{net_forward.1} parent=79 // loop_exit
          _
        loop: start=0, step=1, limit=8
        $region109: #{net_forward.1} parent=79 // loop_pre_header
          _
        $region110: #{net_forward.1} parent=79 // loop_header
          %s2272 = sphi 0, %s2276
          %p2273 = scmp.ge.s32.totalorder %s2272, 8
        $region111: #{net_forward.1} parent=79 // loop_header_branch
          %2275 = sbr.rel (%p2273) target = $region115
        $region112: #{net_forward.1} parent=79 // loop_body
          %s2277 = smul.u32 %s2272, 16
          %s2278 = scalar_lea.vmem [#allocation5], %s2277
          %v2279 = vld [vmem:[%s2278] sm:$0xff]
          %v2280 = vld [vmem:[%s2278 + $0x8] sm:$0x3]
          %v2281 = vpack.c.bf16 %v2279, %v2279
          %v2282 = vld [vmem:[%s7] sm:$0xf]
          %v2283 = vld [vmem:[%s7 + $0x4] sm:$0xf]
          %v2284 = vld [vmem:[%s7 + $0x8] sm:$0xf]
          %v2285 = vld [vmem:[%s7 + $0xc] sm:$0xf]
          %v2286 = vld [vmem:[%s7 + $0x10] sm:$0xf]
          %v2287 = vld [vmem:[%s7 + $0x14] sm:$0xf]
          %v2288 = vld [vmem:[%s7 + $0x18] sm:$0xf]
          %v2289 = vld [vmem:[%s7 + $0x1c] sm:$0xf]
          %v2290 = vpack.c.bf16 %v2280, %v2279
          %s2291 = scalar_lea.vmem %s7, 32
          %v2292 = vld [vmem:[%s2291] sm:$0xf]
          %v2293 = vld [vmem:[%s2291 + $0x4] sm:$0xf]
          %v2294 = vld [vmem:[%s2291 + $0x8] sm:$0xf]
          %v2295 = vld [vmem:[%s2291 + $0xc] sm:$0xf]
          %v2296 = vld [vmem:[%s2291 + $0x10] sm:$0xf]
          %v2297 = vld [vmem:[%s2291 + $0x14] sm:$0xf]
          %v2298 = vld [vmem:[%s2291 + $0x18] sm:$0xf]
          %v2299 = vld [vmem:[%s2291 + $0x1c] sm:$0xf]
          %v2301 = vshrl.u32 %v2290, 16
          %v2303 = vshll.u32 %v2290, 16
          %v2305 = vrot.slane %v2303, 1
          %v2306 = vor.u32 %v2301, %v2305
          %v2315 = vunpack.c.l.b16 %v2292
          %v2316 = vunpack.c.l.b16 %v2293
          %v2317 = vunpack.c.l.b16 %v2294
          %v2318 = vunpack.c.l.b16 %v2295
          %v2319 = vunpack.c.l.b16 %v2296
          %v2320 = vunpack.c.l.b16 %v2297
          %v2321 = vunpack.c.l.b16 %v2298
          %v2322 = vunpack.c.l.b16 %v2299
          %v2323 = vpack.c.b16 %v2316, %v2315
          %v2324 = vpack.c.b16 %v2318, %v2317
          %v2325 = vpack.c.b16 %v2320, %v2319
          %v2326 = vpack.c.b16 %v2322, %v2321
          %vm2331 = vcmask 523264
          %v2333 = vsel %vm2331, %v2306, 0
          %2335 = vmatprep.subr.bf16.mxu0 0
          %2336 = vmatpush1.bf16.msra.mxu0 0
          %2337 = vmatprep.subr.bf16.mxu0 0
          %2338 = vmatpush1.bf16.msra.mxu0 0
          %2339 = vmatprep.subr.bf16.mxu0 0
          %2340 = vmatpush1.bf16.msra.mxu0 0
          %2341 = vmatprep.subr.bf16.mxu0 0
          %2342 = vmatpush1.bf16.msra.mxu0 0
          %2343 = vmatprep.subr.bf16.mxu0 0
          %2344 = vmatpush1.bf16.msra.mxu0 %v2326
          %2345 = vmatprep.subr.bf16.mxu0 0
          %2346 = vmatpush1.bf16.msra.mxu0 %v2325
          %2347 = vmatprep.subr.bf16.mxu0 0
          %2348 = vmatpush1.bf16.msra.mxu0 %v2324
          %2349 = vmatprep.subr.bf16.mxu0 0
          %2350 = vmatpush1.bf16.msra.mxu0 %v2323
          %2351 = vmatprep.subr.bf16.mxu0 0
          %2352 = vmatpush2.bf16.msra.mxu0 0
          %2353 = vmatprep.subr.bf16.mxu0 0
          %2354 = vmatpush2.bf16.msra.mxu0 0
          %2355 = vmatprep.subr.bf16.mxu0 0
          %2356 = vmatpush2.bf16.msra.mxu0 0
          %2357 = vmatprep.subr.bf16.mxu0 0
          %2358 = vmatpush2.bf16.msra.mxu0 0
          %2359 = vmatprep.subr.bf16.mxu0 0
          %2360 = vmatpush2.bf16.msra.mxu0 0
          %2361 = vmatprep.subr.bf16.mxu0 0
          %2362 = vmatpush2.bf16.msra.mxu0 0
          %2363 = vmatprep.subr.bf16.mxu0 0
          %2364 = vmatpush2.bf16.msra.mxu0 0
          %2365 = vmatprep.subr.bf16.mxu0 0
          %2366 = vmatpush2.bf16.msra.mxu0 0
          %2367 = vmatprep.mubr.bf16.mxu0 0
          %2368 = vmatmul.mubr.bf16.gmra.mxu0 %v2333
          %v2369 = vpop.f32.mrf.mxu0
          %v2370 = vadd.f32 0.0, %v2369
          %v2371 = vpop.f32.mrf.mxu0
          %v2372 = vpop.f32.mrf.mxu0
          %v2373 = vpop.f32.mrf.mxu0
          %2374 = vdwg.mxu0
          %v2383 = vunpack.c.l.b16 %v2282
          %v2384 = vunpack.c.l.b16 %v2283
          %v2385 = vunpack.c.l.b16 %v2284
          %v2386 = vunpack.c.l.b16 %v2285
          %v2387 = vunpack.c.l.b16 %v2286
          %v2388 = vunpack.c.l.b16 %v2287
          %v2389 = vunpack.c.l.b16 %v2288
          %v2390 = vunpack.c.l.b16 %v2289
          %v2391 = vpack.c.b16 %v2384, %v2383
          %v2392 = vpack.c.b16 %v2386, %v2385
          %v2393 = vpack.c.b16 %v2388, %v2387
          %v2394 = vpack.c.b16 %v2390, %v2389
          %v2400 = vsel %vm2331, %v2281, 0
          %2402 = vmatprep.subr.bf16.mxu0 0
          %2403 = vmatpush1.bf16.msra.mxu0 0
          %2404 = vmatprep.subr.bf16.mxu0 0
          %2405 = vmatpush1.bf16.msra.mxu0 0
          %2406 = vmatprep.subr.bf16.mxu0 0
          %2407 = vmatpush1.bf16.msra.mxu0 0
          %2408 = vmatprep.subr.bf16.mxu0 0
          %2409 = vmatpush1.bf16.msra.mxu0 0
          %2410 = vmatprep.subr.bf16.mxu0 0
          %2411 = vmatpush1.bf16.msra.mxu0 %v2394
          %2412 = vmatprep.subr.bf16.mxu0 0
          %2413 = vmatpush1.bf16.msra.mxu0 %v2393
          %2414 = vmatprep.subr.bf16.mxu0 0
          %2415 = vmatpush1.bf16.msra.mxu0 %v2392
          %2416 = vmatprep.subr.bf16.mxu0 0
          %2417 = vmatpush1.bf16.msra.mxu0 %v2391
          %2418 = vmatprep.subr.bf16.mxu0 0
          %2419 = vmatpush2.bf16.msra.mxu0 0
          %2420 = vmatprep.subr.bf16.mxu0 0
          %2421 = vmatpush2.bf16.msra.mxu0 0
          %2422 = vmatprep.subr.bf16.mxu0 0
          %2423 = vmatpush2.bf16.msra.mxu0 0
          %2424 = vmatprep.subr.bf16.mxu0 0
          %2425 = vmatpush2.bf16.msra.mxu0 0
          %2426 = vmatprep.subr.bf16.mxu0 0
          %2427 = vmatpush2.bf16.msra.mxu0 0
          %2428 = vmatprep.subr.bf16.mxu0 0
          %2429 = vmatpush2.bf16.msra.mxu0 0
          %2430 = vmatprep.subr.bf16.mxu0 0
          %2431 = vmatpush2.bf16.msra.mxu0 0
          %2432 = vmatprep.subr.bf16.mxu0 0
          %2433 = vmatpush2.bf16.msra.mxu0 0
          %2434 = vmatprep.mubr.bf16.mxu0 0
          %2435 = vmatmul.mubr.bf16.gmra.mxu0 %v2400
          %v2436 = vpop.f32.mrf.mxu0
          %v2437 = vadd.f32 %v2370, %v2436
          %v2438 = vpop.f32.mrf.mxu0
          %v2439 = vpop.f32.mrf.mxu0
          %v2440 = vpop.f32.mrf.mxu0
          %2441 = vdwg.mxu0
          %s2442 = scalar_lea.vmem %s7, 64
          %v2443 = vld [vmem:[%s2442] sm:$0xf]
          %v2444 = vld [vmem:[%s2442 + $0x4] sm:$0xf]
          %v2445 = vld [vmem:[%s2442 + $0x8] sm:$0xf]
          %v2446 = vld [vmem:[%s2442 + $0xc] sm:$0xf]
          %v2447 = vld [vmem:[%s2442 + $0x10] sm:$0xf]
          %v2448 = vld [vmem:[%s2442 + $0x14] sm:$0xf]
          %v2449 = vld [vmem:[%s2442 + $0x18] sm:$0xf]
          %v2450 = vld [vmem:[%s2442 + $0x1c] sm:$0xf]
          %v2452 = vrot.slane %v2290, 1
          %v2461 = vunpack.c.l.b16 %v2443
          %v2462 = vunpack.c.l.b16 %v2444
          %v2463 = vunpack.c.l.b16 %v2445
          %v2464 = vunpack.c.l.b16 %v2446
          %v2465 = vunpack.c.l.b16 %v2447
          %v2466 = vunpack.c.l.b16 %v2448
          %v2467 = vunpack.c.l.b16 %v2449
          %v2468 = vunpack.c.l.b16 %v2450
          %v2469 = vpack.c.b16 %v2462, %v2461
          %v2470 = vpack.c.b16 %v2464, %v2463
          %v2471 = vpack.c.b16 %v2466, %v2465
          %v2472 = vpack.c.b16 %v2468, %v2467
          %v2478 = vsel %vm2331, %v2452, 0
          %2480 = vmatprep.subr.bf16.mxu0 0
          %2481 = vmatpush1.bf16.msra.mxu0 0
          %2482 = vmatprep.subr.bf16.mxu0 0
          %2483 = vmatpush1.bf16.msra.mxu0 0
          %2484 = vmatprep.subr.bf16.mxu0 0
          %2485 = vmatpush1.bf16.msra.mxu0 0
          %2486 = vmatprep.subr.bf16.mxu0 0
          %2487 = vmatpush1.bf16.msra.mxu0 0
          %2488 = vmatprep.subr.bf16.mxu0 0
          %2489 = vmatpush1.bf16.msra.mxu0 %v2472
          %2490 = vmatprep.subr.bf16.mxu0 0
          %2491 = vmatpush1.bf16.msra.mxu0 %v2471
          %2492 = vmatprep.subr.bf16.mxu0 0
          %2493 = vmatpush1.bf16.msra.mxu0 %v2470
          %2494 = vmatprep.subr.bf16.mxu0 0
          %2495 = vmatpush1.bf16.msra.mxu0 %v2469
          %2496 = vmatprep.subr.bf16.mxu0 0
          %2497 = vmatpush2.bf16.msra.mxu0 0
          %2498 = vmatprep.subr.bf16.mxu0 0
          %2499 = vmatpush2.bf16.msra.mxu0 0
          %2500 = vmatprep.subr.bf16.mxu0 0
          %2501 = vmatpush2.bf16.msra.mxu0 0
          %2502 = vmatprep.subr.bf16.mxu0 0
          %2503 = vmatpush2.bf16.msra.mxu0 0
          %2504 = vmatprep.subr.bf16.mxu0 0
          %2505 = vmatpush2.bf16.msra.mxu0 0
          %2506 = vmatprep.subr.bf16.mxu0 0
          %2507 = vmatpush2.bf16.msra.mxu0 0
          %2508 = vmatprep.subr.bf16.mxu0 0
          %2509 = vmatpush2.bf16.msra.mxu0 0
          %2510 = vmatprep.subr.bf16.mxu0 0
          %2511 = vmatpush2.bf16.msra.mxu0 0
          %2512 = vmatprep.mubr.bf16.mxu0 0
          %2513 = vmatmul.mubr.bf16.gmra.mxu0 %v2478
          %v2514 = vpop.f32.mrf.mxu0
          %v2515 = vadd.f32 0.0, %v2514
          %v2516 = vpop.f32.mrf.mxu0
          %v2517 = vpop.f32.mrf.mxu0
          %v2518 = vpop.f32.mrf.mxu0
          %2519 = vdwg.mxu0
          %v2520 = vadd.f32 %v2437, %v2515
          %s2521 = sadd.s32 %s2272, 1
          %s2522 = smul.u32 %s2521, 16
          %s2523 = scalar_lea.vmem [#allocation5], %s2522
          %v2524 = vld [vmem:[%s2523] sm:$0xff]
          %v2525 = vld [vmem:[%s2523 + $0x8] sm:$0x3]
          %v2526 = vpack.c.bf16 %v2524, %v2524
          %s2527 = scalar_lea.vmem %s7, 96
          %v2528 = vld [vmem:[%s2527] sm:$0xf]
          %v2529 = vld [vmem:[%s2527 + $0x4] sm:$0xf]
          %v2530 = vld [vmem:[%s2527 + $0x8] sm:$0xf]
          %v2531 = vld [vmem:[%s2527 + $0xc] sm:$0xf]
          %v2532 = vld [vmem:[%s2527 + $0x10] sm:$0xf]
          %v2533 = vld [vmem:[%s2527 + $0x14] sm:$0xf]
          %v2534 = vld [vmem:[%s2527 + $0x18] sm:$0xf]
          %v2535 = vld [vmem:[%s2527 + $0x1c] sm:$0xf]
          %v2544 = vunpack.c.l.b16 %v2528
          %v2545 = vunpack.c.l.b16 %v2529
          %v2546 = vunpack.c.l.b16 %v2530
          %v2547 = vunpack.c.l.b16 %v2531
          %v2548 = vunpack.c.l.b16 %v2532
          %v2549 = vunpack.c.l.b16 %v2533
          %v2550 = vunpack.c.l.b16 %v2534
          %v2551 = vunpack.c.l.b16 %v2535
          %v2552 = vpack.c.b16 %v2545, %v2544
          %v2553 = vpack.c.b16 %v2547, %v2546
          %v2554 = vpack.c.b16 %v2549, %v2548
          %v2555 = vpack.c.b16 %v2551, %v2550
          %v2561 = vsel %vm2331, %v2526, 0
          %2563 = vmatprep.subr.bf16.mxu0 0
          %2564 = vmatpush1.bf16.msra.mxu0 0
          %2565 = vmatprep.subr.bf16.mxu0 0
          %2566 = vmatpush1.bf16.msra.mxu0 0
          %2567 = vmatprep.subr.bf16.mxu0 0
          %2568 = vmatpush1.bf16.msra.mxu0 0
          %2569 = vmatprep.subr.bf16.mxu0 0
          %2570 = vmatpush1.bf16.msra.mxu0 0
          %2571 = vmatprep.subr.bf16.mxu0 0
          %2572 = vmatpush1.bf16.msra.mxu0 %v2555
          %2573 = vmatprep.subr.bf16.mxu0 0
          %2574 = vmatpush1.bf16.msra.mxu0 %v2554
          %2575 = vmatprep.subr.bf16.mxu0 0
          %2576 = vmatpush1.bf16.msra.mxu0 %v2553
          %2577 = vmatprep.subr.bf16.mxu0 0
          %2578 = vmatpush1.bf16.msra.mxu0 %v2552
          %2579 = vmatprep.subr.bf16.mxu0 0
          %2580 = vmatpush2.bf16.msra.mxu0 0
          %2581 = vmatprep.subr.bf16.mxu0 0
          %2582 = vmatpush2.bf16.msra.mxu0 0
          %2583 = vmatprep.subr.bf16.mxu0 0
          %2584 = vmatpush2.bf16.msra.mxu0 0
          %2585 = vmatprep.subr.bf16.mxu0 0
          %2586 = vmatpush2.bf16.msra.mxu0 0
          %2587 = vmatprep.subr.bf16.mxu0 0
          %2588 = vmatpush2.bf16.msra.mxu0 0
          %2589 = vmatprep.subr.bf16.mxu0 0
          %2590 = vmatpush2.bf16.msra.mxu0 0
          %2591 = vmatprep.subr.bf16.mxu0 0
          %2592 = vmatpush2.bf16.msra.mxu0 0
          %2593 = vmatprep.subr.bf16.mxu0 0
          %2594 = vmatpush2.bf16.msra.mxu0 0
          %2595 = vmatprep.mubr.bf16.mxu0 0
          %2596 = vmatmul.mubr.bf16.gmra.mxu0 %v2561
          %v2597 = vpop.f32.mrf.mxu0
          %v2598 = vadd.f32 0.0, %v2597
          %v2599 = vpop.f32.mrf.mxu0
          %v2600 = vpop.f32.mrf.mxu0
          %v2601 = vpop.f32.mrf.mxu0
          %2602 = vdwg.mxu0
          %v2603 = vadd.f32 %v2520, %v2598
          %v2604 = vpack.c.bf16 %v2525, %v2524
          %s2605 = scalar_lea.vmem %s7, 128
          %v2606 = vld [vmem:[%s2605] sm:$0xf]
          %v2607 = vld [vmem:[%s2605 + $0x4] sm:$0xf]
          %v2608 = vld [vmem:[%s2605 + $0x8] sm:$0xf]
          %v2609 = vld [vmem:[%s2605 + $0xc] sm:$0xf]
          %v2610 = vld [vmem:[%s2605 + $0x10] sm:$0xf]
          %v2611 = vld [vmem:[%s2605 + $0x14] sm:$0xf]
          %v2612 = vld [vmem:[%s2605 + $0x18] sm:$0xf]
          %v2613 = vld [vmem:[%s2605 + $0x1c] sm:$0xf]
          %v2615 = vshrl.u32 %v2604, 16
          %v2617 = vshll.u32 %v2604, 16
          %v2619 = vrot.slane %v2617, 1
          %v2620 = vor.u32 %v2615, %v2619
          %v2629 = vunpack.c.l.b16 %v2606
          %v2630 = vunpack.c.l.b16 %v2607
          %v2631 = vunpack.c.l.b16 %v2608
          %v2632 = vunpack.c.l.b16 %v2609
          %v2633 = vunpack.c.l.b16 %v2610
          %v2634 = vunpack.c.l.b16 %v2611
          %v2635 = vunpack.c.l.b16 %v2612
          %v2636 = vunpack.c.l.b16 %v2613
          %v2637 = vpack.c.b16 %v2630, %v2629
          %v2638 = vpack.c.b16 %v2632, %v2631
          %v2639 = vpack.c.b16 %v2634, %v2633
          %v2640 = vpack.c.b16 %v2636, %v2635
          %v2646 = vsel %vm2331, %v2620, 0
          %2648 = vmatprep.subr.bf16.mxu0 0
          %2649 = vmatpush1.bf16.msra.mxu0 0
          %2650 = vmatprep.subr.bf16.mxu0 0
          %2651 = vmatpush1.bf16.msra.mxu0 0
          %2652 = vmatprep.subr.bf16.mxu0 0
          %2653 = vmatpush1.bf16.msra.mxu0 0
          %2654 = vmatprep.subr.bf16.mxu0 0
          %2655 = vmatpush1.bf16.msra.mxu0 0
          %2656 = vmatprep.subr.bf16.mxu0 0
          %2657 = vmatpush1.bf16.msra.mxu0 %v2640
          %2658 = vmatprep.subr.bf16.mxu0 0
          %2659 = vmatpush1.bf16.msra.mxu0 %v2639
          %2660 = vmatprep.subr.bf16.mxu0 0
          %2661 = vmatpush1.bf16.msra.mxu0 %v2638
          %2662 = vmatprep.subr.bf16.mxu0 0
          %2663 = vmatpush1.bf16.msra.mxu0 %v2637
          %2664 = vmatprep.subr.bf16.mxu0 0
          %2665 = vmatpush2.bf16.msra.mxu0 0
          %2666 = vmatprep.subr.bf16.mxu0 0
          %2667 = vmatpush2.bf16.msra.mxu0 0
          %2668 = vmatprep.subr.bf16.mxu0 0
          %2669 = vmatpush2.bf16.msra.mxu0 0
          %2670 = vmatprep.subr.bf16.mxu0 0
          %2671 = vmatpush2.bf16.msra.mxu0 0
          %2672 = vmatprep.subr.bf16.mxu0 0
          %2673 = vmatpush2.bf16.msra.mxu0 0
          %2674 = vmatprep.subr.bf16.mxu0 0
          %2675 = vmatpush2.bf16.msra.mxu0 0
          %2676 = vmatprep.subr.bf16.mxu0 0
          %2677 = vmatpush2.bf16.msra.mxu0 0
          %2678 = vmatprep.subr.bf16.mxu0 0
          %2679 = vmatpush2.bf16.msra.mxu0 0
          %2680 = vmatprep.mubr.bf16.mxu0 0
          %2681 = vmatmul.mubr.bf16.gmra.mxu0 %v2646
          %v2682 = vpop.f32.mrf.mxu0
          %v2683 = vadd.f32 0.0, %v2682
          %v2684 = vpop.f32.mrf.mxu0
          %v2685 = vpop.f32.mrf.mxu0
          %v2686 = vpop.f32.mrf.mxu0
          %2687 = vdwg.mxu0
          %v2688 = vadd.f32 %v2603, %v2683
          %s2689 = scalar_lea.vmem %s7, 160
          %v2690 = vld [vmem:[%s2689] sm:$0xf]
          %v2691 = vld [vmem:[%s2689 + $0x4] sm:$0xf]
          %v2692 = vld [vmem:[%s2689 + $0x8] sm:$0xf]
          %v2693 = vld [vmem:[%s2689 + $0xc] sm:$0xf]
          %v2694 = vld [vmem:[%s2689 + $0x10] sm:$0xf]
          %v2695 = vld [vmem:[%s2689 + $0x14] sm:$0xf]
          %v2696 = vld [vmem:[%s2689 + $0x18] sm:$0xf]
          %v2697 = vld [vmem:[%s2689 + $0x1c] sm:$0xf]
          %v2699 = vrot.slane %v2604, 1
          %v2708 = vunpack.c.l.b16 %v2690
          %v2709 = vunpack.c.l.b16 %v2691
          %v2710 = vunpack.c.l.b16 %v2692
          %v2711 = vunpack.c.l.b16 %v2693
          %v2712 = vunpack.c.l.b16 %v2694
          %v2713 = vunpack.c.l.b16 %v2695
          %v2714 = vunpack.c.l.b16 %v2696
          %v2715 = vunpack.c.l.b16 %v2697
          %v2716 = vpack.c.b16 %v2709, %v2708
          %v2717 = vpack.c.b16 %v2711, %v2710
          %v2718 = vpack.c.b16 %v2713, %v2712
          %v2719 = vpack.c.b16 %v2715, %v2714
          %v2725 = vsel %vm2331, %v2699, 0
          %2727 = vmatprep.subr.bf16.mxu0 0
          %2728 = vmatpush1.bf16.msra.mxu0 0
          %2729 = vmatprep.subr.bf16.mxu0 0
          %2730 = vmatpush1.bf16.msra.mxu0 0
          %2731 = vmatprep.subr.bf16.mxu0 0
          %2732 = vmatpush1.bf16.msra.mxu0 0
          %2733 = vmatprep.subr.bf16.mxu0 0
          %2734 = vmatpush1.bf16.msra.mxu0 0
          %2735 = vmatprep.subr.bf16.mxu0 0
          %2736 = vmatpush1.bf16.msra.mxu0 %v2719
          %2737 = vmatprep.subr.bf16.mxu0 0
          %2738 = vmatpush1.bf16.msra.mxu0 %v2718
          %2739 = vmatprep.subr.bf16.mxu0 0
          %2740 = vmatpush1.bf16.msra.mxu0 %v2717
          %2741 = vmatprep.subr.bf16.mxu0 0
          %2742 = vmatpush1.bf16.msra.mxu0 %v2716
          %2743 = vmatprep.subr.bf16.mxu0 0
          %2744 = vmatpush2.bf16.msra.mxu0 0
          %2745 = vmatprep.subr.bf16.mxu0 0
          %2746 = vmatpush2.bf16.msra.mxu0 0
          %2747 = vmatprep.subr.bf16.mxu0 0
          %2748 = vmatpush2.bf16.msra.mxu0 0
          %2749 = vmatprep.subr.bf16.mxu0 0
          %2750 = vmatpush2.bf16.msra.mxu0 0
          %2751 = vmatprep.subr.bf16.mxu0 0
          %2752 = vmatpush2.bf16.msra.mxu0 0
          %2753 = vmatprep.subr.bf16.mxu0 0
          %2754 = vmatpush2.bf16.msra.mxu0 0
          %2755 = vmatprep.subr.bf16.mxu0 0
          %2756 = vmatpush2.bf16.msra.mxu0 0
          %2757 = vmatprep.subr.bf16.mxu0 0
          %2758 = vmatpush2.bf16.msra.mxu0 0
          %2759 = vmatprep.mubr.bf16.mxu0 0
          %2760 = vmatmul.mubr.bf16.gmra.mxu0 %v2725
          %v2761 = vpop.f32.mrf.mxu0
          %v2762 = vadd.f32 0.0, %v2761
          %v2763 = vpop.f32.mrf.mxu0
          %v2764 = vpop.f32.mrf.mxu0
          %v2765 = vpop.f32.mrf.mxu0
          %2766 = vdwg.mxu0
          %v2767 = vadd.f32 %v2688, %v2762
          %s2768 = sadd.s32 %s2272, 2
          %s2769 = smul.u32 %s2768, 16
          %s2770 = scalar_lea.vmem [#allocation5], %s2769
          %v2771 = vld [vmem:[%s2770] sm:$0xff]
          %v2772 = vld [vmem:[%s2770 + $0x8] sm:$0x3]
          %v2773 = vpack.c.bf16 %v2771, %v2771
          %s2774 = scalar_lea.vmem %s7, 192
          %v2775 = vld [vmem:[%s2774] sm:$0xf]
          %v2776 = vld [vmem:[%s2774 + $0x4] sm:$0xf]
          %v2777 = vld [vmem:[%s2774 + $0x8] sm:$0xf]
          %v2778 = vld [vmem:[%s2774 + $0xc] sm:$0xf]
          %v2779 = vld [vmem:[%s2774 + $0x10] sm:$0xf]
          %v2780 = vld [vmem:[%s2774 + $0x14] sm:$0xf]
          %v2781 = vld [vmem:[%s2774 + $0x18] sm:$0xf]
          %v2782 = vld [vmem:[%s2774 + $0x1c] sm:$0xf]
          %v2791 = vunpack.c.l.b16 %v2775
          %v2792 = vunpack.c.l.b16 %v2776
          %v2793 = vunpack.c.l.b16 %v2777
          %v2794 = vunpack.c.l.b16 %v2778
          %v2795 = vunpack.c.l.b16 %v2779
          %v2796 = vunpack.c.l.b16 %v2780
          %v2797 = vunpack.c.l.b16 %v2781
          %v2798 = vunpack.c.l.b16 %v2782
          %v2799 = vpack.c.b16 %v2792, %v2791
          %v2800 = vpack.c.b16 %v2794, %v2793
          %v2801 = vpack.c.b16 %v2796, %v2795
          %v2802 = vpack.c.b16 %v2798, %v2797
          %v2808 = vsel %vm2331, %v2773, 0
          %2810 = vmatprep.subr.bf16.mxu0 0
          %2811 = vmatpush1.bf16.msra.mxu0 0
          %2812 = vmatprep.subr.bf16.mxu0 0
          %2813 = vmatpush1.bf16.msra.mxu0 0
          %2814 = vmatprep.subr.bf16.mxu0 0
          %2815 = vmatpush1.bf16.msra.mxu0 0
          %2816 = vmatprep.subr.bf16.mxu0 0
          %2817 = vmatpush1.bf16.msra.mxu0 0
          %2818 = vmatprep.subr.bf16.mxu0 0
          %2819 = vmatpush1.bf16.msra.mxu0 %v2802
          %2820 = vmatprep.subr.bf16.mxu0 0
          %2821 = vmatpush1.bf16.msra.mxu0 %v2801
          %2822 = vmatprep.subr.bf16.mxu0 0
          %2823 = vmatpush1.bf16.msra.mxu0 %v2800
          %2824 = vmatprep.subr.bf16.mxu0 0
          %2825 = vmatpush1.bf16.msra.mxu0 %v2799
          %2826 = vmatprep.subr.bf16.mxu0 0
          %2827 = vmatpush2.bf16.msra.mxu0 0
          %2828 = vmatprep.subr.bf16.mxu0 0
          %2829 = vmatpush2.bf16.msra.mxu0 0
          %2830 = vmatprep.subr.bf16.mxu0 0
          %2831 = vmatpush2.bf16.msra.mxu0 0
          %2832 = vmatprep.subr.bf16.mxu0 0
          %2833 = vmatpush2.bf16.msra.mxu0 0
          %2834 = vmatprep.subr.bf16.mxu0 0
          %2835 = vmatpush2.bf16.msra.mxu0 0
          %2836 = vmatprep.subr.bf16.mxu0 0
          %2837 = vmatpush2.bf16.msra.mxu0 0
          %2838 = vmatprep.subr.bf16.mxu0 0
          %2839 = vmatpush2.bf16.msra.mxu0 0
          %2840 = vmatprep.subr.bf16.mxu0 0
          %2841 = vmatpush2.bf16.msra.mxu0 0
          %2842 = vmatprep.mubr.bf16.mxu0 0
          %2843 = vmatmul.mubr.bf16.gmra.mxu0 %v2808
          %v2844 = vpop.f32.mrf.mxu0
          %v2845 = vadd.f32 0.0, %v2844
          %v2846 = vpop.f32.mrf.mxu0
          %v2847 = vpop.f32.mrf.mxu0
          %v2848 = vpop.f32.mrf.mxu0
          %2849 = vdwg.mxu0
          %v2850 = vadd.f32 %v2767, %v2845
          %v2851 = vpack.c.bf16 %v2772, %v2771
          %s2852 = scalar_lea.vmem %s7, 224
          %v2853 = vld [vmem:[%s2852] sm:$0xf]
          %v2854 = vld [vmem:[%s2852 + $0x4] sm:$0xf]
          %v2855 = vld [vmem:[%s2852 + $0x8] sm:$0xf]
          %v2856 = vld [vmem:[%s2852 + $0xc] sm:$0xf]
          %v2857 = vld [vmem:[%s2852 + $0x10] sm:$0xf]
          %v2858 = vld [vmem:[%s2852 + $0x14] sm:$0xf]
          %v2859 = vld [vmem:[%s2852 + $0x18] sm:$0xf]
          %v2860 = vld [vmem:[%s2852 + $0x1c] sm:$0xf]
          %v2862 = vshrl.u32 %v2851, 16
          %v2864 = vshll.u32 %v2851, 16
          %v2866 = vrot.slane %v2864, 1
          %v2867 = vor.u32 %v2862, %v2866
          %v2876 = vunpack.c.l.b16 %v2853
          %v2877 = vunpack.c.l.b16 %v2854
          %v2878 = vunpack.c.l.b16 %v2855
          %v2879 = vunpack.c.l.b16 %v2856
          %v2880 = vunpack.c.l.b16 %v2857
          %v2881 = vunpack.c.l.b16 %v2858
          %v2882 = vunpack.c.l.b16 %v2859
          %v2883 = vunpack.c.l.b16 %v2860
          %v2884 = vpack.c.b16 %v2877, %v2876
          %v2885 = vpack.c.b16 %v2879, %v2878
          %v2886 = vpack.c.b16 %v2881, %v2880
          %v2887 = vpack.c.b16 %v2883, %v2882
          %v2893 = vsel %vm2331, %v2867, 0
          %2895 = vmatprep.subr.bf16.mxu0 0
          %2896 = vmatpush1.bf16.msra.mxu0 0
          %2897 = vmatprep.subr.bf16.mxu0 0
          %2898 = vmatpush1.bf16.msra.mxu0 0
          %2899 = vmatprep.subr.bf16.mxu0 0
          %2900 = vmatpush1.bf16.msra.mxu0 0
          %2901 = vmatprep.subr.bf16.mxu0 0
          %2902 = vmatpush1.bf16.msra.mxu0 0
          %2903 = vmatprep.subr.bf16.mxu0 0
          %2904 = vmatpush1.bf16.msra.mxu0 %v2887
          %2905 = vmatprep.subr.bf16.mxu0 0
          %2906 = vmatpush1.bf16.msra.mxu0 %v2886
          %2907 = vmatprep.subr.bf16.mxu0 0
          %2908 = vmatpush1.bf16.msra.mxu0 %v2885
          %2909 = vmatprep.subr.bf16.mxu0 0
          %2910 = vmatpush1.bf16.msra.mxu0 %v2884
          %2911 = vmatprep.subr.bf16.mxu0 0
          %2912 = vmatpush2.bf16.msra.mxu0 0
          %2913 = vmatprep.subr.bf16.mxu0 0
          %2914 = vmatpush2.bf16.msra.mxu0 0
          %2915 = vmatprep.subr.bf16.mxu0 0
          %2916 = vmatpush2.bf16.msra.mxu0 0
          %2917 = vmatprep.subr.bf16.mxu0 0
          %2918 = vmatpush2.bf16.msra.mxu0 0
          %2919 = vmatprep.subr.bf16.mxu0 0
          %2920 = vmatpush2.bf16.msra.mxu0 0
          %2921 = vmatprep.subr.bf16.mxu0 0
          %2922 = vmatpush2.bf16.msra.mxu0 0
          %2923 = vmatprep.subr.bf16.mxu0 0
          %2924 = vmatpush2.bf16.msra.mxu0 0
          %2925 = vmatprep.subr.bf16.mxu0 0
          %2926 = vmatpush2.bf16.msra.mxu0 0
          %2927 = vmatprep.mubr.bf16.mxu0 0
          %2928 = vmatmul.mubr.bf16.gmra.mxu0 %v2893
          %v2929 = vpop.f32.mrf.mxu0
          %v2930 = vadd.f32 0.0, %v2929
          %v2931 = vpop.f32.mrf.mxu0
          %v2932 = vpop.f32.mrf.mxu0
          %v2933 = vpop.f32.mrf.mxu0
          %2934 = vdwg.mxu0
          %v2935 = vadd.f32 %v2850, %v2930
          %s2936 = scalar_lea.vmem %s7, 256
          %v2937 = vld [vmem:[%s2936] sm:$0xf]
          %v2938 = vld [vmem:[%s2936 + $0x4] sm:$0xf]
          %v2939 = vld [vmem:[%s2936 + $0x8] sm:$0xf]
          %v2940 = vld [vmem:[%s2936 + $0xc] sm:$0xf]
          %v2941 = vld [vmem:[%s2936 + $0x10] sm:$0xf]
          %v2942 = vld [vmem:[%s2936 + $0x14] sm:$0xf]
          %v2943 = vld [vmem:[%s2936 + $0x18] sm:$0xf]
          %v2944 = vld [vmem:[%s2936 + $0x1c] sm:$0xf]
          %v2946 = vrot.slane %v2851, 1
          %v2955 = vunpack.c.l.b16 %v2937
          %v2956 = vunpack.c.l.b16 %v2938
          %v2957 = vunpack.c.l.b16 %v2939
          %v2958 = vunpack.c.l.b16 %v2940
          %v2959 = vunpack.c.l.b16 %v2941
          %v2960 = vunpack.c.l.b16 %v2942
          %v2961 = vunpack.c.l.b16 %v2943
          %v2962 = vunpack.c.l.b16 %v2944
          %v2963 = vpack.c.b16 %v2956, %v2955
          %v2964 = vpack.c.b16 %v2958, %v2957
          %v2965 = vpack.c.b16 %v2960, %v2959
          %v2966 = vpack.c.b16 %v2962, %v2961
          %v2972 = vsel %vm2331, %v2946, 0
          %2974 = vmatprep.subr.bf16.mxu0 0
          %2975 = vmatpush1.bf16.msra.mxu0 0
          %2976 = vmatprep.subr.bf16.mxu0 0
          %2977 = vmatpush1.bf16.msra.mxu0 0
          %2978 = vmatprep.subr.bf16.mxu0 0
          %2979 = vmatpush1.bf16.msra.mxu0 0
          %2980 = vmatprep.subr.bf16.mxu0 0
          %2981 = vmatpush1.bf16.msra.mxu0 0
          %2982 = vmatprep.subr.bf16.mxu0 0
          %2983 = vmatpush1.bf16.msra.mxu0 %v2966
          %2984 = vmatprep.subr.bf16.mxu0 0
          %2985 = vmatpush1.bf16.msra.mxu0 %v2965
          %2986 = vmatprep.subr.bf16.mxu0 0
          %2987 = vmatpush1.bf16.msra.mxu0 %v2964
          %2988 = vmatprep.subr.bf16.mxu0 0
          %2989 = vmatpush1.bf16.msra.mxu0 %v2963
          %2990 = vmatprep.subr.bf16.mxu0 0
          %2991 = vmatpush2.bf16.msra.mxu0 0
          %2992 = vmatprep.subr.bf16.mxu0 0
          %2993 = vmatpush2.bf16.msra.mxu0 0
          %2994 = vmatprep.subr.bf16.mxu0 0
          %2995 = vmatpush2.bf16.msra.mxu0 0
          %2996 = vmatprep.subr.bf16.mxu0 0
          %2997 = vmatpush2.bf16.msra.mxu0 0
          %2998 = vmatprep.subr.bf16.mxu0 0
          %2999 = vmatpush2.bf16.msra.mxu0 0
          %3000 = vmatprep.subr.bf16.mxu0 0
          %3001 = vmatpush2.bf16.msra.mxu0 0
          %3002 = vmatprep.subr.bf16.mxu0 0
          %3003 = vmatpush2.bf16.msra.mxu0 0
          %3004 = vmatprep.subr.bf16.mxu0 0
          %3005 = vmatpush2.bf16.msra.mxu0 0
          %3006 = vmatprep.mubr.bf16.mxu0 0
          %3007 = vmatmul.mubr.bf16.gmra.mxu0 %v2972
          %v3008 = vpop.f32.mrf.mxu0
          %v3009 = vadd.f32 0.0, %v3008
          %v3010 = vpop.f32.mrf.mxu0
          %v3011 = vpop.f32.mrf.mxu0
          %v3012 = vpop.f32.mrf.mxu0
          %3013 = vdwg.mxu0
          %v3014 = vadd.f32 %v2935, %v3009
          %v3015 = vld [vmem:[%s8] sm:$0x1]
          %v3017 = vlaneseq
          %v3018 = vshrl.u32 %v3017, 7
          %v3019 = vsub.s32 0, %v3018
          %v3020 = vrot.slane %v3015, %v3019
          %v3022 = vadd.f32 %v3014, %v3020
          %s3023 = smul.u32 %s2272, 8
          %s3024 = scalar_lea.vmem [#allocation6], %s3023
          %3025 = vst.msk [vmem:[%s3024] sm:$0xff] %vm2331, %v3022
        $region113: #{net_forward.1} parent=79 // loop_footer
          %s2276 = sadd.s32 1, %s2272
        $region114: #{net_forward.1} parent=79 // loop_footer_branch
          %2271 = sbr.rel target = $region110
        $region115: #{net_forward.1} parent=79 // loop_exit
          _
        loop: start=0, step=1, limit=4
        $region116: #{net_forward.1} parent=79 // loop_pre_header
          _
        $region117: #{net_forward.1} parent=79 // loop_header
          %s3027 = sphi 0, %s3031
          %p3028 = scmp.ge.s32.totalorder %s3027, 4
        $region118: #{net_forward.1} parent=79 // loop_header_branch
          %3030 = sbr.rel (%p3028) target = $region122
        $region119: #{net_forward.1} parent=79 // loop_body
          %s3032 = smul.u32 %s3027, 2
          %s3033 = smul.u32 %s3032, 8
          %s3034 = scalar_lea.vmem [#allocation6], %s3033
          %v3035 = vld [vmem:[%s3034] ss:$2 sm:$0xf]
          %s3036 = scalar_lea.vmem %s3034, 1 [#allocation6]
          %v3037 = vld [vmem:[%s3036] ss:$2 sm:$0xf]
          %s3038 = sadd.s32 %s3032, 1
          %s3039 = smul.u32 %s3038, 8
          %s3040 = scalar_lea.vmem [#allocation6], %s3039
          %v3041 = vld [vmem:[%s3040] ss:$2 sm:$0xf]
          %s3042 = scalar_lea.vmem %s3040, 1 [#allocation6]
          %v3043 = vld [vmem:[%s3042] ss:$2 sm:$0xf]
          %v3044 = vmax.f32 %v3035, %v3037
          %v3045 = vmax.f32 %v3041, %v3043
          %v3046 = vmax.f32 %v3044, %v3045
          %v3047 = vmax.f32 %v3046, 0.0
          %s3048 = smul.u32 %s3027, 4
          %s3049 = scalar_lea.vmem [#allocation7], %s3048
          %vm3050 = vcmask 519168
          %3051 = vst.msk [vmem:[%s3049] sm:$0xf] %vm3050, %v3047
        $region120: #{net_forward.1} parent=79 // loop_footer
          %s3031 = sadd.s32 1, %s3027
        $region121: #{net_forward.1} parent=79 // loop_footer_branch
          %3026 = sbr.rel target = $region117
        $region122: #{net_forward.1} parent=79 // loop_exit
          _
        %v3052 = vld [vmem:[%s12] sm:$0x1]
        %v3053 = vld [vmem:[#allocation7] sm:$0xf]
        %v3054 = vpack.c.bf16 %v3053, %v3053
        %v3055 = vld [vmem:[%s9] sm:$0xf]
        %v3056 = vld [vmem:[%s9 + $0x4] sm:$0xf]
        %v3057 = vld [vmem:[%s9 + $0x8] sm:$0xf]
        %v3058 = vld [vmem:[%s9 + $0xc] sm:$0xf]
        %v3059 = vld [vmem:[%s9 + $0x10] sm:$0xf]
        %v3060 = vld [vmem:[%s9 + $0x14] sm:$0xf]
        %v3061 = vld [vmem:[%s9 + $0x18] sm:$0xf]
        %v3062 = vld [vmem:[%s9 + $0x1c] sm:$0xf]
        %s3063 = scalar_lea.vmem %s9, 32
        %v3064 = vld [vmem:[%s3063] sm:$0xf]
        %v3065 = vld [vmem:[%s3063 + $0x4] sm:$0xf]
        %v3066 = vld [vmem:[%s3063 + $0x8] sm:$0xf]
        %v3067 = vld [vmem:[%s3063 + $0xc] sm:$0xf]
        %v3068 = vld [vmem:[%s3063 + $0x10] sm:$0xf]
        %v3069 = vld [vmem:[%s3063 + $0x14] sm:$0xf]
        %v3070 = vld [vmem:[%s3063 + $0x18] sm:$0xf]
        %v3071 = vld [vmem:[%s3063 + $0x1c] sm:$0xf]
        %v3073 = vshrl.u32 %v3054, 16
        %v3075 = vshll.u32 %v3054, 16
        %v3077 = vrot.slane %v3075, 1
        %v3078 = vor.u32 %v3073, %v3077
        %v3087 = vunpack.c.l.b16 %v3064
        %v3088 = vunpack.c.l.b16 %v3065
        %v3089 = vunpack.c.l.b16 %v3066
        %v3090 = vunpack.c.l.b16 %v3067
        %v3091 = vunpack.c.l.b16 %v3068
        %v3092 = vunpack.c.l.b16 %v3069
        %v3093 = vunpack.c.l.b16 %v3070
        %v3094 = vunpack.c.l.b16 %v3071
        %v3095 = vpack.c.b16 %v3088, %v3087
        %v3096 = vpack.c.b16 %v3090, %v3089
        %v3097 = vpack.c.b16 %v3092, %v3091
        %v3098 = vpack.c.b16 %v3094, %v3093
        %vm3103 = vcmask 523264
        %v3105 = vsel %vm3103, %v3078, 0
        %3107 = vmatprep.subr.bf16.mxu0 0
        %3108 = vmatpush1.bf16.msra.mxu0 0
        %3109 = vmatprep.subr.bf16.mxu0 0
        %3110 = vmatpush1.bf16.msra.mxu0 0
        %3111 = vmatprep.subr.bf16.mxu0 0
        %3112 = vmatpush1.bf16.msra.mxu0 0
        %3113 = vmatprep.subr.bf16.mxu0 0
        %3114 = vmatpush1.bf16.msra.mxu0 0
        %3115 = vmatprep.subr.bf16.mxu0 0
        %3116 = vmatpush1.bf16.msra.mxu0 %v3098
        %3117 = vmatprep.subr.bf16.mxu0 0
        %3118 = vmatpush1.bf16.msra.mxu0 %v3097
        %3119 = vmatprep.subr.bf16.mxu0 0
        %3120 = vmatpush1.bf16.msra.mxu0 %v3096
        %3121 = vmatprep.subr.bf16.mxu0 0
        %3122 = vmatpush1.bf16.msra.mxu0 %v3095
        %3123 = vmatprep.subr.bf16.mxu0 0
        %3124 = vmatpush2.bf16.msra.mxu0 0
        %3125 = vmatprep.subr.bf16.mxu0 0
        %3126 = vmatpush2.bf16.msra.mxu0 0
        %3127 = vmatprep.subr.bf16.mxu0 0
        %3128 = vmatpush2.bf16.msra.mxu0 0
        %3129 = vmatprep.subr.bf16.mxu0 0
        %3130 = vmatpush2.bf16.msra.mxu0 0
        %3131 = vmatprep.subr.bf16.mxu0 0
        %3132 = vmatpush2.bf16.msra.mxu0 0
        %3133 = vmatprep.subr.bf16.mxu0 0
        %3134 = vmatpush2.bf16.msra.mxu0 0
        %3135 = vmatprep.subr.bf16.mxu0 0
        %3136 = vmatpush2.bf16.msra.mxu0 0
        %3137 = vmatprep.subr.bf16.mxu0 0
        %3138 = vmatpush2.bf16.msra.mxu0 0
        %3139 = vmatprep.mubr.bf16.mxu0 0
        %3140 = vmatmul.mubr.bf16.gmra.mxu0 %v3105
        %v3141 = vpop.f32.mrf.mxu0
        %v3142 = vadd.f32 0.0, %v3141
        %v3143 = vpop.f32.mrf.mxu0
        %v3144 = vpop.f32.mrf.mxu0
        %v3145 = vpop.f32.mrf.mxu0
        %3146 = vdwg.mxu0
        %v3155 = vunpack.c.l.b16 %v3055
        %v3156 = vunpack.c.l.b16 %v3056
        %v3157 = vunpack.c.l.b16 %v3057
        %v3158 = vunpack.c.l.b16 %v3058
        %v3159 = vunpack.c.l.b16 %v3059
        %v3160 = vunpack.c.l.b16 %v3060
        %v3161 = vunpack.c.l.b16 %v3061
        %v3162 = vunpack.c.l.b16 %v3062
        %v3163 = vpack.c.b16 %v3156, %v3155
        %v3164 = vpack.c.b16 %v3158, %v3157
        %v3165 = vpack.c.b16 %v3160, %v3159
        %v3166 = vpack.c.b16 %v3162, %v3161
        %v3171 = vsel %vm3103, %v3054, 0
        %3173 = vmatprep.subr.bf16.mxu0 0
        %3174 = vmatpush1.bf16.msra.mxu0 0
        %3175 = vmatprep.subr.bf16.mxu0 0
        %3176 = vmatpush1.bf16.msra.mxu0 0
        %3177 = vmatprep.subr.bf16.mxu0 0
        %3178 = vmatpush1.bf16.msra.mxu0 0
        %3179 = vmatprep.subr.bf16.mxu0 0
        %3180 = vmatpush1.bf16.msra.mxu0 0
        %3181 = vmatprep.subr.bf16.mxu0 0
        %3182 = vmatpush1.bf16.msra.mxu0 %v3166
        %3183 = vmatprep.subr.bf16.mxu0 0
        %3184 = vmatpush1.bf16.msra.mxu0 %v3165
        %3185 = vmatprep.subr.bf16.mxu0 0
        %3186 = vmatpush1.bf16.msra.mxu0 %v3164
        %3187 = vmatprep.subr.bf16.mxu0 0
        %3188 = vmatpush1.bf16.msra.mxu0 %v3163
        %3189 = vmatprep.subr.bf16.mxu0 0
        %3190 = vmatpush2.bf16.msra.mxu0 0
        %3191 = vmatprep.subr.bf16.mxu0 0
        %3192 = vmatpush2.bf16.msra.mxu0 0
        %3193 = vmatprep.subr.bf16.mxu0 0
        %3194 = vmatpush2.bf16.msra.mxu0 0
        %3195 = vmatprep.subr.bf16.mxu0 0
        %3196 = vmatpush2.bf16.msra.mxu0 0
        %3197 = vmatprep.subr.bf16.mxu0 0
        %3198 = vmatpush2.bf16.msra.mxu0 0
        %3199 = vmatprep.subr.bf16.mxu0 0
        %3200 = vmatpush2.bf16.msra.mxu0 0
        %3201 = vmatprep.subr.bf16.mxu0 0
        %3202 = vmatpush2.bf16.msra.mxu0 0
        %3203 = vmatprep.subr.bf16.mxu0 0
        %3204 = vmatpush2.bf16.msra.mxu0 0
        %3205 = vmatprep.mubr.bf16.mxu0 0
        %3206 = vmatmul.mubr.bf16.gmra.mxu0 %v3171
        %v3207 = vpop.f32.mrf.mxu0
        %v3208 = vadd.f32 %v3142, %v3207
        %v3209 = vpop.f32.mrf.mxu0
        %v3210 = vpop.f32.mrf.mxu0
        %v3211 = vpop.f32.mrf.mxu0
        %3212 = vdwg.mxu0
        %s3213 = scalar_lea.vmem %s9, 64
        %v3214 = vld [vmem:[%s3213] sm:$0xf]
        %v3215 = vld [vmem:[%s3213 + $0x4] sm:$0xf]
        %v3216 = vld [vmem:[%s3213 + $0x8] sm:$0xf]
        %v3217 = vld [vmem:[%s3213 + $0xc] sm:$0xf]
        %v3218 = vld [vmem:[%s3213 + $0x10] sm:$0xf]
        %v3219 = vld [vmem:[%s3213 + $0x14] sm:$0xf]
        %v3220 = vld [vmem:[%s3213 + $0x18] sm:$0xf]
        %v3221 = vld [vmem:[%s3213 + $0x1c] sm:$0xf]
        %v3223 = vrot.slane %v3054, 1
        %v3232 = vunpack.c.l.b16 %v3214
        %v3233 = vunpack.c.l.b16 %v3215
        %v3234 = vunpack.c.l.b16 %v3216
        %v3235 = vunpack.c.l.b16 %v3217
        %v3236 = vunpack.c.l.b16 %v3218
        %v3237 = vunpack.c.l.b16 %v3219
        %v3238 = vunpack.c.l.b16 %v3220
        %v3239 = vunpack.c.l.b16 %v3221
        %v3240 = vpack.c.b16 %v3233, %v3232
        %v3241 = vpack.c.b16 %v3235, %v3234
        %v3242 = vpack.c.b16 %v3237, %v3236
        %v3243 = vpack.c.b16 %v3239, %v3238
        %v3249 = vsel %vm3103, %v3223, 0
        %3251 = vmatprep.subr.bf16.mxu0 0
        %3252 = vmatpush1.bf16.msra.mxu0 0
        %3253 = vmatprep.subr.bf16.mxu0 0
        %3254 = vmatpush1.bf16.msra.mxu0 0
        %3255 = vmatprep.subr.bf16.mxu0 0
        %3256 = vmatpush1.bf16.msra.mxu0 0
        %3257 = vmatprep.subr.bf16.mxu0 0
        %3258 = vmatpush1.bf16.msra.mxu0 0
        %3259 = vmatprep.subr.bf16.mxu0 0
        %3260 = vmatpush1.bf16.msra.mxu0 %v3243
        %3261 = vmatprep.subr.bf16.mxu0 0
        %3262 = vmatpush1.bf16.msra.mxu0 %v3242
        %3263 = vmatprep.subr.bf16.mxu0 0
        %3264 = vmatpush1.bf16.msra.mxu0 %v3241
        %3265 = vmatprep.subr.bf16.mxu0 0
        %3266 = vmatpush1.bf16.msra.mxu0 %v3240
        %3267 = vmatprep.subr.bf16.mxu0 0
        %3268 = vmatpush2.bf16.msra.mxu0 0
        %3269 = vmatprep.subr.bf16.mxu0 0
        %3270 = vmatpush2.bf16.msra.mxu0 0
        %3271 = vmatprep.subr.bf16.mxu0 0
        %3272 = vmatpush2.bf16.msra.mxu0 0
        %3273 = vmatprep.subr.bf16.mxu0 0
        %3274 = vmatpush2.bf16.msra.mxu0 0
        %3275 = vmatprep.subr.bf16.mxu0 0
        %3276 = vmatpush2.bf16.msra.mxu0 0
        %3277 = vmatprep.subr.bf16.mxu0 0
        %3278 = vmatpush2.bf16.msra.mxu0 0
        %3279 = vmatprep.subr.bf16.mxu0 0
        %3280 = vmatpush2.bf16.msra.mxu0 0
        %3281 = vmatprep.subr.bf16.mxu0 0
        %3282 = vmatpush2.bf16.msra.mxu0 0
        %3283 = vmatprep.mubr.bf16.mxu0 0
        %3284 = vmatmul.mubr.bf16.gmra.mxu0 %v3249
        %v3285 = vpop.f32.mrf.mxu0
        %v3286 = vadd.f32 0.0, %v3285
        %v3287 = vpop.f32.mrf.mxu0
        %v3288 = vpop.f32.mrf.mxu0
        %v3289 = vpop.f32.mrf.mxu0
        %3290 = vdwg.mxu0
        %v3291 = vadd.f32 %v3208, %v3286
        %s3292 = scalar_lea.vmem [#allocation7], 4
        %v3293 = vld [vmem:[%s3292] sm:$0xf]
        %v3294 = vpack.c.bf16 %v3293, %v3293
        %s3295 = scalar_lea.vmem %s9, 96
        %v3296 = vld [vmem:[%s3295] sm:$0xf]
        %v3297 = vld [vmem:[%s3295 + $0x4] sm:$0xf]
        %v3298 = vld [vmem:[%s3295 + $0x8] sm:$0xf]
        %v3299 = vld [vmem:[%s3295 + $0xc] sm:$0xf]
        %v3300 = vld [vmem:[%s3295 + $0x10] sm:$0xf]
        %v3301 = vld [vmem:[%s3295 + $0x14] sm:$0xf]
        %v3302 = vld [vmem:[%s3295 + $0x18] sm:$0xf]
        %v3303 = vld [vmem:[%s3295 + $0x1c] sm:$0xf]
        %v3312 = vunpack.c.l.b16 %v3296
        %v3313 = vunpack.c.l.b16 %v3297
        %v3314 = vunpack.c.l.b16 %v3298
        %v3315 = vunpack.c.l.b16 %v3299
        %v3316 = vunpack.c.l.b16 %v3300
        %v3317 = vunpack.c.l.b16 %v3301
        %v3318 = vunpack.c.l.b16 %v3302
        %v3319 = vunpack.c.l.b16 %v3303
        %v3320 = vpack.c.b16 %v3313, %v3312
        %v3321 = vpack.c.b16 %v3315, %v3314
        %v3322 = vpack.c.b16 %v3317, %v3316
        %v3323 = vpack.c.b16 %v3319, %v3318
        %v3329 = vsel %vm3103, %v3294, 0
        %3331 = vmatprep.subr.bf16.mxu0 0
        %3332 = vmatpush1.bf16.msra.mxu0 0
        %3333 = vmatprep.subr.bf16.mxu0 0
        %3334 = vmatpush1.bf16.msra.mxu0 0
        %3335 = vmatprep.subr.bf16.mxu0 0
        %3336 = vmatpush1.bf16.msra.mxu0 0
        %3337 = vmatprep.subr.bf16.mxu0 0
        %3338 = vmatpush1.bf16.msra.mxu0 0
        %3339 = vmatprep.subr.bf16.mxu0 0
        %3340 = vmatpush1.bf16.msra.mxu0 %v3323
        %3341 = vmatprep.subr.bf16.mxu0 0
        %3342 = vmatpush1.bf16.msra.mxu0 %v3322
        %3343 = vmatprep.subr.bf16.mxu0 0
        %3344 = vmatpush1.bf16.msra.mxu0 %v3321
        %3345 = vmatprep.subr.bf16.mxu0 0
        %3346 = vmatpush1.bf16.msra.mxu0 %v3320
        %3347 = vmatprep.subr.bf16.mxu0 0
        %3348 = vmatpush2.bf16.msra.mxu0 0
        %3349 = vmatprep.subr.bf16.mxu0 0
        %3350 = vmatpush2.bf16.msra.mxu0 0
        %3351 = vmatprep.subr.bf16.mxu0 0
        %3352 = vmatpush2.bf16.msra.mxu0 0
        %3353 = vmatprep.subr.bf16.mxu0 0
        %3354 = vmatpush2.bf16.msra.mxu0 0
        %3355 = vmatprep.subr.bf16.mxu0 0
        %3356 = vmatpush2.bf16.msra.mxu0 0
        %3357 = vmatprep.subr.bf16.mxu0 0
        %3358 = vmatpush2.bf16.msra.mxu0 0
        %3359 = vmatprep.subr.bf16.mxu0 0
        %3360 = vmatpush2.bf16.msra.mxu0 0
        %3361 = vmatprep.subr.bf16.mxu0 0
        %3362 = vmatpush2.bf16.msra.mxu0 0
        %3363 = vmatprep.mubr.bf16.mxu0 0
        %3364 = vmatmul.mubr.bf16.gmra.mxu0 %v3329
        %v3365 = vpop.f32.mrf.mxu0
        %v3366 = vadd.f32 0.0, %v3365
        %v3367 = vpop.f32.mrf.mxu0
        %v3368 = vpop.f32.mrf.mxu0
        %v3369 = vpop.f32.mrf.mxu0
        %3370 = vdwg.mxu0
        %v3371 = vadd.f32 %v3291, %v3366
        %s3372 = scalar_lea.vmem %s9, 128
        %v3373 = vld [vmem:[%s3372] sm:$0xf]
        %v3374 = vld [vmem:[%s3372 + $0x4] sm:$0xf]
        %v3375 = vld [vmem:[%s3372 + $0x8] sm:$0xf]
        %v3376 = vld [vmem:[%s3372 + $0xc] sm:$0xf]
        %v3377 = vld [vmem:[%s3372 + $0x10] sm:$0xf]
        %v3378 = vld [vmem:[%s3372 + $0x14] sm:$0xf]
        %v3379 = vld [vmem:[%s3372 + $0x18] sm:$0xf]
        %v3380 = vld [vmem:[%s3372 + $0x1c] sm:$0xf]
        %v3381 = vshrl.u32 %v3294, 16
        %v3383 = vshll.u32 %v3294, 16
        %v3385 = vrot.slane %v3383, 1
        %v3386 = vor.u32 %v3381, %v3385
        %v3395 = vunpack.c.l.b16 %v3373
        %v3396 = vunpack.c.l.b16 %v3374
        %v3397 = vunpack.c.l.b16 %v3375
        %v3398 = vunpack.c.l.b16 %v3376
        %v3399 = vunpack.c.l.b16 %v3377
        %v3400 = vunpack.c.l.b16 %v3378
        %v3401 = vunpack.c.l.b16 %v3379
        %v3402 = vunpack.c.l.b16 %v3380
        %v3403 = vpack.c.b16 %v3396, %v3395
        %v3404 = vpack.c.b16 %v3398, %v3397
        %v3405 = vpack.c.b16 %v3400, %v3399
        %v3406 = vpack.c.b16 %v3402, %v3401
        %v3412 = vsel %vm3103, %v3386, 0
        %3414 = vmatprep.subr.bf16.mxu0 0
        %3415 = vmatpush1.bf16.msra.mxu0 0
        %3416 = vmatprep.subr.bf16.mxu0 0
        %3417 = vmatpush1.bf16.msra.mxu0 0
        %3418 = vmatprep.subr.bf16.mxu0 0
        %3419 = vmatpush1.bf16.msra.mxu0 0
        %3420 = vmatprep.subr.bf16.mxu0 0
        %3421 = vmatpush1.bf16.msra.mxu0 0
        %3422 = vmatprep.subr.bf16.mxu0 0
        %3423 = vmatpush1.bf16.msra.mxu0 %v3406
        %3424 = vmatprep.subr.bf16.mxu0 0
        %3425 = vmatpush1.bf16.msra.mxu0 %v3405
        %3426 = vmatprep.subr.bf16.mxu0 0
        %3427 = vmatpush1.bf16.msra.mxu0 %v3404
        %3428 = vmatprep.subr.bf16.mxu0 0
        %3429 = vmatpush1.bf16.msra.mxu0 %v3403
        %3430 = vmatprep.subr.bf16.mxu0 0
        %3431 = vmatpush2.bf16.msra.mxu0 0
        %3432 = vmatprep.subr.bf16.mxu0 0
        %3433 = vmatpush2.bf16.msra.mxu0 0
        %3434 = vmatprep.subr.bf16.mxu0 0
        %3435 = vmatpush2.bf16.msra.mxu0 0
        %3436 = vmatprep.subr.bf16.mxu0 0
        %3437 = vmatpush2.bf16.msra.mxu0 0
        %3438 = vmatprep.subr.bf16.mxu0 0
        %3439 = vmatpush2.bf16.msra.mxu0 0
        %3440 = vmatprep.subr.bf16.mxu0 0
        %3441 = vmatpush2.bf16.msra.mxu0 0
        %3442 = vmatprep.subr.bf16.mxu0 0
        %3443 = vmatpush2.bf16.msra.mxu0 0
        %3444 = vmatprep.subr.bf16.mxu0 0
        %3445 = vmatpush2.bf16.msra.mxu0 0
        %3446 = vmatprep.mubr.bf16.mxu0 0
        %3447 = vmatmul.mubr.bf16.gmra.mxu0 %v3412
        %v3448 = vpop.f32.mrf.mxu0
        %v3449 = vadd.f32 0.0, %v3448
        %v3450 = vpop.f32.mrf.mxu0
        %v3451 = vpop.f32.mrf.mxu0
        %v3452 = vpop.f32.mrf.mxu0
        %3453 = vdwg.mxu0
        %v3454 = vadd.f32 %v3371, %v3449
        %s3455 = scalar_lea.vmem %s9, 160
        %v3456 = vld [vmem:[%s3455] sm:$0xf]
        %v3457 = vld [vmem:[%s3455 + $0x4] sm:$0xf]
        %v3458 = vld [vmem:[%s3455 + $0x8] sm:$0xf]
        %v3459 = vld [vmem:[%s3455 + $0xc] sm:$0xf]
        %v3460 = vld [vmem:[%s3455 + $0x10] sm:$0xf]
        %v3461 = vld [vmem:[%s3455 + $0x14] sm:$0xf]
        %v3462 = vld [vmem:[%s3455 + $0x18] sm:$0xf]
        %v3463 = vld [vmem:[%s3455 + $0x1c] sm:$0xf]
        %v3465 = vrot.slane %v3294, 1
        %v3474 = vunpack.c.l.b16 %v3456
        %v3475 = vunpack.c.l.b16 %v3457
        %v3476 = vunpack.c.l.b16 %v3458
        %v3477 = vunpack.c.l.b16 %v3459
        %v3478 = vunpack.c.l.b16 %v3460
        %v3479 = vunpack.c.l.b16 %v3461
        %v3480 = vunpack.c.l.b16 %v3462
        %v3481 = vunpack.c.l.b16 %v3463
        %v3482 = vpack.c.b16 %v3475, %v3474
        %v3483 = vpack.c.b16 %v3477, %v3476
        %v3484 = vpack.c.b16 %v3479, %v3478
        %v3485 = vpack.c.b16 %v3481, %v3480
        %v3491 = vsel %vm3103, %v3465, 0
        %3493 = vmatprep.subr.bf16.mxu0 0
        %3494 = vmatpush1.bf16.msra.mxu0 0
        %3495 = vmatprep.subr.bf16.mxu0 0
        %3496 = vmatpush1.bf16.msra.mxu0 0
        %3497 = vmatprep.subr.bf16.mxu0 0
        %3498 = vmatpush1.bf16.msra.mxu0 0
        %3499 = vmatprep.subr.bf16.mxu0 0
        %3500 = vmatpush1.bf16.msra.mxu0 0
        %3501 = vmatprep.subr.bf16.mxu0 0
        %3502 = vmatpush1.bf16.msra.mxu0 %v3485
        %3503 = vmatprep.subr.bf16.mxu0 0
        %3504 = vmatpush1.bf16.msra.mxu0 %v3484
        %3505 = vmatprep.subr.bf16.mxu0 0
        %3506 = vmatpush1.bf16.msra.mxu0 %v3483
        %3507 = vmatprep.subr.bf16.mxu0 0
        %3508 = vmatpush1.bf16.msra.mxu0 %v3482
        %3509 = vmatprep.subr.bf16.mxu0 0
        %3510 = vmatpush2.bf16.msra.mxu0 0
        %3511 = vmatprep.subr.bf16.mxu0 0
        %3512 = vmatpush2.bf16.msra.mxu0 0
        %3513 = vmatprep.subr.bf16.mxu0 0
        %3514 = vmatpush2.bf16.msra.mxu0 0
        %3515 = vmatprep.subr.bf16.mxu0 0
        %3516 = vmatpush2.bf16.msra.mxu0 0
        %3517 = vmatprep.subr.bf16.mxu0 0
        %3518 = vmatpush2.bf16.msra.mxu0 0
        %3519 = vmatprep.subr.bf16.mxu0 0
        %3520 = vmatpush2.bf16.msra.mxu0 0
        %3521 = vmatprep.subr.bf16.mxu0 0
        %3522 = vmatpush2.bf16.msra.mxu0 0
        %3523 = vmatprep.subr.bf16.mxu0 0
        %3524 = vmatpush2.bf16.msra.mxu0 0
        %3525 = vmatprep.mubr.bf16.mxu0 0
        %3526 = vmatmul.mubr.bf16.gmra.mxu0 %v3491
        %v3527 = vpop.f32.mrf.mxu0
        %v3528 = vadd.f32 0.0, %v3527
        %v3529 = vpop.f32.mrf.mxu0
        %v3530 = vpop.f32.mrf.mxu0
        %v3531 = vpop.f32.mrf.mxu0
        %3532 = vdwg.mxu0
        %v3533 = vadd.f32 %v3454, %v3528
        %s3534 = scalar_lea.vmem [#allocation7], 8
        %v3535 = vld [vmem:[%s3534] sm:$0xf]
        %v3536 = vpack.c.bf16 %v3535, %v3535
        %s3537 = scalar_lea.vmem %s9, 192
        %v3538 = vld [vmem:[%s3537] sm:$0xf]
        %v3539 = vld [vmem:[%s3537 + $0x4] sm:$0xf]
        %v3540 = vld [vmem:[%s3537 + $0x8] sm:$0xf]
        %v3541 = vld [vmem:[%s3537 + $0xc] sm:$0xf]
        %v3542 = vld [vmem:[%s3537 + $0x10] sm:$0xf]
        %v3543 = vld [vmem:[%s3537 + $0x14] sm:$0xf]
        %v3544 = vld [vmem:[%s3537 + $0x18] sm:$0xf]
        %v3545 = vld [vmem:[%s3537 + $0x1c] sm:$0xf]
        %v3554 = vunpack.c.l.b16 %v3538
        %v3555 = vunpack.c.l.b16 %v3539
        %v3556 = vunpack.c.l.b16 %v3540
        %v3557 = vunpack.c.l.b16 %v3541
        %v3558 = vunpack.c.l.b16 %v3542
        %v3559 = vunpack.c.l.b16 %v3543
        %v3560 = vunpack.c.l.b16 %v3544
        %v3561 = vunpack.c.l.b16 %v3545
        %v3562 = vpack.c.b16 %v3555, %v3554
        %v3563 = vpack.c.b16 %v3557, %v3556
        %v3564 = vpack.c.b16 %v3559, %v3558
        %v3565 = vpack.c.b16 %v3561, %v3560
        %v3571 = vsel %vm3103, %v3536, 0
        %3573 = vmatprep.subr.bf16.mxu0 0
        %3574 = vmatpush1.bf16.msra.mxu0 0
        %3575 = vmatprep.subr.bf16.mxu0 0
        %3576 = vmatpush1.bf16.msra.mxu0 0
        %3577 = vmatprep.subr.bf16.mxu0 0
        %3578 = vmatpush1.bf16.msra.mxu0 0
        %3579 = vmatprep.subr.bf16.mxu0 0
        %3580 = vmatpush1.bf16.msra.mxu0 0
        %3581 = vmatprep.subr.bf16.mxu0 0
        %3582 = vmatpush1.bf16.msra.mxu0 %v3565
        %3583 = vmatprep.subr.bf16.mxu0 0
        %3584 = vmatpush1.bf16.msra.mxu0 %v3564
        %3585 = vmatprep.subr.bf16.mxu0 0
        %3586 = vmatpush1.bf16.msra.mxu0 %v3563
        %3587 = vmatprep.subr.bf16.mxu0 0
        %3588 = vmatpush1.bf16.msra.mxu0 %v3562
        %3589 = vmatprep.subr.bf16.mxu0 0
        %3590 = vmatpush2.bf16.msra.mxu0 0
        %3591 = vmatprep.subr.bf16.mxu0 0
        %3592 = vmatpush2.bf16.msra.mxu0 0
        %3593 = vmatprep.subr.bf16.mxu0 0
        %3594 = vmatpush2.bf16.msra.mxu0 0
        %3595 = vmatprep.subr.bf16.mxu0 0
        %3596 = vmatpush2.bf16.msra.mxu0 0
        %3597 = vmatprep.subr.bf16.mxu0 0
        %3598 = vmatpush2.bf16.msra.mxu0 0
        %3599 = vmatprep.subr.bf16.mxu0 0
        %3600 = vmatpush2.bf16.msra.mxu0 0
        %3601 = vmatprep.subr.bf16.mxu0 0
        %3602 = vmatpush2.bf16.msra.mxu0 0
        %3603 = vmatprep.subr.bf16.mxu0 0
        %3604 = vmatpush2.bf16.msra.mxu0 0
        %3605 = vmatprep.mubr.bf16.mxu0 0
        %3606 = vmatmul.mubr.bf16.gmra.mxu0 %v3571
        %v3607 = vpop.f32.mrf.mxu0
        %v3608 = vadd.f32 0.0, %v3607
        %v3609 = vpop.f32.mrf.mxu0
        %v3610 = vpop.f32.mrf.mxu0
        %v3611 = vpop.f32.mrf.mxu0
        %3612 = vdwg.mxu0
        %v3613 = vadd.f32 %v3533, %v3608
        %s3614 = scalar_lea.vmem %s9, 224
        %v3615 = vld [vmem:[%s3614] sm:$0xf]
        %v3616 = vld [vmem:[%s3614 + $0x4] sm:$0xf]
        %v3617 = vld [vmem:[%s3614 + $0x8] sm:$0xf]
        %v3618 = vld [vmem:[%s3614 + $0xc] sm:$0xf]
        %v3619 = vld [vmem:[%s3614 + $0x10] sm:$0xf]
        %v3620 = vld [vmem:[%s3614 + $0x14] sm:$0xf]
        %v3621 = vld [vmem:[%s3614 + $0x18] sm:$0xf]
        %v3622 = vld [vmem:[%s3614 + $0x1c] sm:$0xf]
        %v3623 = vshrl.u32 %v3536, 16
        %v3625 = vshll.u32 %v3536, 16
        %v3627 = vrot.slane %v3625, 1
        %v3628 = vor.u32 %v3623, %v3627
        %v3637 = vunpack.c.l.b16 %v3615
        %v3638 = vunpack.c.l.b16 %v3616
        %v3639 = vunpack.c.l.b16 %v3617
        %v3640 = vunpack.c.l.b16 %v3618
        %v3641 = vunpack.c.l.b16 %v3619
        %v3642 = vunpack.c.l.b16 %v3620
        %v3643 = vunpack.c.l.b16 %v3621
        %v3644 = vunpack.c.l.b16 %v3622
        %v3645 = vpack.c.b16 %v3638, %v3637
        %v3646 = vpack.c.b16 %v3640, %v3639
        %v3647 = vpack.c.b16 %v3642, %v3641
        %v3648 = vpack.c.b16 %v3644, %v3643
        %v3654 = vsel %vm3103, %v3628, 0
        %3656 = vmatprep.subr.bf16.mxu0 0
        %3657 = vmatpush1.bf16.msra.mxu0 0
        %3658 = vmatprep.subr.bf16.mxu0 0
        %3659 = vmatpush1.bf16.msra.mxu0 0
        %3660 = vmatprep.subr.bf16.mxu0 0
        %3661 = vmatpush1.bf16.msra.mxu0 0
        %3662 = vmatprep.subr.bf16.mxu0 0
        %3663 = vmatpush1.bf16.msra.mxu0 0
        %3664 = vmatprep.subr.bf16.mxu0 0
        %3665 = vmatpush1.bf16.msra.mxu0 %v3648
        %3666 = vmatprep.subr.bf16.mxu0 0
        %3667 = vmatpush1.bf16.msra.mxu0 %v3647
        %3668 = vmatprep.subr.bf16.mxu0 0
        %3669 = vmatpush1.bf16.msra.mxu0 %v3646
        %3670 = vmatprep.subr.bf16.mxu0 0
        %3671 = vmatpush1.bf16.msra.mxu0 %v3645
        %3672 = vmatprep.subr.bf16.mxu0 0
        %3673 = vmatpush2.bf16.msra.mxu0 0
        %3674 = vmatprep.subr.bf16.mxu0 0
        %3675 = vmatpush2.bf16.msra.mxu0 0
        %3676 = vmatprep.subr.bf16.mxu0 0
        %3677 = vmatpush2.bf16.msra.mxu0 0
        %3678 = vmatprep.subr.bf16.mxu0 0
        %3679 = vmatpush2.bf16.msra.mxu0 0
        %3680 = vmatprep.subr.bf16.mxu0 0
        %3681 = vmatpush2.bf16.msra.mxu0 0
        %3682 = vmatprep.subr.bf16.mxu0 0
        %3683 = vmatpush2.bf16.msra.mxu0 0
        %3684 = vmatprep.subr.bf16.mxu0 0
        %3685 = vmatpush2.bf16.msra.mxu0 0
        %3686 = vmatprep.subr.bf16.mxu0 0
        %3687 = vmatpush2.bf16.msra.mxu0 0
        %3688 = vmatprep.mubr.bf16.mxu0 0
        %3689 = vmatmul.mubr.bf16.gmra.mxu0 %v3654
        %v3690 = vpop.f32.mrf.mxu0
        %v3691 = vadd.f32 0.0, %v3690
        %v3692 = vpop.f32.mrf.mxu0
        %v3693 = vpop.f32.mrf.mxu0
        %v3694 = vpop.f32.mrf.mxu0
        %3695 = vdwg.mxu0
        %v3696 = vadd.f32 %v3613, %v3691
        %s3697 = scalar_lea.vmem %s9, 256
        %v3698 = vld [vmem:[%s3697] sm:$0xf]
        %v3699 = vld [vmem:[%s3697 + $0x4] sm:$0xf]
        %v3700 = vld [vmem:[%s3697 + $0x8] sm:$0xf]
        %v3701 = vld [vmem:[%s3697 + $0xc] sm:$0xf]
        %v3702 = vld [vmem:[%s3697 + $0x10] sm:$0xf]
        %v3703 = vld [vmem:[%s3697 + $0x14] sm:$0xf]
        %v3704 = vld [vmem:[%s3697 + $0x18] sm:$0xf]
        %v3705 = vld [vmem:[%s3697 + $0x1c] sm:$0xf]
        %v3707 = vrot.slane %v3536, 1
        %v3716 = vunpack.c.l.b16 %v3698
        %v3717 = vunpack.c.l.b16 %v3699
        %v3718 = vunpack.c.l.b16 %v3700
        %v3719 = vunpack.c.l.b16 %v3701
        %v3720 = vunpack.c.l.b16 %v3702
        %v3721 = vunpack.c.l.b16 %v3703
        %v3722 = vunpack.c.l.b16 %v3704
        %v3723 = vunpack.c.l.b16 %v3705
        %v3724 = vpack.c.b16 %v3717, %v3716
        %v3725 = vpack.c.b16 %v3719, %v3718
        %v3726 = vpack.c.b16 %v3721, %v3720
        %v3727 = vpack.c.b16 %v3723, %v3722
        %v3733 = vsel %vm3103, %v3707, 0
        %3735 = vmatprep.subr.bf16.mxu0 0
        %3736 = vmatpush1.bf16.msra.mxu0 0
        %3737 = vmatprep.subr.bf16.mxu0 0
        %3738 = vmatpush1.bf16.msra.mxu0 0
        %3739 = vmatprep.subr.bf16.mxu0 0
        %3740 = vmatpush1.bf16.msra.mxu0 0
        %3741 = vmatprep.subr.bf16.mxu0 0
        %3742 = vmatpush1.bf16.msra.mxu0 0
        %3743 = vmatprep.subr.bf16.mxu0 0
        %3744 = vmatpush1.bf16.msra.mxu0 %v3727
        %3745 = vmatprep.subr.bf16.mxu0 0
        %3746 = vmatpush1.bf16.msra.mxu0 %v3726
        %3747 = vmatprep.subr.bf16.mxu0 0
        %3748 = vmatpush1.bf16.msra.mxu0 %v3725
        %3749 = vmatprep.subr.bf16.mxu0 0
        %3750 = vmatpush1.bf16.msra.mxu0 %v3724
        %3751 = vmatprep.subr.bf16.mxu0 0
        %3752 = vmatpush2.bf16.msra.mxu0 0
        %3753 = vmatprep.subr.bf16.mxu0 0
        %3754 = vmatpush2.bf16.msra.mxu0 0
        %3755 = vmatprep.subr.bf16.mxu0 0
        %3756 = vmatpush2.bf16.msra.mxu0 0
        %3757 = vmatprep.subr.bf16.mxu0 0
        %3758 = vmatpush2.bf16.msra.mxu0 0
        %3759 = vmatprep.subr.bf16.mxu0 0
        %3760 = vmatpush2.bf16.msra.mxu0 0
        %3761 = vmatprep.subr.bf16.mxu0 0
        %3762 = vmatpush2.bf16.msra.mxu0 0
        %3763 = vmatprep.subr.bf16.mxu0 0
        %3764 = vmatpush2.bf16.msra.mxu0 0
        %3765 = vmatprep.subr.bf16.mxu0 0
        %3766 = vmatpush2.bf16.msra.mxu0 0
        %3767 = vmatprep.mubr.bf16.mxu0 0
        %3768 = vmatmul.mubr.bf16.gmra.mxu0 %v3733
        %v3769 = vpop.f32.mrf.mxu0
        %v3770 = vadd.f32 0.0, %v3769
        %v3771 = vpop.f32.mrf.mxu0
        %v3772 = vpop.f32.mrf.mxu0
        %v3773 = vpop.f32.mrf.mxu0
        %3774 = vdwg.mxu0
        %v3775 = vadd.f32 %v3696, %v3770
        %v3776 = vld [vmem:[%s10] sm:$0x1]
        %v3778 = vlaneseq
        %v3779 = vshrl.u32 %v3778, 7
        %v3780 = vsub.s32 0, %v3779
        %v3781 = vrot.slane %v3776, %v3780
        %v3783 = vadd.f32 %v3775, %v3781
        %v3784 = vmax.f32 %v3783, 0.0
        %v3785 = vpack.c.bf16 %v3784, %v3784
        %v3786 = vld [vmem:[%s11] sm:$0xf]
        %v3787 = vld [vmem:[%s11 + $0x4] sm:$0xf]
        %v3788 = vld [vmem:[%s11 + $0x8] sm:$0xf]
        %v3789 = vld [vmem:[%s11 + $0xc] sm:$0xf]
        %v3790 = vld [vmem:[%s11 + $0x10] sm:$0xf]
        %v3791 = vld [vmem:[%s11 + $0x14] sm:$0xf]
        %v3792 = vld [vmem:[%s11 + $0x18] sm:$0xf]
        %v3793 = vld [vmem:[%s11 + $0x1c] sm:$0xf]
        %v3794 = vld [vmem:[%s11 + $0x20] sm:$0xf]
        %v3795 = vld [vmem:[%s11 + $0x24] sm:$0xf]
        %v3796 = vld [vmem:[%s11 + $0x28] sm:$0xf]
        %v3797 = vld [vmem:[%s11 + $0x2c] sm:$0xf]
        %v3798 = vld [vmem:[%s11 + $0x30] sm:$0xf]
        %v3799 = vld [vmem:[%s11 + $0x34] sm:$0xf]
        %v3800 = vld [vmem:[%s11 + $0x38] sm:$0xf]
        %v3801 = vld [vmem:[%s11 + $0x3c] sm:$0xf]
        %v3818 = vunpack.c.l.b16 %v3786
        %v3819 = vunpack.c.l.b16 %v3787
        %v3820 = vunpack.c.l.b16 %v3788
        %v3821 = vunpack.c.l.b16 %v3789
        %v3822 = vunpack.c.l.b16 %v3790
        %v3823 = vunpack.c.l.b16 %v3791
        %v3824 = vunpack.c.l.b16 %v3792
        %v3825 = vunpack.c.l.b16 %v3793
        %v3826 = vunpack.c.l.b16 %v3794
        %v3827 = vunpack.c.l.b16 %v3795
        %v3828 = vunpack.c.l.b16 %v3796
        %v3829 = vunpack.c.l.b16 %v3797
        %v3830 = vunpack.c.l.b16 %v3798
        %v3831 = vunpack.c.l.b16 %v3799
        %v3832 = vunpack.c.l.b16 %v3800
        %v3833 = vunpack.c.l.b16 %v3801
        %v3834 = vpack.c.b16 %v3819, %v3818
        %v3835 = vpack.c.b16 %v3821, %v3820
        %v3836 = vpack.c.b16 %v3823, %v3822
        %v3837 = vpack.c.b16 %v3825, %v3824
        %v3838 = vpack.c.b16 %v3827, %v3826
        %v3839 = vpack.c.b16 %v3829, %v3828
        %v3840 = vpack.c.b16 %v3831, %v3830
        %v3841 = vpack.c.b16 %v3833, %v3832
        %3850 = vmatprep.subr.bf16.mxu0 0
        %3851 = vmatpush1.bf16.msra.mxu0 %v3841
        %3852 = vmatprep.subr.bf16.mxu0 0
        %3853 = vmatpush1.bf16.msra.mxu0 %v3840
        %3854 = vmatprep.subr.bf16.mxu0 0
        %3855 = vmatpush1.bf16.msra.mxu0 %v3839
        %3856 = vmatprep.subr.bf16.mxu0 0
        %3857 = vmatpush1.bf16.msra.mxu0 %v3838
        %3858 = vmatprep.subr.bf16.mxu0 0
        %3859 = vmatpush1.bf16.msra.mxu0 %v3837
        %3860 = vmatprep.subr.bf16.mxu0 0
        %3861 = vmatpush1.bf16.msra.mxu0 %v3836
        %3862 = vmatprep.subr.bf16.mxu0 0
        %3863 = vmatpush1.bf16.msra.mxu0 %v3835
        %3864 = vmatprep.subr.bf16.mxu0 0
        %3865 = vmatpush1.bf16.msra.mxu0 %v3834
        %3866 = vmatprep.subr.bf16.mxu0 0
        %3867 = vmatpush2.bf16.msra.mxu0 0
        %3868 = vmatprep.subr.bf16.mxu0 0
        %3869 = vmatpush2.bf16.msra.mxu0 0
        %3870 = vmatprep.subr.bf16.mxu0 0
        %3871 = vmatpush2.bf16.msra.mxu0 0
        %3872 = vmatprep.subr.bf16.mxu0 0
        %3873 = vmatpush2.bf16.msra.mxu0 0
        %3874 = vmatprep.subr.bf16.mxu0 0
        %3875 = vmatpush2.bf16.msra.mxu0 0
        %3876 = vmatprep.subr.bf16.mxu0 0
        %3877 = vmatpush2.bf16.msra.mxu0 0
        %3878 = vmatprep.subr.bf16.mxu0 0
        %3879 = vmatpush2.bf16.msra.mxu0 0
        %3880 = vmatprep.subr.bf16.mxu0 0
        %3881 = vmatpush2.bf16.msra.mxu0 0
        %3882 = vmatprep.mubr.bf16.mxu0 0
        %3883 = vmatmul.mubr.bf16.gmra.mxu0 %v3785
        %v3884 = vpop.f32.mrf.mxu0
        %v3885 = vadd.f32 0.0, %v3884
        %v3886 = vpop.f32.mrf.mxu0
        %v3887 = vpop.f32.mrf.mxu0
        %v3888 = vpop.f32.mrf.mxu0
        %3889 = vdwg.mxu0
        %v3890 = vadd.f32 %v3052, %v3885
        %s3891 = scalar_lea.vmem %s11, 64
        %v3892 = vld [vmem:[%s3891] sm:$0xf]
        %v3893 = vld [vmem:[%s3891 + $0x4] sm:$0xf]
        %v3894 = vld [vmem:[%s3891 + $0x8] sm:$0xf]
        %v3895 = vld [vmem:[%s3891 + $0xc] sm:$0xf]
        %v3896 = vld [vmem:[%s3891 + $0x10] sm:$0xf]
        %v3897 = vld [vmem:[%s3891 + $0x14] sm:$0xf]
        %v3898 = vld [vmem:[%s3891 + $0x18] sm:$0xf]
        %v3899 = vld [vmem:[%s3891 + $0x1c] sm:$0xf]
        %v3900 = vld [vmem:[%s3891 + $0x20] sm:$0xf]
        %v3901 = vld [vmem:[%s3891 + $0x24] sm:$0xf]
        %v3902 = vld [vmem:[%s3891 + $0x28] sm:$0xf]
        %v3903 = vld [vmem:[%s3891 + $0x2c] sm:$0xf]
        %v3904 = vld [vmem:[%s3891 + $0x30] sm:$0xf]
        %v3905 = vld [vmem:[%s3891 + $0x34] sm:$0xf]
        %v3906 = vld [vmem:[%s3891 + $0x38] sm:$0xf]
        %v3907 = vld [vmem:[%s3891 + $0x3c] sm:$0xf]
        %v3909 = vshrl.u32 %v3785, 16
        %v3928 = vunpack.c.l.b16 %v3892
        %v3929 = vunpack.c.l.b16 %v3893
        %v3930 = vunpack.c.l.b16 %v3894
        %v3931 = vunpack.c.l.b16 %v3895
        %v3932 = vunpack.c.l.b16 %v3896
        %v3933 = vunpack.c.l.b16 %v3897
        %v3934 = vunpack.c.l.b16 %v3898
        %v3935 = vunpack.c.l.b16 %v3899
        %v3936 = vunpack.c.l.b16 %v3900
        %v3937 = vunpack.c.l.b16 %v3901
        %v3938 = vunpack.c.l.b16 %v3902
        %v3939 = vunpack.c.l.b16 %v3903
        %v3940 = vunpack.c.l.b16 %v3904
        %v3941 = vunpack.c.l.b16 %v3905
        %v3942 = vunpack.c.l.b16 %v3906
        %v3943 = vunpack.c.l.b16 %v3907
        %v3944 = vpack.c.b16 %v3929, %v3928
        %v3945 = vpack.c.b16 %v3931, %v3930
        %v3946 = vpack.c.b16 %v3933, %v3932
        %v3947 = vpack.c.b16 %v3935, %v3934
        %v3948 = vpack.c.b16 %v3937, %v3936
        %v3949 = vpack.c.b16 %v3939, %v3938
        %v3950 = vpack.c.b16 %v3941, %v3940
        %v3951 = vpack.c.b16 %v3943, %v3942
        %3960 = vmatprep.subr.bf16.mxu0 0
        %3961 = vmatpush1.bf16.msra.mxu0 %v3951
        %3962 = vmatprep.subr.bf16.mxu0 0
        %3963 = vmatpush1.bf16.msra.mxu0 %v3950
        %3964 = vmatprep.subr.bf16.mxu0 0
        %3965 = vmatpush1.bf16.msra.mxu0 %v3949
        %3966 = vmatprep.subr.bf16.mxu0 0
        %3967 = vmatpush1.bf16.msra.mxu0 %v3948
        %3968 = vmatprep.subr.bf16.mxu0 0
        %3969 = vmatpush1.bf16.msra.mxu0 %v3947
        %3970 = vmatprep.subr.bf16.mxu0 0
        %3971 = vmatpush1.bf16.msra.mxu0 %v3946
        %3972 = vmatprep.subr.bf16.mxu0 0
        %3973 = vmatpush1.bf16.msra.mxu0 %v3945
        %3974 = vmatprep.subr.bf16.mxu0 0
        %3975 = vmatpush1.bf16.msra.mxu0 %v3944
        %3976 = vmatprep.subr.bf16.mxu0 0
        %3977 = vmatpush2.bf16.msra.mxu0 0
        %3978 = vmatprep.subr.bf16.mxu0 0
        %3979 = vmatpush2.bf16.msra.mxu0 0
        %3980 = vmatprep.subr.bf16.mxu0 0
        %3981 = vmatpush2.bf16.msra.mxu0 0
        %3982 = vmatprep.subr.bf16.mxu0 0
        %3983 = vmatpush2.bf16.msra.mxu0 0
        %3984 = vmatprep.subr.bf16.mxu0 0
        %3985 = vmatpush2.bf16.msra.mxu0 0
        %3986 = vmatprep.subr.bf16.mxu0 0
        %3987 = vmatpush2.bf16.msra.mxu0 0
        %3988 = vmatprep.subr.bf16.mxu0 0
        %3989 = vmatpush2.bf16.msra.mxu0 0
        %3990 = vmatprep.subr.bf16.mxu0 0
        %3991 = vmatpush2.bf16.msra.mxu0 0
        %3992 = vmatprep.mubr.bf16.mxu0 0
        %3993 = vmatmul.mubr.bf16.gmra.mxu0 %v3909
        %v3994 = vpop.f32.mrf.mxu0
        %v3995 = vadd.f32 0.0, %v3994
        %v3996 = vpop.f32.mrf.mxu0
        %v3997 = vpop.f32.mrf.mxu0
        %v3998 = vpop.f32.mrf.mxu0
        %3999 = vdwg.mxu0
        %v4000 = vadd.f32 %v3890, %v3995
        %4001 = vmatprep.subr.bf16.mxu0 0
        %4002 = vmatpush1.bf16.msra.mxu0 0
        %4003 = vmatprep.subr.bf16.mxu0 0
        %4004 = vmatpush1.bf16.msra.mxu0 0
        %4005 = vmatprep.subr.bf16.mxu0 0
        %4006 = vmatpush1.bf16.msra.mxu0 0
        %4007 = vmatprep.subr.bf16.mxu0 0
        %4008 = vmatpush1.bf16.msra.mxu0 0
        %4009 = vmatprep.subr.bf16.mxu0 0
        %4010 = vmatpush1.bf16.msra.mxu0 %v3098
        %4011 = vmatprep.subr.bf16.mxu0 0
        %4012 = vmatpush1.bf16.msra.mxu0 %v3097
        %4013 = vmatprep.subr.bf16.mxu0 0
        %4014 = vmatpush1.bf16.msra.mxu0 %v3096
        %4015 = vmatprep.subr.bf16.mxu0 0
        %4016 = vmatpush1.bf16.msra.mxu0 %v3095
        %4017 = vmatprep.subr.bf16.mxu0 0
        %4018 = vmatpush2.bf16.msra.mxu0 0
        %4019 = vmatprep.subr.bf16.mxu0 0
        %4020 = vmatpush2.bf16.msra.mxu0 0
        %4021 = vmatprep.subr.bf16.mxu0 0
        %4022 = vmatpush2.bf16.msra.mxu0 0
        %4023 = vmatprep.subr.bf16.mxu0 0
        %4024 = vmatpush2.bf16.msra.mxu0 0
        %4025 = vmatprep.subr.bf16.mxu0 0
        %4026 = vmatpush2.bf16.msra.mxu0 0
        %4027 = vmatprep.subr.bf16.mxu0 0
        %4028 = vmatpush2.bf16.msra.mxu0 0
        %4029 = vmatprep.subr.bf16.mxu0 0
        %4030 = vmatpush2.bf16.msra.mxu0 0
        %4031 = vmatprep.subr.bf16.mxu0 0
        %4032 = vmatpush2.bf16.msra.mxu0 0
        %4033 = vmatprep.mubr.bf16.mxu0 0
        %4034 = vmatmul.mubr.bf16.gmra.mxu0 %v3412
        %v4035 = vpop.f32.mrf.mxu0
        %v4036 = vadd.f32 0.0, %v4035
        %v4037 = vpop.f32.mrf.mxu0
        %v4038 = vpop.f32.mrf.mxu0
        %v4039 = vpop.f32.mrf.mxu0
        %4040 = vdwg.mxu0
        %4041 = vmatprep.subr.bf16.mxu0 0
        %4042 = vmatpush1.bf16.msra.mxu0 0
        %4043 = vmatprep.subr.bf16.mxu0 0
        %4044 = vmatpush1.bf16.msra.mxu0 0
        %4045 = vmatprep.subr.bf16.mxu0 0
        %4046 = vmatpush1.bf16.msra.mxu0 0
        %4047 = vmatprep.subr.bf16.mxu0 0
        %4048 = vmatpush1.bf16.msra.mxu0 0
        %4049 = vmatprep.subr.bf16.mxu0 0
        %4050 = vmatpush1.bf16.msra.mxu0 %v3166
        %4051 = vmatprep.subr.bf16.mxu0 0
        %4052 = vmatpush1.bf16.msra.mxu0 %v3165
        %4053 = vmatprep.subr.bf16.mxu0 0
        %4054 = vmatpush1.bf16.msra.mxu0 %v3164
        %4055 = vmatprep.subr.bf16.mxu0 0
        %4056 = vmatpush1.bf16.msra.mxu0 %v3163
        %4057 = vmatprep.subr.bf16.mxu0 0
        %4058 = vmatpush2.bf16.msra.mxu0 0
        %4059 = vmatprep.subr.bf16.mxu0 0
        %4060 = vmatpush2.bf16.msra.mxu0 0
        %4061 = vmatprep.subr.bf16.mxu0 0
        %4062 = vmatpush2.bf16.msra.mxu0 0
        %4063 = vmatprep.subr.bf16.mxu0 0
        %4064 = vmatpush2.bf16.msra.mxu0 0
        %4065 = vmatprep.subr.bf16.mxu0 0
        %4066 = vmatpush2.bf16.msra.mxu0 0
        %4067 = vmatprep.subr.bf16.mxu0 0
        %4068 = vmatpush2.bf16.msra.mxu0 0
        %4069 = vmatprep.subr.bf16.mxu0 0
        %4070 = vmatpush2.bf16.msra.mxu0 0
        %4071 = vmatprep.subr.bf16.mxu0 0
        %4072 = vmatpush2.bf16.msra.mxu0 0
        %4073 = vmatprep.mubr.bf16.mxu0 0
        %4074 = vmatmul.mubr.bf16.gmra.mxu0 %v3329
        %v4075 = vpop.f32.mrf.mxu0
        %v4076 = vadd.f32 %v4036, %v4075
        %v4077 = vpop.f32.mrf.mxu0
        %v4078 = vpop.f32.mrf.mxu0
        %v4079 = vpop.f32.mrf.mxu0
        %4080 = vdwg.mxu0
        %4081 = vmatprep.subr.bf16.mxu0 0
        %4082 = vmatpush1.bf16.msra.mxu0 0
        %4083 = vmatprep.subr.bf16.mxu0 0
        %4084 = vmatpush1.bf16.msra.mxu0 0
        %4085 = vmatprep.subr.bf16.mxu0 0
        %4086 = vmatpush1.bf16.msra.mxu0 0
        %4087 = vmatprep.subr.bf16.mxu0 0
        %4088 = vmatpush1.bf16.msra.mxu0 0
        %4089 = vmatprep.subr.bf16.mxu0 0
        %4090 = vmatpush1.bf16.msra.mxu0 %v3243
        %4091 = vmatprep.subr.bf16.mxu0 0
        %4092 = vmatpush1.bf16.msra.mxu0 %v3242
        %4093 = vmatprep.subr.bf16.mxu0 0
        %4094 = vmatpush1.bf16.msra.mxu0 %v3241
        %4095 = vmatprep.subr.bf16.mxu0 0
        %4096 = vmatpush1.bf16.msra.mxu0 %v3240
        %4097 = vmatprep.subr.bf16.mxu0 0
        %4098 = vmatpush2.bf16.msra.mxu0 0
        %4099 = vmatprep.subr.bf16.mxu0 0
        %4100 = vmatpush2.bf16.msra.mxu0 0
        %4101 = vmatprep.subr.bf16.mxu0 0
        %4102 = vmatpush2.bf16.msra.mxu0 0
        %4103 = vmatprep.subr.bf16.mxu0 0
        %4104 = vmatpush2.bf16.msra.mxu0 0
        %4105 = vmatprep.subr.bf16.mxu0 0
        %4106 = vmatpush2.bf16.msra.mxu0 0
        %4107 = vmatprep.subr.bf16.mxu0 0
        %4108 = vmatpush2.bf16.msra.mxu0 0
        %4109 = vmatprep.subr.bf16.mxu0 0
        %4110 = vmatpush2.bf16.msra.mxu0 0
        %4111 = vmatprep.subr.bf16.mxu0 0
        %4112 = vmatpush2.bf16.msra.mxu0 0
        %4113 = vmatprep.mubr.bf16.mxu0 0
        %4114 = vmatmul.mubr.bf16.gmra.mxu0 %v3491
        %v4115 = vpop.f32.mrf.mxu0
        %v4116 = vadd.f32 0.0, %v4115
        %v4117 = vpop.f32.mrf.mxu0
        %v4118 = vpop.f32.mrf.mxu0
        %v4119 = vpop.f32.mrf.mxu0
        %4120 = vdwg.mxu0
        %v4121 = vadd.f32 %v4076, %v4116
        %4122 = vmatprep.subr.bf16.mxu0 0
        %4123 = vmatpush1.bf16.msra.mxu0 0
        %4124 = vmatprep.subr.bf16.mxu0 0
        %4125 = vmatpush1.bf16.msra.mxu0 0
        %4126 = vmatprep.subr.bf16.mxu0 0
        %4127 = vmatpush1.bf16.msra.mxu0 0
        %4128 = vmatprep.subr.bf16.mxu0 0
        %4129 = vmatpush1.bf16.msra.mxu0 0
        %4130 = vmatprep.subr.bf16.mxu0 0
        %4131 = vmatpush1.bf16.msra.mxu0 %v3323
        %4132 = vmatprep.subr.bf16.mxu0 0
        %4133 = vmatpush1.bf16.msra.mxu0 %v3322
        %4134 = vmatprep.subr.bf16.mxu0 0
        %4135 = vmatpush1.bf16.msra.mxu0 %v3321
        %4136 = vmatprep.subr.bf16.mxu0 0
        %4137 = vmatpush1.bf16.msra.mxu0 %v3320
        %4138 = vmatprep.subr.bf16.mxu0 0
        %4139 = vmatpush2.bf16.msra.mxu0 0
        %4140 = vmatprep.subr.bf16.mxu0 0
        %4141 = vmatpush2.bf16.msra.mxu0 0
        %4142 = vmatprep.subr.bf16.mxu0 0
        %4143 = vmatpush2.bf16.msra.mxu0 0
        %4144 = vmatprep.subr.bf16.mxu0 0
        %4145 = vmatpush2.bf16.msra.mxu0 0
        %4146 = vmatprep.subr.bf16.mxu0 0
        %4147 = vmatpush2.bf16.msra.mxu0 0
        %4148 = vmatprep.subr.bf16.mxu0 0
        %4149 = vmatpush2.bf16.msra.mxu0 0
        %4150 = vmatprep.subr.bf16.mxu0 0
        %4151 = vmatpush2.bf16.msra.mxu0 0
        %4152 = vmatprep.subr.bf16.mxu0 0
        %4153 = vmatpush2.bf16.msra.mxu0 0
        %4154 = vmatprep.mubr.bf16.mxu0 0
        %4155 = vmatmul.mubr.bf16.gmra.mxu0 %v3571
        %v4156 = vpop.f32.mrf.mxu0
        %v4157 = vadd.f32 0.0, %v4156
        %v4158 = vpop.f32.mrf.mxu0
        %v4159 = vpop.f32.mrf.mxu0
        %v4160 = vpop.f32.mrf.mxu0
        %4161 = vdwg.mxu0
        %v4162 = vadd.f32 %v4121, %v4157
        %4163 = vmatprep.subr.bf16.mxu0 0
        %4164 = vmatpush1.bf16.msra.mxu0 0
        %4165 = vmatprep.subr.bf16.mxu0 0
        %4166 = vmatpush1.bf16.msra.mxu0 0
        %4167 = vmatprep.subr.bf16.mxu0 0
        %4168 = vmatpush1.bf16.msra.mxu0 0
        %4169 = vmatprep.subr.bf16.mxu0 0
        %4170 = vmatpush1.bf16.msra.mxu0 0
        %4171 = vmatprep.subr.bf16.mxu0 0
        %4172 = vmatpush1.bf16.msra.mxu0 %v3406
        %4173 = vmatprep.subr.bf16.mxu0 0
        %4174 = vmatpush1.bf16.msra.mxu0 %v3405
        %4175 = vmatprep.subr.bf16.mxu0 0
        %4176 = vmatpush1.bf16.msra.mxu0 %v3404
        %4177 = vmatprep.subr.bf16.mxu0 0
        %4178 = vmatpush1.bf16.msra.mxu0 %v3403
        %4179 = vmatprep.subr.bf16.mxu0 0
        %4180 = vmatpush2.bf16.msra.mxu0 0
        %4181 = vmatprep.subr.bf16.mxu0 0
        %4182 = vmatpush2.bf16.msra.mxu0 0
        %4183 = vmatprep.subr.bf16.mxu0 0
        %4184 = vmatpush2.bf16.msra.mxu0 0
        %4185 = vmatprep.subr.bf16.mxu0 0
        %4186 = vmatpush2.bf16.msra.mxu0 0
        %4187 = vmatprep.subr.bf16.mxu0 0
        %4188 = vmatpush2.bf16.msra.mxu0 0
        %4189 = vmatprep.subr.bf16.mxu0 0
        %4190 = vmatpush2.bf16.msra.mxu0 0
        %4191 = vmatprep.subr.bf16.mxu0 0
        %4192 = vmatpush2.bf16.msra.mxu0 0
        %4193 = vmatprep.subr.bf16.mxu0 0
        %4194 = vmatpush2.bf16.msra.mxu0 0
        %4195 = vmatprep.mubr.bf16.mxu0 0
        %4196 = vmatmul.mubr.bf16.gmra.mxu0 %v3654
        %v4197 = vpop.f32.mrf.mxu0
        %v4198 = vadd.f32 0.0, %v4197
        %v4199 = vpop.f32.mrf.mxu0
        %v4200 = vpop.f32.mrf.mxu0
        %v4201 = vpop.f32.mrf.mxu0
        %4202 = vdwg.mxu0
        %v4203 = vadd.f32 %v4162, %v4198
        %4204 = vmatprep.subr.bf16.mxu0 0
        %4205 = vmatpush1.bf16.msra.mxu0 0
        %4206 = vmatprep.subr.bf16.mxu0 0
        %4207 = vmatpush1.bf16.msra.mxu0 0
        %4208 = vmatprep.subr.bf16.mxu0 0
        %4209 = vmatpush1.bf16.msra.mxu0 0
        %4210 = vmatprep.subr.bf16.mxu0 0
        %4211 = vmatpush1.bf16.msra.mxu0 0
        %4212 = vmatprep.subr.bf16.mxu0 0
        %4213 = vmatpush1.bf16.msra.mxu0 %v3485
        %4214 = vmatprep.subr.bf16.mxu0 0
        %4215 = vmatpush1.bf16.msra.mxu0 %v3484
        %4216 = vmatprep.subr.bf16.mxu0 0
        %4217 = vmatpush1.bf16.msra.mxu0 %v3483
        %4218 = vmatprep.subr.bf16.mxu0 0
        %4219 = vmatpush1.bf16.msra.mxu0 %v3482
        %4220 = vmatprep.subr.bf16.mxu0 0
        %4221 = vmatpush2.bf16.msra.mxu0 0
        %4222 = vmatprep.subr.bf16.mxu0 0
        %4223 = vmatpush2.bf16.msra.mxu0 0
        %4224 = vmatprep.subr.bf16.mxu0 0
        %4225 = vmatpush2.bf16.msra.mxu0 0
        %4226 = vmatprep.subr.bf16.mxu0 0
        %4227 = vmatpush2.bf16.msra.mxu0 0
        %4228 = vmatprep.subr.bf16.mxu0 0
        %4229 = vmatpush2.bf16.msra.mxu0 0
        %4230 = vmatprep.subr.bf16.mxu0 0
        %4231 = vmatpush2.bf16.msra.mxu0 0
        %4232 = vmatprep.subr.bf16.mxu0 0
        %4233 = vmatpush2.bf16.msra.mxu0 0
        %4234 = vmatprep.subr.bf16.mxu0 0
        %4235 = vmatpush2.bf16.msra.mxu0 0
        %4236 = vmatprep.mubr.bf16.mxu0 0
        %4237 = vmatmul.mubr.bf16.gmra.mxu0 %v3733
        %v4238 = vpop.f32.mrf.mxu0
        %v4239 = vadd.f32 0.0, %v4238
        %v4240 = vpop.f32.mrf.mxu0
        %v4241 = vpop.f32.mrf.mxu0
        %v4242 = vpop.f32.mrf.mxu0
        %4243 = vdwg.mxu0
        %v4244 = vadd.f32 %v4203, %v4239
        %s4245 = scalar_lea.vmem [#allocation7], 12
        %v4246 = vld [vmem:[%s4245] sm:$0xf]
        %v4247 = vpack.c.bf16 %v4246, %v4246
        %v4249 = vsel %vm3103, %v4247, 0
        %4251 = vmatprep.subr.bf16.mxu0 0
        %4252 = vmatpush1.bf16.msra.mxu0 0
        %4253 = vmatprep.subr.bf16.mxu0 0
        %4254 = vmatpush1.bf16.msra.mxu0 0
        %4255 = vmatprep.subr.bf16.mxu0 0
        %4256 = vmatpush1.bf16.msra.mxu0 0
        %4257 = vmatprep.subr.bf16.mxu0 0
        %4258 = vmatpush1.bf16.msra.mxu0 0
        %4259 = vmatprep.subr.bf16.mxu0 0
        %4260 = vmatpush1.bf16.msra.mxu0 %v3565
        %4261 = vmatprep.subr.bf16.mxu0 0
        %4262 = vmatpush1.bf16.msra.mxu0 %v3564
        %4263 = vmatprep.subr.bf16.mxu0 0
        %4264 = vmatpush1.bf16.msra.mxu0 %v3563
        %4265 = vmatprep.subr.bf16.mxu0 0
        %4266 = vmatpush1.bf16.msra.mxu0 %v3562
        %4267 = vmatprep.subr.bf16.mxu0 0
        %4268 = vmatpush2.bf16.msra.mxu0 0
        %4269 = vmatprep.subr.bf16.mxu0 0
        %4270 = vmatpush2.bf16.msra.mxu0 0
        %4271 = vmatprep.subr.bf16.mxu0 0
        %4272 = vmatpush2.bf16.msra.mxu0 0
        %4273 = vmatprep.subr.bf16.mxu0 0
        %4274 = vmatpush2.bf16.msra.mxu0 0
        %4275 = vmatprep.subr.bf16.mxu0 0
        %4276 = vmatpush2.bf16.msra.mxu0 0
        %4277 = vmatprep.subr.bf16.mxu0 0
        %4278 = vmatpush2.bf16.msra.mxu0 0
        %4279 = vmatprep.subr.bf16.mxu0 0
        %4280 = vmatpush2.bf16.msra.mxu0 0
        %4281 = vmatprep.subr.bf16.mxu0 0
        %4282 = vmatpush2.bf16.msra.mxu0 0
        %4283 = vmatprep.mubr.bf16.mxu0 0
        %4284 = vmatmul.mubr.bf16.gmra.mxu0 %v4249
        %v4285 = vpop.f32.mrf.mxu0
        %v4286 = vadd.f32 0.0, %v4285
        %v4287 = vpop.f32.mrf.mxu0
        %v4288 = vpop.f32.mrf.mxu0
        %v4289 = vpop.f32.mrf.mxu0
        %4290 = vdwg.mxu0
        %v4291 = vadd.f32 %v4244, %v4286
        %v4292 = vshrl.u32 %v4247, 16
        %v4294 = vshll.u32 %v4247, 16
        %v4296 = vrot.slane %v4294, 1
        %v4297 = vor.u32 %v4292, %v4296
        %v4299 = vsel %vm3103, %v4297, 0
        %4301 = vmatprep.subr.bf16.mxu0 0
        %4302 = vmatpush1.bf16.msra.mxu0 0
        %4303 = vmatprep.subr.bf16.mxu0 0
        %4304 = vmatpush1.bf16.msra.mxu0 0
        %4305 = vmatprep.subr.bf16.mxu0 0
        %4306 = vmatpush1.bf16.msra.mxu0 0
        %4307 = vmatprep.subr.bf16.mxu0 0
        %4308 = vmatpush1.bf16.msra.mxu0 0
        %4309 = vmatprep.subr.bf16.mxu0 0
        %4310 = vmatpush1.bf16.msra.mxu0 %v3648
        %4311 = vmatprep.subr.bf16.mxu0 0
        %4312 = vmatpush1.bf16.msra.mxu0 %v3647
        %4313 = vmatprep.subr.bf16.mxu0 0
        %4314 = vmatpush1.bf16.msra.mxu0 %v3646
        %4315 = vmatprep.subr.bf16.mxu0 0
        %4316 = vmatpush1.bf16.msra.mxu0 %v3645
        %4317 = vmatprep.subr.bf16.mxu0 0
        %4318 = vmatpush2.bf16.msra.mxu0 0
        %4319 = vmatprep.subr.bf16.mxu0 0
        %4320 = vmatpush2.bf16.msra.mxu0 0
        %4321 = vmatprep.subr.bf16.mxu0 0
        %4322 = vmatpush2.bf16.msra.mxu0 0
        %4323 = vmatprep.subr.bf16.mxu0 0
        %4324 = vmatpush2.bf16.msra.mxu0 0
        %4325 = vmatprep.subr.bf16.mxu0 0
        %4326 = vmatpush2.bf16.msra.mxu0 0
        %4327 = vmatprep.subr.bf16.mxu0 0
        %4328 = vmatpush2.bf16.msra.mxu0 0
        %4329 = vmatprep.subr.bf16.mxu0 0
        %4330 = vmatpush2.bf16.msra.mxu0 0
        %4331 = vmatprep.subr.bf16.mxu0 0
        %4332 = vmatpush2.bf16.msra.mxu0 0
        %4333 = vmatprep.mubr.bf16.mxu0 0
        %4334 = vmatmul.mubr.bf16.gmra.mxu0 %v4299
        %v4335 = vpop.f32.mrf.mxu0
        %v4336 = vadd.f32 0.0, %v4335
        %v4337 = vpop.f32.mrf.mxu0
        %v4338 = vpop.f32.mrf.mxu0
        %v4339 = vpop.f32.mrf.mxu0
        %4340 = vdwg.mxu0
        %v4341 = vadd.f32 %v4291, %v4336
        %v4343 = vrot.slane %v4247, 1
        %v4345 = vsel %vm3103, %v4343, 0
        %4347 = vmatprep.subr.bf16.mxu0 0
        %4348 = vmatpush1.bf16.msra.mxu0 0
        %4349 = vmatprep.subr.bf16.mxu0 0
        %4350 = vmatpush1.bf16.msra.mxu0 0
        %4351 = vmatprep.subr.bf16.mxu0 0
        %4352 = vmatpush1.bf16.msra.mxu0 0
        %4353 = vmatprep.subr.bf16.mxu0 0
        %4354 = vmatpush1.bf16.msra.mxu0 0
        %4355 = vmatprep.subr.bf16.mxu0 0
        %4356 = vmatpush1.bf16.msra.mxu0 %v3727
        %4357 = vmatprep.subr.bf16.mxu0 0
        %4358 = vmatpush1.bf16.msra.mxu0 %v3726
        %4359 = vmatprep.subr.bf16.mxu0 0
        %4360 = vmatpush1.bf16.msra.mxu0 %v3725
        %4361 = vmatprep.subr.bf16.mxu0 0
        %4362 = vmatpush1.bf16.msra.mxu0 %v3724
        %4363 = vmatprep.subr.bf16.mxu0 0
        %4364 = vmatpush2.bf16.msra.mxu0 0
        %4365 = vmatprep.subr.bf16.mxu0 0
        %4366 = vmatpush2.bf16.msra.mxu0 0
        %4367 = vmatprep.subr.bf16.mxu0 0
        %4368 = vmatpush2.bf16.msra.mxu0 0
        %4369 = vmatprep.subr.bf16.mxu0 0
        %4370 = vmatpush2.bf16.msra.mxu0 0
        %4371 = vmatprep.subr.bf16.mxu0 0
        %4372 = vmatpush2.bf16.msra.mxu0 0
        %4373 = vmatprep.subr.bf16.mxu0 0
        %4374 = vmatpush2.bf16.msra.mxu0 0
        %4375 = vmatprep.subr.bf16.mxu0 0
        %4376 = vmatpush2.bf16.msra.mxu0 0
        %4377 = vmatprep.subr.bf16.mxu0 0
        %4378 = vmatpush2.bf16.msra.mxu0 0
        %4379 = vmatprep.mubr.bf16.mxu0 0
        %4380 = vmatmul.mubr.bf16.gmra.mxu0 %v4345
        %v4381 = vpop.f32.mrf.mxu0
        %v4382 = vadd.f32 0.0, %v4381
        %v4383 = vpop.f32.mrf.mxu0
        %v4384 = vpop.f32.mrf.mxu0
        %v4385 = vpop.f32.mrf.mxu0
        %4386 = vdwg.mxu0
        %v4387 = vadd.f32 %v4341, %v4382
        %v4388 = vadd.f32 %v4387, %v3781
        %v4389 = vmax.f32 %v4388, 0.0
        %v4390 = vpack.c.bf16 %v4389, %v4389
        %s4391 = scalar_lea.vmem %s11, 128
        %v4392 = vld [vmem:[%s4391] sm:$0xf]
        %v4393 = vld [vmem:[%s4391 + $0x4] sm:$0xf]
        %v4394 = vld [vmem:[%s4391 + $0x8] sm:$0xf]
        %v4395 = vld [vmem:[%s4391 + $0xc] sm:$0xf]
        %v4396 = vld [vmem:[%s4391 + $0x10] sm:$0xf]
        %v4397 = vld [vmem:[%s4391 + $0x14] sm:$0xf]
        %v4398 = vld [vmem:[%s4391 + $0x18] sm:$0xf]
        %v4399 = vld [vmem:[%s4391 + $0x1c] sm:$0xf]
        %v4400 = vld [vmem:[%s4391 + $0x20] sm:$0xf]
        %v4401 = vld [vmem:[%s4391 + $0x24] sm:$0xf]
        %v4402 = vld [vmem:[%s4391 + $0x28] sm:$0xf]
        %v4403 = vld [vmem:[%s4391 + $0x2c] sm:$0xf]
        %v4404 = vld [vmem:[%s4391 + $0x30] sm:$0xf]
        %v4405 = vld [vmem:[%s4391 + $0x34] sm:$0xf]
        %v4406 = vld [vmem:[%s4391 + $0x38] sm:$0xf]
        %v4407 = vld [vmem:[%s4391 + $0x3c] sm:$0xf]
        %v4424 = vunpack.c.l.b16 %v4392
        %v4425 = vunpack.c.l.b16 %v4393
        %v4426 = vunpack.c.l.b16 %v4394
        %v4427 = vunpack.c.l.b16 %v4395
        %v4428 = vunpack.c.l.b16 %v4396
        %v4429 = vunpack.c.l.b16 %v4397
        %v4430 = vunpack.c.l.b16 %v4398
        %v4431 = vunpack.c.l.b16 %v4399
        %v4432 = vunpack.c.l.b16 %v4400
        %v4433 = vunpack.c.l.b16 %v4401
        %v4434 = vunpack.c.l.b16 %v4402
        %v4435 = vunpack.c.l.b16 %v4403
        %v4436 = vunpack.c.l.b16 %v4404
        %v4437 = vunpack.c.l.b16 %v4405
        %v4438 = vunpack.c.l.b16 %v4406
        %v4439 = vunpack.c.l.b16 %v4407
        %v4440 = vpack.c.b16 %v4425, %v4424
        %v4441 = vpack.c.b16 %v4427, %v4426
        %v4442 = vpack.c.b16 %v4429, %v4428
        %v4443 = vpack.c.b16 %v4431, %v4430
        %v4444 = vpack.c.b16 %v4433, %v4432
        %v4445 = vpack.c.b16 %v4435, %v4434
        %v4446 = vpack.c.b16 %v4437, %v4436
        %v4447 = vpack.c.b16 %v4439, %v4438
        %4456 = vmatprep.subr.bf16.mxu0 0
        %4457 = vmatpush1.bf16.msra.mxu0 %v4447
        %4458 = vmatprep.subr.bf16.mxu0 0
        %4459 = vmatpush1.bf16.msra.mxu0 %v4446
        %4460 = vmatprep.subr.bf16.mxu0 0
        %4461 = vmatpush1.bf16.msra.mxu0 %v4445
        %4462 = vmatprep.subr.bf16.mxu0 0
        %4463 = vmatpush1.bf16.msra.mxu0 %v4444
        %4464 = vmatprep.subr.bf16.mxu0 0
        %4465 = vmatpush1.bf16.msra.mxu0 %v4443
        %4466 = vmatprep.subr.bf16.mxu0 0
        %4467 = vmatpush1.bf16.msra.mxu0 %v4442
        %4468 = vmatprep.subr.bf16.mxu0 0
        %4469 = vmatpush1.bf16.msra.mxu0 %v4441
        %4470 = vmatprep.subr.bf16.mxu0 0
        %4471 = vmatpush1.bf16.msra.mxu0 %v4440
        %4472 = vmatprep.subr.bf16.mxu0 0
        %4473 = vmatpush2.bf16.msra.mxu0 0
        %4474 = vmatprep.subr.bf16.mxu0 0
        %4475 = vmatpush2.bf16.msra.mxu0 0
        %4476 = vmatprep.subr.bf16.mxu0 0
        %4477 = vmatpush2.bf16.msra.mxu0 0
        %4478 = vmatprep.subr.bf16.mxu0 0
        %4479 = vmatpush2.bf16.msra.mxu0 0
        %4480 = vmatprep.subr.bf16.mxu0 0
        %4481 = vmatpush2.bf16.msra.mxu0 0
        %4482 = vmatprep.subr.bf16.mxu0 0
        %4483 = vmatpush2.bf16.msra.mxu0 0
        %4484 = vmatprep.subr.bf16.mxu0 0
        %4485 = vmatpush2.bf16.msra.mxu0 0
        %4486 = vmatprep.subr.bf16.mxu0 0
        %4487 = vmatpush2.bf16.msra.mxu0 0
        %4488 = vmatprep.mubr.bf16.mxu0 0
        %4489 = vmatmul.mubr.bf16.gmra.mxu0 %v4390
        %v4490 = vpop.f32.mrf.mxu0
        %v4491 = vadd.f32 0.0, %v4490
        %v4492 = vpop.f32.mrf.mxu0
        %v4493 = vpop.f32.mrf.mxu0
        %v4494 = vpop.f32.mrf.mxu0
        %4495 = vdwg.mxu0
        %v4496 = vadd.f32 %v4000, %v4491
        %s4497 = scalar_lea.vmem %s11, 192
        %v4498 = vld [vmem:[%s4497] sm:$0xf]
        %v4499 = vld [vmem:[%s4497 + $0x4] sm:$0xf]
        %v4500 = vld [vmem:[%s4497 + $0x8] sm:$0xf]
        %v4501 = vld [vmem:[%s4497 + $0xc] sm:$0xf]
        %v4502 = vld [vmem:[%s4497 + $0x10] sm:$0xf]
        %v4503 = vld [vmem:[%s4497 + $0x14] sm:$0xf]
        %v4504 = vld [vmem:[%s4497 + $0x18] sm:$0xf]
        %v4505 = vld [vmem:[%s4497 + $0x1c] sm:$0xf]
        %v4506 = vld [vmem:[%s4497 + $0x20] sm:$0xf]
        %v4507 = vld [vmem:[%s4497 + $0x24] sm:$0xf]
        %v4508 = vld [vmem:[%s4497 + $0x28] sm:$0xf]
        %v4509 = vld [vmem:[%s4497 + $0x2c] sm:$0xf]
        %v4510 = vld [vmem:[%s4497 + $0x30] sm:$0xf]
        %v4511 = vld [vmem:[%s4497 + $0x34] sm:$0xf]
        %v4512 = vld [vmem:[%s4497 + $0x38] sm:$0xf]
        %v4513 = vld [vmem:[%s4497 + $0x3c] sm:$0xf]
        %v4515 = vshrl.u32 %v4390, 16
        %v4534 = vunpack.c.l.b16 %v4498
        %v4535 = vunpack.c.l.b16 %v4499
        %v4536 = vunpack.c.l.b16 %v4500
        %v4537 = vunpack.c.l.b16 %v4501
        %v4538 = vunpack.c.l.b16 %v4502
        %v4539 = vunpack.c.l.b16 %v4503
        %v4540 = vunpack.c.l.b16 %v4504
        %v4541 = vunpack.c.l.b16 %v4505
        %v4542 = vunpack.c.l.b16 %v4506
        %v4543 = vunpack.c.l.b16 %v4507
        %v4544 = vunpack.c.l.b16 %v4508
        %v4545 = vunpack.c.l.b16 %v4509
        %v4546 = vunpack.c.l.b16 %v4510
        %v4547 = vunpack.c.l.b16 %v4511
        %v4548 = vunpack.c.l.b16 %v4512
        %v4549 = vunpack.c.l.b16 %v4513
        %v4550 = vpack.c.b16 %v4535, %v4534
        %v4551 = vpack.c.b16 %v4537, %v4536
        %v4552 = vpack.c.b16 %v4539, %v4538
        %v4553 = vpack.c.b16 %v4541, %v4540
        %v4554 = vpack.c.b16 %v4543, %v4542
        %v4555 = vpack.c.b16 %v4545, %v4544
        %v4556 = vpack.c.b16 %v4547, %v4546
        %v4557 = vpack.c.b16 %v4549, %v4548
        %4566 = vmatprep.subr.bf16.mxu0 0
        %4567 = vmatpush1.bf16.msra.mxu0 %v4557
        %4568 = vmatprep.subr.bf16.mxu0 0
        %4569 = vmatpush1.bf16.msra.mxu0 %v4556
        %4570 = vmatprep.subr.bf16.mxu0 0
        %4571 = vmatpush1.bf16.msra.mxu0 %v4555
        %4572 = vmatprep.subr.bf16.mxu0 0
        %4573 = vmatpush1.bf16.msra.mxu0 %v4554
        %4574 = vmatprep.subr.bf16.mxu0 0
        %4575 = vmatpush1.bf16.msra.mxu0 %v4553
        %4576 = vmatprep.subr.bf16.mxu0 0
        %4577 = vmatpush1.bf16.msra.mxu0 %v4552
        %4578 = vmatprep.subr.bf16.mxu0 0
        %4579 = vmatpush1.bf16.msra.mxu0 %v4551
        %4580 = vmatprep.subr.bf16.mxu0 0
        %4581 = vmatpush1.bf16.msra.mxu0 %v4550
        %4582 = vmatprep.subr.bf16.mxu0 0
        %4583 = vmatpush2.bf16.msra.mxu0 0
        %4584 = vmatprep.subr.bf16.mxu0 0
        %4585 = vmatpush2.bf16.msra.mxu0 0
        %4586 = vmatprep.subr.bf16.mxu0 0
        %4587 = vmatpush2.bf16.msra.mxu0 0
        %4588 = vmatprep.subr.bf16.mxu0 0
        %4589 = vmatpush2.bf16.msra.mxu0 0
        %4590 = vmatprep.subr.bf16.mxu0 0
        %4591 = vmatpush2.bf16.msra.mxu0 0
        %4592 = vmatprep.subr.bf16.mxu0 0
        %4593 = vmatpush2.bf16.msra.mxu0 0
        %4594 = vmatprep.subr.bf16.mxu0 0
        %4595 = vmatpush2.bf16.msra.mxu0 0
        %4596 = vmatprep.subr.bf16.mxu0 0
        %4597 = vmatpush2.bf16.msra.mxu0 0
        %4598 = vmatprep.mubr.bf16.mxu0 0
        %4599 = vmatmul.mubr.bf16.gmra.mxu0 %v4515
        %v4600 = vpop.f32.mrf.mxu0
        %v4601 = vadd.f32 0.0, %v4600
        %v4602 = vpop.f32.mrf.mxu0
        %v4603 = vpop.f32.mrf.mxu0
        %v4604 = vpop.f32.mrf.mxu0
        %4605 = vdwg.mxu0
        %v4606 = vadd.f32 %v4496, %v4601
        %v4607 = vmax.f32 %v4606, 0.0
        %v4608 = vpack.c.bf16 %v4607, %v4607
        %v4609 = vld [vmem:[%s13] sm:$0xf]
        %v4610 = vld [vmem:[%s13 + $0x4] sm:$0xf]
        %v4611 = vld [vmem:[%s13 + $0x8] sm:$0xf]
        %v4612 = vld [vmem:[%s13 + $0xc] sm:$0xf]
        %v4613 = vld [vmem:[%s13 + $0x10] sm:$0xf]
        %v4614 = vld [vmem:[%s13 + $0x14] sm:$0xf]
        %v4615 = vld [vmem:[%s13 + $0x18] sm:$0xf]
        %v4616 = vld [vmem:[%s13 + $0x1c] sm:$0xf]
        %v4617 = vld [vmem:[%s14] sm:$0x1]
        %v4626 = vunpack.c.l.b16 %v4609
        %v4627 = vunpack.c.l.b16 %v4610
        %v4628 = vunpack.c.l.b16 %v4611
        %v4629 = vunpack.c.l.b16 %v4612
        %v4630 = vunpack.c.l.b16 %v4613
        %v4631 = vunpack.c.l.b16 %v4614
        %v4632 = vunpack.c.l.b16 %v4615
        %v4633 = vunpack.c.l.b16 %v4616
        %v4634 = vpack.c.b16 %v4627, %v4626
        %v4635 = vpack.c.b16 %v4629, %v4628
        %v4636 = vpack.c.b16 %v4631, %v4630
        %v4637 = vpack.c.b16 %v4633, %v4632
        %v4643 = vsel %vm3103, %v4608, 0
        %4645 = vmatprep.subr.bf16.mxu0 0
        %4646 = vmatpush1.bf16.msra.mxu0 0
        %4647 = vmatprep.subr.bf16.mxu0 0
        %4648 = vmatpush1.bf16.msra.mxu0 0
        %4649 = vmatprep.subr.bf16.mxu0 0
        %4650 = vmatpush1.bf16.msra.mxu0 0
        %4651 = vmatprep.subr.bf16.mxu0 0
        %4652 = vmatpush1.bf16.msra.mxu0 0
        %4653 = vmatprep.subr.bf16.mxu0 0
        %4654 = vmatpush1.bf16.msra.mxu0 %v4637
        %4655 = vmatprep.subr.bf16.mxu0 0
        %4656 = vmatpush1.bf16.msra.mxu0 %v4636
        %4657 = vmatprep.subr.bf16.mxu0 0
        %4658 = vmatpush1.bf16.msra.mxu0 %v4635
        %4659 = vmatprep.subr.bf16.mxu0 0
        %4660 = vmatpush1.bf16.msra.mxu0 %v4634
        %4661 = vmatprep.subr.bf16.mxu0 0
        %4662 = vmatpush2.bf16.msra.mxu0 0
        %4663 = vmatprep.subr.bf16.mxu0 0
        %4664 = vmatpush2.bf16.msra.mxu0 0
        %4665 = vmatprep.subr.bf16.mxu0 0
        %4666 = vmatpush2.bf16.msra.mxu0 0
        %4667 = vmatprep.subr.bf16.mxu0 0
        %4668 = vmatpush2.bf16.msra.mxu0 0
        %4669 = vmatprep.subr.bf16.mxu0 0
        %4670 = vmatpush2.bf16.msra.mxu0 0
        %4671 = vmatprep.subr.bf16.mxu0 0
        %4672 = vmatpush2.bf16.msra.mxu0 0
        %4673 = vmatprep.subr.bf16.mxu0 0
        %4674 = vmatpush2.bf16.msra.mxu0 0
        %4675 = vmatprep.subr.bf16.mxu0 0
        %4676 = vmatpush2.bf16.msra.mxu0 0
        %4677 = vmatprep.mubr.bf16.mxu0 0
        %4678 = vmatmul.mubr.bf16.gmra.mxu0 %v4643
        %v4679 = vpop.f32.mrf.mxu0
        %v4680 = vadd.f32 %v4617, %v4679
        %v4681 = vpop.f32.mrf.mxu0
        %v4682 = vpop.f32.mrf.mxu0
        %v4683 = vpop.f32.mrf.mxu0
        %4684 = vdwg.mxu0
        %vm4685 = vcmask 73728
        %v4686 = vsel %vm4685, %v4680, -inf
        %4687 = vmax.xlane.f32.xlu0 %v4686
        %v4688 = vpop.xlane.xlu0 %4687
        %v4689 = vsub.f32 %v4680, %v4688
        %v4690 = vmul.f32 %v4689, 1.442695
        %v4691 = vpow.pop %v4690
        %v4692 = vsel %vm4685, %v4691, 0.0
        %4693 = vadd.xlane.f32.xlu0 %v4692
        %v4694 = vpop.xlane.xlu0 %4693
        %v4695 = vlog2.pop %v4694
        %v4696 = vmul.f32 %v4695, 0.6931472
        %v4697 = vadd.f32 %v4688, %v4696
        %v4698 = vsub.f32 %v4680, %v4697
        %4699 = vst.msk [vmem:[%s486] sm:$0x1] %vm4685, %v4698
        %s4700 = sand.u32 %s357, 1
        %s4701 = scalar_lea.sflag [#allocation9], %s4700
        %s4702 = sand.u32 %s357, 1
        %s4703 = scalar_lea.vmem [#allocation8], %s4702
        // Predicated region
        $region123: #{net_forward.1} parent=79 // pred_check
          %p4704 = pneg %p367
        $region124: #{net_forward.1} parent=79 // pred_check_branch
          %4706 = sbr.rel (%p4704) target = $region126
        $region125: #{net_forward.1} parent=79 // pred_region
          %s4708 = ssub.s32 16, 16
          %4709 = vsyncadd %s4701, %s4708
          %s4710 = smul.addr %s29, 16
          %s4711 = scalar_lea.hbm %s15, %s4710
          %s4713 = sshll.u32 %s4703, 4
          %s4714 = int_to_ptr.vmem [resolvable:$true] %s4713
          %4716 = dma.vmem_to_hbm [thread:$0]  %s4714, 16, %s4711, %s4701
        $region126: #{net_forward.1} parent=79 // pred_fallthru
          _
      $region80: #{net_forward.1} parent=5 // pred_fallthru
        _
      %p4717 = scmp.le.s32.totalorder 2, %s24
      // Predicated region
      $region127: #{net_forward.1} parent=5 // pred_check
        %p4718 = pneg %p4717
      $region128: #{net_forward.1} parent=5 // pred_check_branch
        %4720 = sbr.rel (%p4718) target = $region130
      $region129: #{net_forward.1} parent=5 // pred_region
        %s4721 = ssub.s32 %s24, 2
        // Predicated region
        $region131: #{net_forward.1} parent=129 // pred_check
          %p4722 = pneg %p373
        $region132: #{net_forward.1} parent=129 // pred_check_branch
          %4724 = sbr.rel (%p4722) target = $region134
        $region133: #{net_forward.1} parent=129 // pred_region
          %s4725 = sand.u32 %s358, 1
          %s4726 = scalar_lea.sflag [#allocation9], %s4725
          %s4727 = sand.u32 %s358, 1
          %s4728 = scalar_lea.vmem [#allocation8], %s4727
          %4729 = dma.done %s4726, 16
        $region134: #{net_forward.1} parent=129 // pred_fallthru
          _
      $region130: #{net_forward.1} parent=5 // pred_fallthru
        _
    $region6: #{net_forward.1} parent=1 // loop_footer
      %s28 = sadd.s32 1, %s24
    $region7: #{net_forward.1} parent=1 // loop_footer_branch
      %23 = sbr.rel target = $region3
    $region8: #{net_forward.1} parent=1 // loop_exit
      _
    %4730 = vsyncpa [#allocation9], 1
    %s4731 = scalar_lea.sflag [#allocation9], 1
    %4732 = vsyncpa %s4731, 1

</llo_original>
